<compile_context>
chip_gen: v7x
topology: tpu7x:2x2x1
jax: 0.10.0
libtpu: 0.0.40
codegen_flags: <defaults>
</compile_context>

<pallas_src>
import functools

import numpy as np
import jax
import jax.numpy as jnp
from jax.experimental import pallas as pl
from jax.experimental.pallas import tpu as pltpu


# --------------------------------------------------------------------------- #
# Attention kernel (one (dst row-tile, src col-tile) step; all heads batched)
# --------------------------------------------------------------------------- #
def _gt_tile_kernel(imap_ref, jmap_ref, q_ref, k_ref, v_ref, valm_ref,
                    out_ref, acc_ref, *, head_dim, compute_dtype):
    qi = pl.program_id(0)
    kj = pl.program_id(1)
    nkt = pl.num_programs(1)
    t = qi * nkt + kj

    @pl.when(kj == 0)
    def _init():
        acc_ref[...] = jnp.zeros_like(acc_ref)

    # A tile is non-empty iff the remap tables point at itself (empty tiles are
    # remapped to the previously fetched non-empty tile, which also elides their
    # DMA in the index_maps).  Computing a spuriously-included empty tile would
    # be harmless (mask -> score 0); this skip only removes dead MXU/VPU/EUP work.
    @pl.when(jnp.logical_and(imap_ref[t] == qi, jmap_ref[t] == kj))
    def _compute():
        valm = valm_ref[...].astype(jnp.float32)            # (Tq, Tk), bf16 in HBM
        # Head-batched Q.K^T: contract D directly (no K transpose copy).
        s = jnp.einsum('hqd,hkd->hqk', q_ref[...], k_ref[...],
                       preferred_element_type=jnp.float32)  # (H, Tq, Tk)
        e = jnp.clip(s * valm[None], -5.0, 5.0)             # f32 elementwise chain
        score = jnp.where(valm[None] != 0.0, jnp.exp(e), 0.0)
        # V carries a trailing ones column, so this single matmul accumulates
        # both sum(score * V) and the softmax denominator sum(score).
        acc_ref[...] += jnp.einsum('hqk,hkd->hqd',
                                   score.astype(compute_dtype), v_ref[...],
                                   preferred_element_type=jnp.float32)

    @pl.when(kj == nkt - 1)
    def _finalize():
        acc = acc_ref[...]                                    # (H, Tq, D+1)
        inv = pl.reciprocal(acc[:, :, head_dim:], approx=True)   # EUP vrcp, (H,Tq,1)
        out_ref[...] = (acc[:, :, :head_dim] * inv).astype(out_ref.dtype)


# --------------------------------------------------------------------------- #
# Wrapper: fused QKV projection + tiled sparse attention
# --------------------------------------------------------------------------- #
def _round_up(x, m):
    return ((x + m - 1) // m) * m


def _pick_tile(n_nodes, num_heads, requested):
    nr = _round_up(n_nodes, 128)
    t = 512 if requested is None else max(128, _round_up(int(requested), 128))
    t = min(t, 512)                 # review: no 1024 / raised-VMEM branch (v7x: 64 MiB)
    t = min(t, nr)
    # Keep the per-tile (H,T,T) f32/bf16 score temporaries comfortably under the
    # 32 MiB scoped VMEM default (v6e "chunk the score" concern).
    while t > 128 and num_heads * t * t * 12 > 16 * 1024 * 1024:
        t -= 128
    # v7x megacore: make sure the "parallel" row axis spans >= 2 tiles when N allows.
    if nr >= 256:
        t = min(t, _round_up((nr + 1) // 2, 128))
    return t


def gt_attention_dfgnn_tiling(row_pointers, column_index, val, smem_consume,
                              h, Wq, Wk, Wv, bq, bk, bv, num_heads, out_dim,
                              *, tile=None, compute_dtype=jnp.bfloat16):
    """Pallas-backed GTConvFuse_inference_tiling + QKV projection.

    Returns the attention output with shape (N, num_heads, out_dim).
    compute_dtype only affects the MXU matmul inputs (bf16 default, supported on
    v5e/v6e/v7x); the elementwise score chain and all accumulation stay f32.
    """
    del smem_consume  # TODO(synk): CUDA smem sizing hint; no Pallas equivalent.
    h = jnp.asarray(h, jnp.float32)
    N = h.shape[0]
    H, D = int(num_heads), int(out_dim)
    HD = H * D

    # ---- fused, lane-dense QKV projection: one (N,F) x (F,3*H*D) GEMM in XLA ----
    w_qkv = jnp.concatenate([jnp.asarray(Wq), jnp.asarray(Wk), jnp.asarray(Wv)], axis=1)
    b_qkv = jnp.concatenate([jnp.asarray(bq), jnp.asarray(bk), jnp.asarray(bv)])
    qkv = jnp.dot(h, w_qkv, preferred_element_type=jnp.float32) + b_qkv   # (N, 3HD)
    qkv = qkv.reshape(N, 3, H, D)

    # ---- tiling ----
    T = _pick_tile(N, H, tile)
    Npad = _round_up(N, T)
    n_t = Npad // T
    pad = Npad - N

    def to_hnd(x):  # (N, H, D) -> head-major (H, Npad, D) in the MXU input dtype
        x = jnp.transpose(x, (1, 0, 2))
        return jnp.pad(x, ((0, 0), (0, pad), (0, 0))).astype(compute_dtype)

    q = to_hnd(qkv[:, 0])
    k = to_hnd(qkv[:, 1])
    v = to_hnd(qkv[:, 2])
    # Trailing ones column folds the softmax denominator into the score@V matmul.
    v = jnp.concatenate([v, jnp.ones((H, Npad, 1), compute_dtype)], axis=-1)  # (H,Npad,D+1)

    # ---- glue: CSR -> dense bf16 pre-scaled edge values (single graph stream) ----
    # TODO(synk): host NumPy O(N^2) densification; a production kernel would keep
    #             the CSR and gather K/V tiles instead of densifying the graph.
    rp = np.asarray(row_pointers)
    ci = np.asarray(column_index)
    vv = np.asarray(val, dtype=np.float32)
    # Non-edges are encoded as exact 0 in valm; nudge exact-zero edge values to a
    # tiny non-zero (numerically identical: exp(s*1e-30) == exp(0) in f32) so they
    # are not misclassified as non-edges.
    vv = np.where(vv == 0.0, np.float32(1e-30), vv)
    deg = rp[1:] - rp[:-1]
    dst = np.repeat(np.arange(N), deg)                        # dst node of each edge
    valm_np = np.zeros((Npad, Npad), dtype=np.float32)
    valm_np[dst, ci] = vv / np.float32(np.sqrt(D))            # head-invariant pre-scale
    valm = jnp.asarray(valm_np, dtype=jnp.bfloat16)           # 2 B/elem dominant stream

    # Per-tile remap tables (scalar-prefetched to SMEM, 1-D to avoid 2-D padding):
    # a tile maps to itself iff it contains edges, otherwise to the most recently
    # visited non-empty tile in grid order -> Pallas elides the (re-)DMA.
    nnz = np.zeros((n_t * n_t,), dtype=np.int64)
    if dst.size:
        np.add.at(nnz, (dst // T) * n_t + (ci // T), 1)
    last = np.maximum.accumulate(np.where(nnz > 0, np.arange(n_t * n_t), -1))
    last = np.where(last < 0, 0, last)
    imap = jnp.asarray((last // n_t).astype(np.int32))
    jmap = jnp.asarray((last % n_t).astype(np.int32))

    kernel = functools.partial(_gt_tile_kernel, head_dim=D,
                               compute_dtype=compute_dtype)

    out = pl.pallas_call(
        kernel,
        out_shape=jax.ShapeDtypeStruct((H, Npad, D), jnp.float32),
        grid_spec=pltpu.PrefetchScalarGridSpec(
            num_scalar_prefetch=2,
            grid=(n_t, n_t),
            in_specs=[
                pl.BlockSpec((H, T, D), lambda i, j, im, jm: (0, i, 0)),      # Q rows
                pl.BlockSpec((H, T, D),                                       # K cols
                             lambda i, j, im, jm: (0, jm[i * n_t + j], 0)),
                pl.BlockSpec((H, T, D + 1),                                   # [V|1] cols
                             lambda i, j, im, jm: (0, jm[i * n_t + j], 0)),
                pl.BlockSpec((T, T),                                          # edge values
                             lambda i, j, im, jm: (im[i * n_t + j],
                                                   jm[i * n_t + j])),
            ],
            out_specs=pl.BlockSpec((H, T, D), lambda i, j, im, jm: (0, i, 0)),
            scratch_shapes=[pltpu.VMEM((H, T, D + 1), jnp.float32)],          # wv|z acc
        ),
        compiler_params=pltpu.CompilerParams(
            dimension_semantics=("parallel", "arbitrary")),
    )(imap, jmap, q, k, v, valm)

    # (H, Npad, D) -> (N, H, D): tiny XLA relayout (output writeback is negligible
    # vs the O(N^2) valm stream, so the lane repack is left outside the kernel).
    return jnp.transpose(out[:, :N, :], (1, 0, 2))


# --------------------------------------------------------------------------- #
# Full GraphTransformerLayer forward (residual=True, batch_norm=True,
# layer_norm=False, dropout=0).  The DF-GNN attention is the Pallas kernel; the
# surrounding small GEMMs / norms are left to XLA.
# --------------------------------------------------------------------------- #
def _batch_norm_eval(x, gamma, beta, eps=1e-5):
    # TODO(synk): BatchNorm1d uses inference-mode running statistics
    #             (mean=0, var=1 at init); training-mode batch stats not implemented.
    return gamma * x * (1.0 / np.sqrt(1.0 + eps)) + beta


def graph_transformer_layer_forward(p, row_pointers, column_index, val, h,
                                    num_heads, out_channels, *, tile=None,
                                    compute_dtype=jnp.bfloat16):
    head_dim = out_channels // num_heads
    attn = gt_attention_dfgnn_tiling(row_pointers, column_index, val, 0, h,
                                     p["Wq"], p["Wk"], p["Wv"],
                                     p["bq"], p["bk"], p["bv"],
                                     num_heads, head_dim, tile=tile,
                                     compute_dtype=compute_dtype)   # (N, H, D)
    x = attn.reshape(-1, out_channels)
    x = jnp.dot(x, p["Wo"]) + p["bo"]                 # O projection (dropout p=0)
    x = h + x                                         # residual 1 (in_dim == out_dim)
    x = _batch_norm_eval(x, p["bn1_g"], p["bn1_b"])
    y = jax.nn.relu(jnp.dot(x, p["W1"]) + p["b1"])    # FFN
    y = jnp.dot(y, p["W2"]) + p["b2"]
    x = x + y                                         # residual 2
    x = _batch_norm_eval(x, p["bn2_g"], p["bn2_b"])
    return x


# --------------------------------------------------------------------------- #
# Pure NumPy reference of the attention semantics (sanity check)
# --------------------------------------------------------------------------- #
def _reference_np(row_pointers, column_index, val, h, Wq, Wk, Wv, bq, bk, bv,
                  num_heads, out_dim):
    N, _ = h.shape
    H, D = num_heads, out_dim
    Q = np.asarray(h @ Wq + bq).reshape(N, H, D)
    K = np.asarray(h @ Wk + bk).reshape(N, H, D)
    V = np.asarray(h @ Wv + bv).reshape(N, H, D)
    rp = np.asarray(row_pointers); ci = np.asarray(column_index)
    vv = np.asarray(val, dtype=np.float32)
    out = np.zeros((N, H, D), dtype=np.float32)
    for i in range(N):
        nbrs = ci[rp[i]:rp[i + 1]]
        evals = vv[rp[i]:rp[i + 1]]
        s = np.einsum('hd,nhd->nh', Q[i], K[nbrs])              # (deg, H)
        w = np.clip(s * evals[:, None] / np.sqrt(out_dim), -5.0, 5.0)
        sc = np.exp(w)                                          # (deg, H)
        wV = np.einsum('nh,nhd->hd', sc, V[nbrs])
        z = sc.sum(0)[:, None]
        out[i] = wV / z
    return out


# --------------------------------------------------------------------------- #
if __name__ == "__main__":
    # Small deterministic configuration (attention out_channels == in_dim so the
    # GraphTransformerLayer residual is well-defined).
    N, in_dim, num_heads, head_dim = 256, 64, 4, 16
    H, D = num_heads, head_dim
    out_channels = H * D  # 64

    key = jax.random.PRNGKey(0)
    ks = jax.random.split(key, 16)
    bound = 1.0 / np.sqrt(in_dim)
    h = jax.random.normal(ks[0], (N, in_dim), dtype=jnp.float32)
    Wq = jax.random.uniform(ks[1], (in_dim, H * D), minval=-bound, maxval=bound)
    Wk = jax.random.uniform(ks[2], (in_dim, H * D), minval=-bound, maxval=bound)
    Wv = jax.random.uniform(ks[3], (in_dim, H * D), minval=-bound, maxval=bound)
    bq = jax.random.uniform(ks[4], (H * D,), minval=-bound, maxval=bound)
    bk = jax.random.uniform(ks[5], (H * D,), minval=-bound, maxval=bound)
    bv = jax.random.uniform(ks[6], (H * D,), minval=-bound, maxval=bound)

    # Deterministic sparse graph in CSR (dst rows): self-loop + two ring edges
    # confined to 128-node blocks, so that the off-diagonal 128x128 tiles are
    # empty and both the DMA elision and the compute skip are exercised.
    BLK = 128
    col_list, rp_list = [], [0]
    for i in range(N):
        base = (i // BLK) * BLK
        loc = i - base
        nbrs = sorted({i, base + (loc + 1) % BLK, base + (loc + 5) % BLK})
        col_list.extend(nbrs)
        rp_list.append(len(col_list))
    row_pointers = np.asarray(rp_list, dtype=np.int32)
    column_index = np.asarray(col_list, dtype=np.int32)
    rng = np.random.default_rng(0)
    raw_val = (0.5 + rng.random(len(col_list))).astype(np.float32)
    # Round edge values to bf16-representable numbers so the bf16 valm stream is
    # exact (D=16 -> /sqrt(D) is a power-of-two scale) and the f32-compute check
    # can stay tight.
    val = np.asarray(jnp.asarray(raw_val, jnp.bfloat16).astype(jnp.float32))
    smem_consume = 0  # ignored (CUDA-only tuning parameter)

    ref = _reference_np(row_pointers, column_index, val, h, Wq, Wk, Wv,
                        bq, bk, bv, num_heads, head_dim)

    # (1) explicit 128-tile, f32-MXU path: grid (2, 2), accumulation across src
    #     tiles, empty off-diagonal tiles skip both DMA and compute.
    out = gt_attention_dfgnn_tiling(row_pointers, column_index, val, smem_consume,
                                    h, Wq, Wk, Wv, bq, bk, bv, num_heads, head_dim,
                                    tile=128, compute_dtype=jnp.float32)
    out = jax.block_until_ready(out)
    # tolerance covers the EUP approx-reciprocal fast path (~1e-4 rel).
    np.testing.assert_allclose(np.asarray(out), ref, rtol=2e-3, atol=2e-3)

    # (2) default path: auto tile + bf16 MXU inputs (looser tolerance).
    out_bf = gt_attention_dfgnn_tiling(row_pointers, column_index, val,
                                       smem_consume, h, Wq, Wk, Wv, bq, bk, bv,
                                       num_heads, head_dim)
    out_bf = jax.block_until_ready(out_bf)
    np.testing.assert_allclose(np.asarray(out_bf), ref, rtol=5e-2, atol=5e-2)

    # (3) full GraphTransformerLayer forward around the Pallas attention.
    params = {
        "Wq": Wq, "Wk": Wk, "Wv": Wv, "bq": bq, "bk": bk, "bv": bv,
        "Wo": jax.random.uniform(ks[7], (out_channels, out_channels),
                                 minval=-0.125, maxval=0.125),
        "bo": jnp.zeros((out_channels,), jnp.float32),
        "W1": jax.random.uniform(ks[8], (out_channels, 2 * out_channels),
                                 minval=-0.125, maxval=0.125),
        "b1": jnp.zeros((2 * out_channels,), jnp.float32),
        "W2": jax.random.uniform(ks[9], (2 * out_channels, out_channels),
                                 minval=-0.09, maxval=0.09),
        "b2": jnp.zeros((out_channels,), jnp.float32),
        "bn1_g": jnp.ones((out_channels,), jnp.float32),
        "bn1_b": jnp.zeros((out_channels,), jnp.float32),
        "bn2_g": jnp.ones((out_channels,), jnp.float32),
        "bn2_b": jnp.zeros((out_channels,), jnp.float32),
    }
    layer_out = graph_transformer_layer_forward(params, row_pointers, column_index,
                                                val, h, num_heads, out_channels,
                                                tile=128)
    layer_out = jax.block_until_ready(layer_out)
    assert bool(jnp.all(jnp.isfinite(layer_out)))

    print("KERNEL_OK")
</pallas_src>

<mosaic_0001>
module attributes {stable_mosaic.version = 11 : i64} {
  func.func @_gt_tile_kernel(%arg0: i32, %arg1: i32, %arg2: memref<4xi32, #tpu.memory_space<smem>>, %arg3: memref<4xi32, #tpu.memory_space<smem>>, %arg4: memref<4x128x16xf32, #tpu.memory_space<vmem>>, %arg5: memref<4x128x16xf32, #tpu.memory_space<vmem>>, %arg6: memref<4x128x17xf32, #tpu.memory_space<vmem>>, %arg7: memref<128x128xbf16, #tpu.memory_space<vmem>>, %arg8: memref<4x128x16xf32, #tpu.memory_space<vmem>>, %arg9: memref<4x128x17xf32, #tpu.memory_space<vmem>>) attributes {dimension_semantics = [#tpu.dimension_semantics<parallel>, #tpu.dimension_semantics<arbitrary>], iteration_bounds = array<i64: 2, 2>, scalar_prefetch = 2 : i64, scratch_operands = 1 : i64, tpu.core_type = #tpu.core_type<tc>, window_params = [{transform_indices = @transform_0, window_bounds = array<i64: 4, 128, 16>}, {transform_indices = @transform_1, window_bounds = array<i64: 4, 128, 16>}, {transform_indices = @transform_2, window_bounds = array<i64: 4, 128, 17>}, {transform_indices = @transform_3, window_bounds = array<i64: 128, 128>}, {transform_indices = @transform_4, window_bounds = array<i64: 4, 128, 16>}]} {
    %c2_i32 = arith.constant 2 : i32
    %0 = arith.muli %arg0, %c2_i32 : i32
    %1 = arith.addi %0, %arg1 : i32
    %c0_i32 = arith.constant 0 : i32
    %2 = arith.cmpi eq, %arg1, %c0_i32 : i32
    %3 = arith.extui %2 : i1 to i32
    %c0_i32_0 = arith.constant 0 : i32
    %4 = arith.cmpi ne, %3, %c0_i32_0 : i32
    scf.if %4 {
      %cst = arith.constant 0.000000e+00 : f32
      %17 = vector.broadcast %cst : f32 to vector<4x128x17xf32>
      %c0 = arith.constant 0 : index
      %c0_3 = arith.constant 0 : index
      %c0_4 = arith.constant 0 : index
      %18 = vector.load %arg9[%c0, %c0_3, %c0_4] : memref<4x128x17xf32, #tpu.memory_space<vmem>>, vector<4x128x17xf32>
      tpu.vector_store %arg9[%c0, %c0_3, %c0_4], %17 {strides = array<i32>} : memref<4x128x17xf32, #tpu.memory_space<vmem>>, vector<4x128x17xf32>,
    } else {
    }
    %5 = arith.index_cast %1 : i32 to index
    %6 = memref.load %arg2[%5] : memref<4xi32, #tpu.memory_space<smem>>
    %7 = arith.cmpi eq, %6, %arg0 : i32
    %8 = arith.index_cast %1 : i32 to index
    %9 = memref.load %arg3[%8] : memref<4xi32, #tpu.memory_space<smem>>
    %10 = arith.cmpi eq, %9, %arg1 : i32
    %11 = arith.andi %7, %10 : i1
    %12 = arith.extui %11 : i1 to i32
    %c0_i32_1 = arith.constant 0 : i32
    %13 = arith.cmpi ne, %12, %c0_i32_1 : i32
    scf.if %13 {
      %c0 = arith.constant 0 : index
      %c0_3 = arith.constant 0 : index
      %17 = vector.load %arg7[%c0, %c0_3] : memref<128x128xbf16, #tpu.memory_space<vmem>>, vector<128x128xbf16>
      %18 = arith.extf %17 : vector<128x128xbf16> to vector<128x128xf32>
      %c0_4 = arith.constant 0 : index
      %c0_5 = arith.constant 0 : index
      %c0_6 = arith.constant 0 : index
      %19 = vector.load %arg4[%c0_4, %c0_5, %c0_6] : memref<4x128x16xf32, #tpu.memory_space<vmem>>, vector<4x128x16xf32>
      %c0_7 = arith.constant 0 : index
      %c0_8 = arith.constant 0 : index
      %c0_9 = arith.constant 0 : index
      %20 = vector.load %arg5[%c0_7, %c0_8, %c0_9] : memref<4x128x16xf32, #tpu.memory_space<vmem>>, vector<4x128x16xf32>
      "tpu.trace_start"() <{level = 10 : i32, message = "hqd,hkd->hqk"}> : () -> ()
      %cst = arith.constant dense<0.000000e+00> : vector<4x128x128xf32>
      %21 = tpu.matmul %19, %20, %cst {dimension_numbers = #tpu.dot_dimension_numbers<[2], [2], [1], [1], [0, 0, 0, 1, 1, 1], [0], [0]>} : vector<4x128x16xf32>, vector<4x128x16xf32>, vector<4x128x128xf32> -> vector<4x128x128xf32>
      "tpu.trace_stop"() : () -> ()
      %22 = vector.shape_cast %18 : vector<128x128xf32> to vector<1x128x128xf32>
      %23 = vector.broadcast %22 : vector<1x128x128xf32> to vector<4x128x128xf32>
      %24 = arith.mulf %21, %23 : vector<4x128x128xf32>
      %cst_10 = arith.constant -5.000000e+00 : f32
      %cst_11 = arith.constant 5.000000e+00 : f32
      %25 = vector.broadcast %cst_10 : f32 to vector<4x128x128xf32>
      %26 = arith.maximumf %25, %24 : vector<4x128x128xf32>
      %27 = vector.broadcast %cst_11 : f32 to vector<4x128x128xf32>
      %28 = arith.minimumf %27, %26 : vector<4x128x128xf32>
      %29 = vector.shape_cast %18 : vector<128x128xf32> to vector<1x128x128xf32>
      %cst_12 = arith.constant 0.000000e+00 : f32
      %30 = vector.broadcast %cst_12 : f32 to vector<1x128x128xf32>
      %31 = arith.cmpf one, %29, %30 : vector<1x128x128xf32>
      %32 = math.exp %28 : vector<4x128x128xf32>
      %cst_13 = arith.constant 0.000000e+00 : f32
      %33 = vector.shape_cast %31 : vector<1x128x128xi1> to vector<1x128x128xi1>
      %34 = vector.broadcast %33 : vector<1x128x128xi1> to vector<4x128x128xi1>
      %35 = vector.broadcast %cst_13 : f32 to vector<4x128x128xf32>
      %36 = arith.select %34, %32, %35 : vector<4x128x128xi1>, vector<4x128x128xf32>
      %c0_14 = arith.constant 0 : index
      %c0_15 = arith.constant 0 : index
      %c0_16 = arith.constant 0 : index
      %37 = vector.load %arg9[%c0_14, %c0_15, %c0_16] : memref<4x128x17xf32, #tpu.memory_space<vmem>>, vector<4x128x17xf32>
      %c0_17 = arith.constant 0 : index
      %c0_18 = arith.constant 0 : index
      %c0_19 = arith.constant 0 : index
      %38 = vector.load %arg6[%c0_17, %c0_18, %c0_19] : memref<4x128x17xf32, #tpu.memory_space<vmem>>, vector<4x128x17xf32>
      "tpu.trace_start"() <{level = 10 : i32, message = "hqk,hkd->hqd"}> : () -> ()
      %cst_20 = arith.constant dense<0.000000e+00> : vector<4x128x17xf32>
      %39 = tpu.matmul %36, %38, %cst_20 {dimension_numbers = #tpu.dot_dimension_numbers<[2], [1], [1], [2], [0, 0, 0, 1, 1, 2], [0], [0]>} : vector<4x128x128xf32>, vector<4x128x17xf32>, vector<4x128x17xf32> -> vector<4x128x17xf32>
      "tpu.trace_stop"() : () -> ()
      %40 = arith.addf %37, %39 : vector<4x128x17xf32>
      %c0_21 = arith.constant 0 : index
      %c0_22 = arith.constant 0 : index
      %c0_23 = arith.constant 0 : index
      %41 = vector.load %arg9[%c0_21, %c0_22, %c0_23] : memref<4x128x17xf32, #tpu.memory_space<vmem>>, vector<4x128x17xf32>
      tpu.vector_store %arg9[%c0_21, %c0_22, %c0_23], %40 {strides = array<i32>} : memref<4x128x17xf32, #tpu.memory_space<vmem>>, vector<4x128x17xf32>,
    } else {
    }
    %c1_i32 = arith.constant 1 : i32
    %14 = arith.cmpi eq, %arg1, %c1_i32 : i32
    %15 = arith.extui %14 : i1 to i32
    %c0_i32_2 = arith.constant 0 : i32
    %16 = arith.cmpi ne, %15, %c0_i32_2 : i32
    scf.if %16 {
      %c0 = arith.constant 0 : index
      %c0_3 = arith.constant 0 : index
      %c0_4 = arith.constant 0 : index
      %17 = vector.load %arg9[%c0, %c0_3, %c0_4] : memref<4x128x17xf32, #tpu.memory_space<vmem>>, vector<4x128x17xf32>
      %18 = vector.extract_strided_slice %17 {offsets = [0, 0, 16], sizes = [4, 128, 1], strides = [1, 1, 1]} : vector<4x128x17xf32> to vector<4x128x1xf32>
      %19 = tpu.reciprocal %18 {approx = true} : vector<4x128x1xf32> -> vector<4x128x1xf32>
      %20 = vector.extract_strided_slice %17 {offsets = [0, 0, 0], sizes = [4, 128, 16], strides = [1, 1, 1]} : vector<4x128x17xf32> to vector<4x128x16xf32>
      %21 = vector.broadcast %19 : vector<4x128x1xf32> to vector<4x128x16xf32>
      %22 = arith.mulf %20, %21 : vector<4x128x16xf32>
      %c0_5 = arith.constant 0 : index
      %c0_6 = arith.constant 0 : index
      %c0_7 = arith.constant 0 : index
      %23 = vector.load %arg8[%c0_5, %c0_6, %c0_7] : memref<4x128x16xf32, #tpu.memory_space<vmem>>, vector<4x128x16xf32>
      tpu.vector_store %arg8[%c0_5, %c0_6, %c0_7], %22 {strides = array<i32>} : memref<4x128x16xf32, #tpu.memory_space<vmem>>, vector<4x128x16xf32>,
    } else {
    }
    return
  }
  func.func @transform_0(%arg0: i32, %arg1: i32, %arg2: memref<4xi32, #tpu.memory_space<smem>>, %arg3: memref<4xi32, #tpu.memory_space<smem>>) -> (i32, i32, i32) {
    %c0_i32 = arith.constant 0 : i32
    %c0_i32_0 = arith.constant 0 : i32
    %c0_i32_1 = arith.constant 0 : i32
    return %c0_i32, %arg0, %c0_i32_0 : i32, i32, i32
  }
  func.func @transform_1(%arg0: i32, %arg1: i32, %arg2: memref<4xi32, #tpu.memory_space<smem>>, %arg3: memref<4xi32, #tpu.memory_space<smem>>) -> (i32, i32, i32) {
    %c2_i32 = arith.constant 2 : i32
    %0 = arith.muli %arg0, %c2_i32 : i32
    %1 = arith.addi %0, %arg1 : i32
    %2 = arith.index_cast %1 : i32 to index
    %3 = memref.load %arg3[%2] : memref<4xi32, #tpu.memory_space<smem>>
    %c0_i32 = arith.constant 0 : i32
    %c0_i32_0 = arith.constant 0 : i32
    %c0_i32_1 = arith.constant 0 : i32
    return %c0_i32, %3, %c0_i32_0 : i32, i32, i32
  }
  func.func @transform_2(%arg0: i32, %arg1: i32, %arg2: memref<4xi32, #tpu.memory_space<smem>>, %arg3: memref<4xi32, #tpu.memory_space<smem>>) -> (i32, i32, i32) {
    %c2_i32 = arith.constant 2 : i32
    %0 = arith.muli %arg0, %c2_i32 : i32
    %1 = arith.addi %0, %arg1 : i32
    %2 = arith.index_cast %1 : i32 to index
    %3 = memref.load %arg3[%2] : memref<4xi32, #tpu.memory_space<smem>>
    %c0_i32 = arith.constant 0 : i32
    %c0_i32_0 = arith.constant 0 : i32
    %c0_i32_1 = arith.constant 0 : i32
    return %c0_i32, %3, %c0_i32_0 : i32, i32, i32
  }
  func.func @transform_3(%arg0: i32, %arg1: i32, %arg2: memref<4xi32, #tpu.memory_space<smem>>, %arg3: memref<4xi32, #tpu.memory_space<smem>>) -> (i32, i32) {
    %c2_i32 = arith.constant 2 : i32
    %0 = arith.muli %arg0, %c2_i32 : i32
    %1 = arith.addi %0, %arg1 : i32
    %2 = arith.index_cast %1 : i32 to index
    %3 = memref.load %arg2[%2] : memref<4xi32, #tpu.memory_space<smem>>
    %c2_i32_0 = arith.constant 2 : i32
    %4 = arith.muli %arg0, %c2_i32_0 : i32
    %5 = arith.addi %4, %arg1 : i32
    %6 = arith.index_cast %5 : i32 to index
    %7 = memref.load %arg3[%6] : memref<4xi32, #tpu.memory_space<smem>>
    %c0_i32 = arith.constant 0 : i32
    return %3, %7 : i32, i32
  }
  func.func @transform_4(%arg0: i32, %arg1: i32, %arg2: memref<4xi32, #tpu.memory_space<smem>>, %arg3: memref<4xi32, #tpu.memory_space<smem>>) -> (i32, i32, i32) {
    %c0_i32 = arith.constant 0 : i32
    %c0_i32_0 = arith.constant 0 : i32
    %c0_i32_1 = arith.constant 0 : i32
    return %c0_i32, %arg0, %c0_i32_0 : i32, i32, i32
  }
}

</mosaic_0001>

<llo_original>
// kernel: tpu_custom_call.1
$region0: #{tpu_custom_call.1}
  #allocation0 [shape = 'u32[]', space=smem, size = 0x4, offset = 0x4, fixed_abs, tag = 'smem constant byte address 0x4 - core index']
  #allocation1 [shape = 'u32[144,128]{1,0:T(1,128)}', space=vmem, size = 0x12000, scoped, tag = 'internal scratch']
  #allocation2 [shape = 'f32[4,128,17]{2,1,0:T(8,128)}', space=vmem, size = 0x40000, scoped, tag = 'scratch operand']
  #allocation3 [shape = 's32[1]{0}', space=sflag, size = 0x4, scoped, tag = 'scoped memory for tpu_custom_call.1']
  #allocation4 [shape = 'u8[512]{0}', space=smem, size = 0x200, scoped, tag = 'prefetched SMEM operand 0']
  #allocation5 [shape = 'u8[512]{0}', space=smem, size = 0x200, scoped, tag = 'prefetched SMEM operand 1']
  %s0 = inlined_call_operand.vmem [shape: s32[4], index: 0, kind: input, shape index: {}]
  %s1 = inlined_call_operand.vmem [shape: s32[4], index: 1, kind: input, shape index: {}]
  %s2 = inlined_call_operand.vmem [shape: f32[4,256,16], index: 2, kind: input, shape index: {}]
  %s3 = inlined_call_operand.vmem [shape: f32[4,256,16], index: 3, kind: input, shape index: {}]
  %s4 = inlined_call_operand.vmem [shape: f32[4,256,17], index: 4, kind: input, shape index: {}]
  %s5 = inlined_call_operand.vmem [shape: bf16[256,256], index: 5, kind: input, shape index: {}]
  %s6 = inlined_call_operand.vmem [shape: f32[4,256,16], index: 6, kind: output, shape index: {}]
  %s7 = sld [smem:[#allocation0]]
  $region250: #{tpu_custom_call.1} parent=0
    _
  %s9 = ssub.s32 1, %s7
  %s10 = scalar_select 0, %s9, %s7
  %s11 = sshll.u32 %s0, 4
  %s12 = int_to_ptr.vmem [resolvable:$true] %s11
  %14 = dma.vmem_to_smem %s12, 16, [#allocation4], [#allocation3]
  %s15 = sshll.u32 %s1, 4
  %s16 = int_to_ptr.vmem [resolvable:$true] %s15
  %18 = dma.vmem_to_smem %s16, 16, [#allocation5], [#allocation3]
  %19 = dma.done [#allocation3], 32
  %20 = sfence
  $region1: #{tpu_custom_call.1} parent=0
    #allocation6 [shape = 'u8[524288]{0}', space=vmem, size = 0x80000, scoped, tag = 'input window, operand 2']
    #allocation7 [shape = 'u8[524288]{0}', space=vmem, size = 0x80000, scoped, tag = 'input window, operand 3']
    #allocation8 [shape = 'u8[524288]{0}', space=vmem, size = 0x80000, scoped, tag = 'input window, operand 4']
    #allocation9 [shape = 'u8[65536]{0}', space=vmem, size = 0x10000, scoped, tag = 'input window, operand 5']
    #allocation10 [shape = 'u8[524288]{0}', space=vmem, size = 0x80000, scoped, tag = 'output window, operand 0']
    loop: start=0, step=1, limit=6
    $region2: #{tpu_custom_call.1} parent=1 // loop_pre_header
      _
    $region3: #{tpu_custom_call.1} parent=1 // loop_header
      %s22 = sphi 0, %s26
      %p23 = scmp.ge.s32.totalorder %s22, 6
      %s29 = sphi 0, %s41
      %s30 = sphi 0, %s37
      %s31 = sphi 0, %s29
      %s32 = sphi 0, %s30
      %s33 = sphi 0, %s31
      %s34 = sphi 0, %s32
      %s44 = sphi 0, %s46
      %s47 = sphi 0, %s44
      %s48 = sphi 0, %s47
      %s64 = sphi 0, %s48
      %s76 = sphi 0, %s78
      %s79 = sphi 0, %s76
      %s80 = sphi 0, %s79
      %s96 = sphi 0, %s80
      %s108 = sphi 0, %s110
      %s111 = sphi 0, %s108
      %s112 = sphi 0, %s111
      %s128 = sphi 0, %s112
      %s144 = sphi 0, %s146
      %s147 = sphi 0, %s144
      %s148 = sphi 0, %s147
      %s164 = sphi 0, %s148
      %s170 = sphi 0, %s172
      %s173 = sphi 0, %s170
      %s174 = sphi 0, %s173
      %s190 = sphi 0, %s174
    $region4: #{tpu_custom_call.1} parent=1 // loop_header_branch
      %25 = sbr.rel (%p23) target = $region8
    $region5: #{tpu_custom_call.1} parent=1 // loop_body
      %s27 = ssub.s32 %s22, 1
      %s28 = ssub.s32 %s22, 2
      %s35 = sadd.s32 1, %s30
      %p36 = scmp.ge.s32.totalorder %s35, 2
      %s37 = scalar_select %p36, 0, %s35
      %s38 = sadd.s32 1, %s29
      %s39 = scalar_select %p36, %s38, %s29
      %p40 = scmp.ge.s32.totalorder %s39, 2
      %s41 = scalar_select %p40, 0, %s39
      %s42 = ssub.s32 %s29, %s41
      %p43 = scmp.eq.s32.totalorder %s42, 0
      %s45 = sadd.s32 %s44, 1
      %s46 = scalar_select %p43, %s44, %s45
      %p49 = pneg %p43
      %p50 = scmp.eq.s32.totalorder %s22, 3
      %p51 = por %p49, %p50
      %p52 = scmp.ne.s32.totalorder %s44, %s47
      %p53 = scmp.eq.s32.totalorder %s22, 0
      %p54 = por %p52, %p53
      %p55 = scmp.ne.s32.totalorder %s44, %s47
      %p56 = scmp.eq.s32.totalorder %s27, 3
      %p57 = por %p55, %p56
      %p58 = scmp.ne.s32.totalorder %s47, %s48
      %p59 = scmp.eq.s32.totalorder %s27, 0
      %p60 = por %p58, %p59
      %p61 = scmp.ne.s32.totalorder %s47, %s48
      %p62 = scmp.eq.s32.totalorder %s28, 3
      %p63 = por %p61, %p62
      %p65 = scmp.ne.s32.totalorder %s48, %s64
      %p66 = scmp.eq.s32.totalorder %s28, 0
      %p67 = por %p65, %p66
      %s68 = smul.u32 %s29, 2
      %s69 = sadd.s32 %s68, %s30
      %s70 = sld [smem:[#allocation5 + %s69]]
      %s71 = smul.u32 %s41, 2
      %s72 = sadd.s32 %s71, %s37
      %s73 = sld [smem:[#allocation5 + %s72]]
      %s74 = ssub.s32 %s70, %s73
      %p75 = scmp.eq.s32.totalorder %s74, 0
      %s77 = sadd.s32 %s76, 1
      %s78 = scalar_select %p75, %s76, %s77
      %p81 = pneg %p75
      %p82 = scmp.eq.s32.totalorder %s22, 3
      %p83 = por %p81, %p82
      %p84 = scmp.ne.s32.totalorder %s76, %s79
      %p85 = scmp.eq.s32.totalorder %s22, 0
      %p86 = por %p84, %p85
      %p87 = scmp.ne.s32.totalorder %s76, %s79
      %p88 = scmp.eq.s32.totalorder %s27, 3
      %p89 = por %p87, %p88
      %p90 = scmp.ne.s32.totalorder %s79, %s80
      %p91 = scmp.eq.s32.totalorder %s27, 0
      %p92 = por %p90, %p91
      %p93 = scmp.ne.s32.totalorder %s79, %s80
      %p94 = scmp.eq.s32.totalorder %s28, 3
      %p95 = por %p93, %p94
      %p97 = scmp.ne.s32.totalorder %s80, %s96
      %p98 = scmp.eq.s32.totalorder %s28, 0
      %p99 = por %p97, %p98
      %s100 = smul.u32 %s29, 2
      %s101 = sadd.s32 %s100, %s30
      %s102 = sld [smem:[#allocation5 + %s101]]
      %s103 = smul.u32 %s41, 2
      %s104 = sadd.s32 %s103, %s37
      %s105 = sld [smem:[#allocation5 + %s104]]
      %s106 = ssub.s32 %s102, %s105
      %p107 = scmp.eq.s32.totalorder %s106, 0
      %s109 = sadd.s32 %s108, 1
      %s110 = scalar_select %p107, %s108, %s109
      %p113 = pneg %p107
      %p114 = scmp.eq.s32.totalorder %s22, 3
      %p115 = por %p113, %p114
      %p116 = scmp.ne.s32.totalorder %s108, %s111
      %p117 = scmp.eq.s32.totalorder %s22, 0
      %p118 = por %p116, %p117
      %p119 = scmp.ne.s32.totalorder %s108, %s111
      %p120 = scmp.eq.s32.totalorder %s27, 3
      %p121 = por %p119, %p120
      %p122 = scmp.ne.s32.totalorder %s111, %s112
      %p123 = scmp.eq.s32.totalorder %s27, 0
      %p124 = por %p122, %p123
      %p125 = scmp.ne.s32.totalorder %s111, %s112
      %p126 = scmp.eq.s32.totalorder %s28, 3
      %p127 = por %p125, %p126
      %p129 = scmp.ne.s32.totalorder %s112, %s128
      %p130 = scmp.eq.s32.totalorder %s28, 0
      %p131 = por %p129, %p130
      %s132 = smul.u32 %s29, 2
      %s133 = sadd.s32 %s132, %s30
      %s134 = sld [smem:[#allocation4 + %s133]]
      %s135 = sld [smem:[#allocation5 + %s133]]
      %s136 = smul.u32 %s41, 2
      %s137 = sadd.s32 %s136, %s37
      %s138 = sld [smem:[#allocation4 + %s137]]
      %s139 = sld [smem:[#allocation5 + %s137]]
      %s140 = ssub.s32 %s134, %s138
      %s141 = ssub.s32 %s135, %s139
      %s142 = sor.u32 %s140, %s141
      %p143 = scmp.eq.s32.totalorder %s142, 0
      %s145 = sadd.s32 %s144, 1
      %s146 = scalar_select %p143, %s144, %s145
      %p149 = pneg %p143
      %p150 = scmp.eq.s32.totalorder %s22, 3
      %p151 = por %p149, %p150
      %p152 = scmp.ne.s32.totalorder %s144, %s147
      %p153 = scmp.eq.s32.totalorder %s22, 0
      %p154 = por %p152, %p153
      %p155 = scmp.ne.s32.totalorder %s144, %s147
      %p156 = scmp.eq.s32.totalorder %s27, 3
      %p157 = por %p155, %p156
      %p158 = scmp.ne.s32.totalorder %s147, %s148
      %p159 = scmp.eq.s32.totalorder %s27, 0
      %p160 = por %p158, %p159
      %p161 = scmp.ne.s32.totalorder %s147, %s148
      %p162 = scmp.eq.s32.totalorder %s28, 3
      %p163 = por %p161, %p162
      %p165 = scmp.ne.s32.totalorder %s148, %s164
      %p166 = scmp.eq.s32.totalorder %s28, 0
      %p167 = por %p165, %p166
      %s168 = ssub.s32 %s29, %s41
      %p169 = scmp.eq.s32.totalorder %s168, 0
      %s171 = sadd.s32 %s170, 1
      %s172 = scalar_select %p169, %s170, %s171
      %p175 = pneg %p169
      %p176 = scmp.eq.s32.totalorder %s22, 3
      %p177 = por %p175, %p176
      %p178 = scmp.ne.s32.totalorder %s170, %s173
      %p179 = scmp.eq.s32.totalorder %s22, 0
      %p180 = por %p178, %p179
      %p181 = scmp.ne.s32.totalorder %s170, %s173
      %p182 = scmp.eq.s32.totalorder %s27, 3
      %p183 = por %p181, %p182
      %p184 = scmp.ne.s32.totalorder %s173, %s174
      %p185 = scmp.eq.s32.totalorder %s27, 0
      %p186 = por %p184, %p185
      %p187 = scmp.ne.s32.totalorder %s173, %s174
      %p188 = scmp.eq.s32.totalorder %s28, 3
      %p189 = por %p187, %p188
      %p191 = scmp.ne.s32.totalorder %s174, %s190
      %p192 = scmp.eq.s32.totalorder %s28, 0
      %p193 = por %p191, %p192
      %p194 = scmp.le.s32.totalorder 1, %s22
      %p195 = scmp.lt.s32.totalorder %s22, 5
      %p196 = pnand %p194, %p195
      %p197 = pneg %p196
      // Predicated region
      $region9: #{tpu_custom_call.1} parent=5 // pred_check
        _
      $region10: #{tpu_custom_call.1} parent=5 // pred_check_branch
        %199 = sbr.rel (%p196) target = $region12
      $region11: #{tpu_custom_call.1} parent=5 // pred_region
        %s200 = ssub.s32 %s22, 1
      $region12: #{tpu_custom_call.1} parent=5 // pred_fallthru
        _
      %p201 = scmp.lt.s32.totalorder %s22, 4
      // Predicated region
      $region13: #{tpu_custom_call.1} parent=5 // pred_check
        %p202 = pneg %p201
      $region14: #{tpu_custom_call.1} parent=5 // pred_check_branch
        %204 = sbr.rel (%p202) target = $region16
      $region15: #{tpu_custom_call.1} parent=5 // pred_region
        // Predicated region
        $region17: #{tpu_custom_call.1} parent=15 // pred_check
          %p205 = pneg %p54
        $region18: #{tpu_custom_call.1} parent=15 // pred_check_branch
          %207 = sbr.rel (%p205) target = $region20
        $region19: #{tpu_custom_call.1} parent=15 // pred_region
          %s208 = sand.u32 %s44, 1
          %s209 = sand.u32 %s44, 1
          %s210 = smul.addr %s209, 512
          %s211 = scalar_lea.vmem [#allocation6], %s210
          %s212 = smul.u32 16, %s29
          %s213 = smul.addr %s212, 8
          %s214 = scalar_lea.vmem %s2, %s213
          // Predicated region
          $region21: #{tpu_custom_call.1} parent=19 // pred_check
            _
          $region22: #{tpu_custom_call.1} parent=19 // pred_check_branch
            %216 = sbr.rel (0) target = $region24
          $region23: #{tpu_custom_call.1} parent=19 // pred_region
            // Predicated region
            $region25: #{tpu_custom_call.1} parent=23 // pred_check
              _
            $region26: #{tpu_custom_call.1} parent=23 // pred_check_branch
              %218 = sbr.rel (0) target = $region28
            $region27: #{tpu_custom_call.1} parent=23 // pred_region
              // Predicated region
              $region40: #{tpu_custom_call.1} parent=27 // pred_check
                _
              $region41: #{tpu_custom_call.1} parent=27 // pred_check_branch
                %359 = sbr.rel (0) target = $region43
              $region42: #{tpu_custom_call.1} parent=27 // pred_region
                loop: start=0, step=1, limit=1
                $region44: #{tpu_custom_call.1} parent=42 // loop_pre_header
                  _
                $region45: #{tpu_custom_call.1} parent=42 // loop_header
                  %s361 = sphi 0, %s365
                  %p362 = scmp.ge.s32.totalorder %s361, 1
                  %s366 = sphi %s214, %s214
                  %s367 = sphi %s211, %s211
                $region46: #{tpu_custom_call.1} parent=42 // loop_header_branch
                  %364 = sbr.rel (%p362) target = $region50
                $region47: #{tpu_custom_call.1} parent=42 // loop_body
                  %v368 = vld [vmem:[%s366] sm:$0xff]
                  %369 = vst [vmem:[%s367] sm:$0xff] %v368
                  %v370 = vld [vmem:[%s366 + $0x8] sm:$0xff]
                  %371 = vst [vmem:[%s367 + $0x8] sm:$0xff] %v370
                  %v372 = vld [vmem:[%s366 + $0x10] sm:$0xff]
                  %373 = vst [vmem:[%s367 + $0x10] sm:$0xff] %v372
                  %v374 = vld [vmem:[%s366 + $0x18] sm:$0xff]
                  %375 = vst [vmem:[%s367 + $0x18] sm:$0xff] %v374
                  %v376 = vld [vmem:[%s366 + $0x20] sm:$0xff]
                  %377 = vst [vmem:[%s367 + $0x20] sm:$0xff] %v376
                  %v378 = vld [vmem:[%s366 + $0x28] sm:$0xff]
                  %379 = vst [vmem:[%s367 + $0x28] sm:$0xff] %v378
                  %v380 = vld [vmem:[%s366 + $0x30] sm:$0xff]
                  %381 = vst [vmem:[%s367 + $0x30] sm:$0xff] %v380
                  %v382 = vld [vmem:[%s366 + $0x38] sm:$0xff]
                  %383 = vst [vmem:[%s367 + $0x38] sm:$0xff] %v382
                  %v384 = vld [vmem:[%s366 + $0x40] sm:$0xff]
                  %385 = vst [vmem:[%s367 + $0x40] sm:$0xff] %v384
                  %v386 = vld [vmem:[%s366 + $0x48] sm:$0xff]
                  %387 = vst [vmem:[%s367 + $0x48] sm:$0xff] %v386
                  %v388 = vld [vmem:[%s366 + $0x50] sm:$0xff]
                  %389 = vst [vmem:[%s367 + $0x50] sm:$0xff] %v388
                  %v390 = vld [vmem:[%s366 + $0x58] sm:$0xff]
                  %391 = vst [vmem:[%s367 + $0x58] sm:$0xff] %v390
                  %v392 = vld [vmem:[%s366 + $0x60] sm:$0xff]
                  %393 = vst [vmem:[%s367 + $0x60] sm:$0xff] %v392
                  %v394 = vld [vmem:[%s366 + $0x68] sm:$0xff]
                  %395 = vst [vmem:[%s367 + $0x68] sm:$0xff] %v394
                  %v396 = vld [vmem:[%s366 + $0x70] sm:$0xff]
                  %397 = vst [vmem:[%s367 + $0x70] sm:$0xff] %v396
                  %v398 = vld [vmem:[%s366 + $0x78] sm:$0xff]
                  %399 = vst [vmem:[%s367 + $0x78] sm:$0xff] %v398
                  %v400 = vld [vmem:[%s366 + $0x100] sm:$0xff]
                  %401 = vst [vmem:[%s367 + $0x80] sm:$0xff] %v400
                  %v402 = vld [vmem:[%s366 + $0x108] sm:$0xff]
                  %403 = vst [vmem:[%s367 + $0x88] sm:$0xff] %v402
                  %v404 = vld [vmem:[%s366 + $0x110] sm:$0xff]
                  %405 = vst [vmem:[%s367 + $0x90] sm:$0xff] %v404
                  %v406 = vld [vmem:[%s366 + $0x118] sm:$0xff]
                  %407 = vst [vmem:[%s367 + $0x98] sm:$0xff] %v406
                  %v408 = vld [vmem:[%s366 + $0x120] sm:$0xff]
                  %409 = vst [vmem:[%s367 + $0xa0] sm:$0xff] %v408
                  %v410 = vld [vmem:[%s366 + $0x128] sm:$0xff]
                  %411 = vst [vmem:[%s367 + $0xa8] sm:$0xff] %v410
                  %v412 = vld [vmem:[%s366 + $0x130] sm:$0xff]
                  %413 = vst [vmem:[%s367 + $0xb0] sm:$0xff] %v412
                  %v414 = vld [vmem:[%s366 + $0x138] sm:$0xff]
                  %415 = vst [vmem:[%s367 + $0xb8] sm:$0xff] %v414
                  %v416 = vld [vmem:[%s366 + $0x140] sm:$0xff]
                  %417 = vst [vmem:[%s367 + $0xc0] sm:$0xff] %v416
                  %v418 = vld [vmem:[%s366 + $0x148] sm:$0xff]
                  %419 = vst [vmem:[%s367 + $0xc8] sm:$0xff] %v418
                  %v420 = vld [vmem:[%s366 + $0x150] sm:$0xff]
                  %421 = vst [vmem:[%s367 + $0xd0] sm:$0xff] %v420
                  %v422 = vld [vmem:[%s366 + $0x158] sm:$0xff]
                  %423 = vst [vmem:[%s367 + $0xd8] sm:$0xff] %v422
                  %v424 = vld [vmem:[%s366 + $0x160] sm:$0xff]
                  %425 = vst [vmem:[%s367 + $0xe0] sm:$0xff] %v424
                  %v426 = vld [vmem:[%s366 + $0x168] sm:$0xff]
                  %427 = vst [vmem:[%s367 + $0xe8] sm:$0xff] %v426
                  %v428 = vld [vmem:[%s366 + $0x170] sm:$0xff]
                  %429 = vst [vmem:[%s367 + $0xf0] sm:$0xff] %v428
                  %v430 = vld [vmem:[%s366 + $0x178] sm:$0xff]
                  %431 = vst [vmem:[%s367 + $0xf8] sm:$0xff] %v430
                  %v432 = vld [vmem:[%s366 + $0x200] sm:$0xff]
                  %433 = vst [vmem:[%s367 + $0x100] sm:$0xff] %v432
                  %v434 = vld [vmem:[%s366 + $0x208] sm:$0xff]
                  %435 = vst [vmem:[%s367 + $0x108] sm:$0xff] %v434
                  %v436 = vld [vmem:[%s366 + $0x210] sm:$0xff]
                  %437 = vst [vmem:[%s367 + $0x110] sm:$0xff] %v436
                  %v438 = vld [vmem:[%s366 + $0x218] sm:$0xff]
                  %439 = vst [vmem:[%s367 + $0x118] sm:$0xff] %v438
                  %v440 = vld [vmem:[%s366 + $0x220] sm:$0xff]
                  %441 = vst [vmem:[%s367 + $0x120] sm:$0xff] %v440
                  %v442 = vld [vmem:[%s366 + $0x228] sm:$0xff]
                  %443 = vst [vmem:[%s367 + $0x128] sm:$0xff] %v442
                  %v444 = vld [vmem:[%s366 + $0x230] sm:$0xff]
                  %445 = vst [vmem:[%s367 + $0x130] sm:$0xff] %v444
                  %v446 = vld [vmem:[%s366 + $0x238] sm:$0xff]
                  %447 = vst [vmem:[%s367 + $0x138] sm:$0xff] %v446
                  %v448 = vld [vmem:[%s366 + $0x240] sm:$0xff]
                  %449 = vst [vmem:[%s367 + $0x140] sm:$0xff] %v448
                  %v450 = vld [vmem:[%s366 + $0x248] sm:$0xff]
                  %451 = vst [vmem:[%s367 + $0x148] sm:$0xff] %v450
                  %v452 = vld [vmem:[%s366 + $0x250] sm:$0xff]
                  %453 = vst [vmem:[%s367 + $0x150] sm:$0xff] %v452
                  %v454 = vld [vmem:[%s366 + $0x258] sm:$0xff]
                  %455 = vst [vmem:[%s367 + $0x158] sm:$0xff] %v454
                  %v456 = vld [vmem:[%s366 + $0x260] sm:$0xff]
                  %457 = vst [vmem:[%s367 + $0x160] sm:$0xff] %v456
                  %v458 = vld [vmem:[%s366 + $0x268] sm:$0xff]
                  %459 = vst [vmem:[%s367 + $0x168] sm:$0xff] %v458
                  %v460 = vld [vmem:[%s366 + $0x270] sm:$0xff]
                  %461 = vst [vmem:[%s367 + $0x170] sm:$0xff] %v460
                  %v462 = vld [vmem:[%s366 + $0x278] sm:$0xff]
                  %463 = vst [vmem:[%s367 + $0x178] sm:$0xff] %v462
                  %v464 = vld [vmem:[%s366 + $0x300] sm:$0xff]
                  %465 = vst [vmem:[%s367 + $0x180] sm:$0xff] %v464
                  %v466 = vld [vmem:[%s366 + $0x308] sm:$0xff]
                  %467 = vst [vmem:[%s367 + $0x188] sm:$0xff] %v466
                  %v468 = vld [vmem:[%s366 + $0x310] sm:$0xff]
                  %469 = vst [vmem:[%s367 + $0x190] sm:$0xff] %v468
                  %v470 = vld [vmem:[%s366 + $0x318] sm:$0xff]
                  %471 = vst [vmem:[%s367 + $0x198] sm:$0xff] %v470
                  %v472 = vld [vmem:[%s366 + $0x320] sm:$0xff]
                  %473 = vst [vmem:[%s367 + $0x1a0] sm:$0xff] %v472
                  %v474 = vld [vmem:[%s366 + $0x328] sm:$0xff]
                  %475 = vst [vmem:[%s367 + $0x1a8] sm:$0xff] %v474
                  %v476 = vld [vmem:[%s366 + $0x330] sm:$0xff]
                  %477 = vst [vmem:[%s367 + $0x1b0] sm:$0xff] %v476
                  %v478 = vld [vmem:[%s366 + $0x338] sm:$0xff]
                  %479 = vst [vmem:[%s367 + $0x1b8] sm:$0xff] %v478
                  %v480 = vld [vmem:[%s366 + $0x340] sm:$0xff]
                  %481 = vst [vmem:[%s367 + $0x1c0] sm:$0xff] %v480
                  %v482 = vld [vmem:[%s366 + $0x348] sm:$0xff]
                  %483 = vst [vmem:[%s367 + $0x1c8] sm:$0xff] %v482
                  %v484 = vld [vmem:[%s366 + $0x350] sm:$0xff]
                  %485 = vst [vmem:[%s367 + $0x1d0] sm:$0xff] %v484
                  %v486 = vld [vmem:[%s366 + $0x358] sm:$0xff]
                  %487 = vst [vmem:[%s367 + $0x1d8] sm:$0xff] %v486
                  %v488 = vld [vmem:[%s366 + $0x360] sm:$0xff]
                  %489 = vst [vmem:[%s367 + $0x1e0] sm:$0xff] %v488
                  %v490 = vld [vmem:[%s366 + $0x368] sm:$0xff]
                  %491 = vst [vmem:[%s367 + $0x1e8] sm:$0xff] %v490
                  %v492 = vld [vmem:[%s366 + $0x370] sm:$0xff]
                  %493 = vst [vmem:[%s367 + $0x1f0] sm:$0xff] %v492
                  %v494 = vld [vmem:[%s366 + $0x378] sm:$0xff]
                  %495 = vst [vmem:[%s367 + $0x1f8] sm:$0xff] %v494
                $region48: #{tpu_custom_call.1} parent=42 // loop_footer
                  %s365 = sadd.s32 1, %s361
                $region49: #{tpu_custom_call.1} parent=42 // loop_footer_branch
                  %360 = sbr.rel target = $region45
                $region50: #{tpu_custom_call.1} parent=42 // loop_exit
                  _
              $region43: #{tpu_custom_call.1} parent=27 // pred_fallthru
                _
              // Predicated region
              $region51: #{tpu_custom_call.1} parent=27 // pred_check
                _
              $region52: #{tpu_custom_call.1} parent=27 // pred_check_branch
                %497 = sbr.rel target = $region54
              $region53: #{tpu_custom_call.1} parent=27 // pred_region
                _
              $region54: #{tpu_custom_call.1} parent=27 // pred_fallthru
                _
            $region28: #{tpu_custom_call.1} parent=23 // pred_fallthru
              _
            // Predicated region
            $region29: #{tpu_custom_call.1} parent=23 // pred_check
              _
            $region30: #{tpu_custom_call.1} parent=23 // pred_check_branch
              %220 = sbr.rel target = $region32
            $region31: #{tpu_custom_call.1} parent=23 // pred_region
              loop: start=0, step=1, limit=1
              $region33: #{tpu_custom_call.1} parent=31 // loop_pre_header
                _
              $region34: #{tpu_custom_call.1} parent=31 // loop_header
                %s223 = sphi 0, %s227
                %p224 = scmp.ge.s32.totalorder %s223, 1
                %s228 = sphi %s214, %s214
                %s229 = sphi %s211, %s211
              $region35: #{tpu_custom_call.1} parent=31 // loop_header_branch
                %226 = sbr.rel (%p224) target = $region39
              $region36: #{tpu_custom_call.1} parent=31 // loop_body
                %v230 = vld [vmem:[%s228] sm:$0xff]
                %231 = vst [vmem:[%s229] sm:$0xff] %v230
                %v232 = vld [vmem:[%s228 + $0x8] sm:$0xff]
                %233 = vst [vmem:[%s229 + $0x8] sm:$0xff] %v232
                %v234 = vld [vmem:[%s228 + $0x10] sm:$0xff]
                %235 = vst [vmem:[%s229 + $0x10] sm:$0xff] %v234
                %v236 = vld [vmem:[%s228 + $0x18] sm:$0xff]
                %237 = vst [vmem:[%s229 + $0x18] sm:$0xff] %v236
                %v238 = vld [vmem:[%s228 + $0x20] sm:$0xff]
                %239 = vst [vmem:[%s229 + $0x20] sm:$0xff] %v238
                %v240 = vld [vmem:[%s228 + $0x28] sm:$0xff]
                %241 = vst [vmem:[%s229 + $0x28] sm:$0xff] %v240
                %v242 = vld [vmem:[%s228 + $0x30] sm:$0xff]
                %243 = vst [vmem:[%s229 + $0x30] sm:$0xff] %v242
                %v244 = vld [vmem:[%s228 + $0x38] sm:$0xff]
                %245 = vst [vmem:[%s229 + $0x38] sm:$0xff] %v244
                %v246 = vld [vmem:[%s228 + $0x40] sm:$0xff]
                %247 = vst [vmem:[%s229 + $0x40] sm:$0xff] %v246
                %v248 = vld [vmem:[%s228 + $0x48] sm:$0xff]
                %249 = vst [vmem:[%s229 + $0x48] sm:$0xff] %v248
                %v250 = vld [vmem:[%s228 + $0x50] sm:$0xff]
                %251 = vst [vmem:[%s229 + $0x50] sm:$0xff] %v250
                %v252 = vld [vmem:[%s228 + $0x58] sm:$0xff]
                %253 = vst [vmem:[%s229 + $0x58] sm:$0xff] %v252
                %v254 = vld [vmem:[%s228 + $0x60] sm:$0xff]
                %255 = vst [vmem:[%s229 + $0x60] sm:$0xff] %v254
                %v256 = vld [vmem:[%s228 + $0x68] sm:$0xff]
                %257 = vst [vmem:[%s229 + $0x68] sm:$0xff] %v256
                %v258 = vld [vmem:[%s228 + $0x70] sm:$0xff]
                %259 = vst [vmem:[%s229 + $0x70] sm:$0xff] %v258
                %v260 = vld [vmem:[%s228 + $0x78] sm:$0xff]
                %261 = vst [vmem:[%s229 + $0x78] sm:$0xff] %v260
                %v262 = vld [vmem:[%s228 + $0x100] sm:$0xff]
                %263 = vst [vmem:[%s229 + $0x80] sm:$0xff] %v262
                %v264 = vld [vmem:[%s228 + $0x108] sm:$0xff]
                %265 = vst [vmem:[%s229 + $0x88] sm:$0xff] %v264
                %v266 = vld [vmem:[%s228 + $0x110] sm:$0xff]
                %267 = vst [vmem:[%s229 + $0x90] sm:$0xff] %v266
                %v268 = vld [vmem:[%s228 + $0x118] sm:$0xff]
                %269 = vst [vmem:[%s229 + $0x98] sm:$0xff] %v268
                %v270 = vld [vmem:[%s228 + $0x120] sm:$0xff]
                %271 = vst [vmem:[%s229 + $0xa0] sm:$0xff] %v270
                %v272 = vld [vmem:[%s228 + $0x128] sm:$0xff]
                %273 = vst [vmem:[%s229 + $0xa8] sm:$0xff] %v272
                %v274 = vld [vmem:[%s228 + $0x130] sm:$0xff]
                %275 = vst [vmem:[%s229 + $0xb0] sm:$0xff] %v274
                %v276 = vld [vmem:[%s228 + $0x138] sm:$0xff]
                %277 = vst [vmem:[%s229 + $0xb8] sm:$0xff] %v276
                %v278 = vld [vmem:[%s228 + $0x140] sm:$0xff]
                %279 = vst [vmem:[%s229 + $0xc0] sm:$0xff] %v278
                %v280 = vld [vmem:[%s228 + $0x148] sm:$0xff]
                %281 = vst [vmem:[%s229 + $0xc8] sm:$0xff] %v280
                %v282 = vld [vmem:[%s228 + $0x150] sm:$0xff]
                %283 = vst [vmem:[%s229 + $0xd0] sm:$0xff] %v282
                %v284 = vld [vmem:[%s228 + $0x158] sm:$0xff]
                %285 = vst [vmem:[%s229 + $0xd8] sm:$0xff] %v284
                %v286 = vld [vmem:[%s228 + $0x160] sm:$0xff]
                %287 = vst [vmem:[%s229 + $0xe0] sm:$0xff] %v286
                %v288 = vld [vmem:[%s228 + $0x168] sm:$0xff]
                %289 = vst [vmem:[%s229 + $0xe8] sm:$0xff] %v288
                %v290 = vld [vmem:[%s228 + $0x170] sm:$0xff]
                %291 = vst [vmem:[%s229 + $0xf0] sm:$0xff] %v290
                %v292 = vld [vmem:[%s228 + $0x178] sm:$0xff]
                %293 = vst [vmem:[%s229 + $0xf8] sm:$0xff] %v292
                %v294 = vld [vmem:[%s228 + $0x200] sm:$0xff]
                %295 = vst [vmem:[%s229 + $0x100] sm:$0xff] %v294
                %v296 = vld [vmem:[%s228 + $0x208] sm:$0xff]
                %297 = vst [vmem:[%s229 + $0x108] sm:$0xff] %v296
                %v298 = vld [vmem:[%s228 + $0x210] sm:$0xff]
                %299 = vst [vmem:[%s229 + $0x110] sm:$0xff] %v298
                %v300 = vld [vmem:[%s228 + $0x218] sm:$0xff]
                %301 = vst [vmem:[%s229 + $0x118] sm:$0xff] %v300
                %v302 = vld [vmem:[%s228 + $0x220] sm:$0xff]
                %303 = vst [vmem:[%s229 + $0x120] sm:$0xff] %v302
                %v304 = vld [vmem:[%s228 + $0x228] sm:$0xff]
                %305 = vst [vmem:[%s229 + $0x128] sm:$0xff] %v304
                %v306 = vld [vmem:[%s228 + $0x230] sm:$0xff]
                %307 = vst [vmem:[%s229 + $0x130] sm:$0xff] %v306
                %v308 = vld [vmem:[%s228 + $0x238] sm:$0xff]
                %309 = vst [vmem:[%s229 + $0x138] sm:$0xff] %v308
                %v310 = vld [vmem:[%s228 + $0x240] sm:$0xff]
                %311 = vst [vmem:[%s229 + $0x140] sm:$0xff] %v310
                %v312 = vld [vmem:[%s228 + $0x248] sm:$0xff]
                %313 = vst [vmem:[%s229 + $0x148] sm:$0xff] %v312
                %v314 = vld [vmem:[%s228 + $0x250] sm:$0xff]
                %315 = vst [vmem:[%s229 + $0x150] sm:$0xff] %v314
                %v316 = vld [vmem:[%s228 + $0x258] sm:$0xff]
                %317 = vst [vmem:[%s229 + $0x158] sm:$0xff] %v316
                %v318 = vld [vmem:[%s228 + $0x260] sm:$0xff]
                %319 = vst [vmem:[%s229 + $0x160] sm:$0xff] %v318
                %v320 = vld [vmem:[%s228 + $0x268] sm:$0xff]
                %321 = vst [vmem:[%s229 + $0x168] sm:$0xff] %v320
                %v322 = vld [vmem:[%s228 + $0x270] sm:$0xff]
                %323 = vst [vmem:[%s229 + $0x170] sm:$0xff] %v322
                %v324 = vld [vmem:[%s228 + $0x278] sm:$0xff]
                %325 = vst [vmem:[%s229 + $0x178] sm:$0xff] %v324
                %v326 = vld [vmem:[%s228 + $0x300] sm:$0xff]
                %327 = vst [vmem:[%s229 + $0x180] sm:$0xff] %v326
                %v328 = vld [vmem:[%s228 + $0x308] sm:$0xff]
                %329 = vst [vmem:[%s229 + $0x188] sm:$0xff] %v328
                %v330 = vld [vmem:[%s228 + $0x310] sm:$0xff]
                %331 = vst [vmem:[%s229 + $0x190] sm:$0xff] %v330
                %v332 = vld [vmem:[%s228 + $0x318] sm:$0xff]
                %333 = vst [vmem:[%s229 + $0x198] sm:$0xff] %v332
                %v334 = vld [vmem:[%s228 + $0x320] sm:$0xff]
                %335 = vst [vmem:[%s229 + $0x1a0] sm:$0xff] %v334
                %v336 = vld [vmem:[%s228 + $0x328] sm:$0xff]
                %337 = vst [vmem:[%s229 + $0x1a8] sm:$0xff] %v336
                %v338 = vld [vmem:[%s228 + $0x330] sm:$0xff]
                %339 = vst [vmem:[%s229 + $0x1b0] sm:$0xff] %v338
                %v340 = vld [vmem:[%s228 + $0x338] sm:$0xff]
                %341 = vst [vmem:[%s229 + $0x1b8] sm:$0xff] %v340
                %v342 = vld [vmem:[%s228 + $0x340] sm:$0xff]
                %343 = vst [vmem:[%s229 + $0x1c0] sm:$0xff] %v342
                %v344 = vld [vmem:[%s228 + $0x348] sm:$0xff]
                %345 = vst [vmem:[%s229 + $0x1c8] sm:$0xff] %v344
                %v346 = vld [vmem:[%s228 + $0x350] sm:$0xff]
                %347 = vst [vmem:[%s229 + $0x1d0] sm:$0xff] %v346
                %v348 = vld [vmem:[%s228 + $0x358] sm:$0xff]
                %349 = vst [vmem:[%s229 + $0x1d8] sm:$0xff] %v348
                %v350 = vld [vmem:[%s228 + $0x360] sm:$0xff]
                %351 = vst [vmem:[%s229 + $0x1e0] sm:$0xff] %v350
                %v352 = vld [vmem:[%s228 + $0x368] sm:$0xff]
                %353 = vst [vmem:[%s229 + $0x1e8] sm:$0xff] %v352
                %v354 = vld [vmem:[%s228 + $0x370] sm:$0xff]
                %355 = vst [vmem:[%s229 + $0x1f0] sm:$0xff] %v354
                %v356 = vld [vmem:[%s228 + $0x378] sm:$0xff]
                %357 = vst [vmem:[%s229 + $0x1f8] sm:$0xff] %v356
              $region37: #{tpu_custom_call.1} parent=31 // loop_footer
                %s227 = sadd.s32 1, %s223
              $region38: #{tpu_custom_call.1} parent=31 // loop_footer_branch
                %222 = sbr.rel target = $region34
              $region39: #{tpu_custom_call.1} parent=31 // loop_exit
                _
            $region32: #{tpu_custom_call.1} parent=23 // pred_fallthru
              _
          $region24: #{tpu_custom_call.1} parent=19 // pred_fallthru
            _
          %498 = vnop
        $region20: #{tpu_custom_call.1} parent=15 // pred_fallthru
          _
        // Predicated region
        $region55: #{tpu_custom_call.1} parent=15 // pred_check
          %p499 = pneg %p86
        $region56: #{tpu_custom_call.1} parent=15 // pred_check_branch
          %501 = sbr.rel (%p499) target = $region58
        $region57: #{tpu_custom_call.1} parent=15 // pred_region
          %s502 = sand.u32 %s76, 1
          %s503 = sand.u32 %s76, 1
          %s504 = smul.addr %s503, 512
          %s505 = scalar_lea.vmem [#allocation7], %s504
          %s506 = smul.u32 %s29, 2
          %s507 = sadd.s32 %s506, %s30
          %s508 = sld [smem:[#allocation5 + %s507]]
          %s509 = smul.u32 16, %s508
          %s510 = smul.addr %s509, 8
          %s511 = scalar_lea.vmem %s3, %s510
          // Predicated region
          $region59: #{tpu_custom_call.1} parent=57 // pred_check
            _
          $region60: #{tpu_custom_call.1} parent=57 // pred_check_branch
            %513 = sbr.rel (0) target = $region62
          $region61: #{tpu_custom_call.1} parent=57 // pred_region
            // Predicated region
            $region63: #{tpu_custom_call.1} parent=61 // pred_check
              _
            $region64: #{tpu_custom_call.1} parent=61 // pred_check_branch
              %515 = sbr.rel (0) target = $region66
            $region65: #{tpu_custom_call.1} parent=61 // pred_region
              // Predicated region
              $region78: #{tpu_custom_call.1} parent=65 // pred_check
                _
              $region79: #{tpu_custom_call.1} parent=65 // pred_check_branch
                %656 = sbr.rel (0) target = $region81
              $region80: #{tpu_custom_call.1} parent=65 // pred_region
                loop: start=0, step=1, limit=1
                $region82: #{tpu_custom_call.1} parent=80 // loop_pre_header
                  _
                $region83: #{tpu_custom_call.1} parent=80 // loop_header
                  %s658 = sphi 0, %s662
                  %p659 = scmp.ge.s32.totalorder %s658, 1
                  %s663 = sphi %s511, %s511
                  %s664 = sphi %s505, %s505
                $region84: #{tpu_custom_call.1} parent=80 // loop_header_branch
                  %661 = sbr.rel (%p659) target = $region88
                $region85: #{tpu_custom_call.1} parent=80 // loop_body
                  %v665 = vld [vmem:[%s663] sm:$0xff]
                  %666 = vst [vmem:[%s664] sm:$0xff] %v665
                  %v667 = vld [vmem:[%s663 + $0x8] sm:$0xff]
                  %668 = vst [vmem:[%s664 + $0x8] sm:$0xff] %v667
                  %v669 = vld [vmem:[%s663 + $0x10] sm:$0xff]
                  %670 = vst [vmem:[%s664 + $0x10] sm:$0xff] %v669
                  %v671 = vld [vmem:[%s663 + $0x18] sm:$0xff]
                  %672 = vst [vmem:[%s664 + $0x18] sm:$0xff] %v671
                  %v673 = vld [vmem:[%s663 + $0x20] sm:$0xff]
                  %674 = vst [vmem:[%s664 + $0x20] sm:$0xff] %v673
                  %v675 = vld [vmem:[%s663 + $0x28] sm:$0xff]
                  %676 = vst [vmem:[%s664 + $0x28] sm:$0xff] %v675
                  %v677 = vld [vmem:[%s663 + $0x30] sm:$0xff]
                  %678 = vst [vmem:[%s664 + $0x30] sm:$0xff] %v677
                  %v679 = vld [vmem:[%s663 + $0x38] sm:$0xff]
                  %680 = vst [vmem:[%s664 + $0x38] sm:$0xff] %v679
                  %v681 = vld [vmem:[%s663 + $0x40] sm:$0xff]
                  %682 = vst [vmem:[%s664 + $0x40] sm:$0xff] %v681
                  %v683 = vld [vmem:[%s663 + $0x48] sm:$0xff]
                  %684 = vst [vmem:[%s664 + $0x48] sm:$0xff] %v683
                  %v685 = vld [vmem:[%s663 + $0x50] sm:$0xff]
                  %686 = vst [vmem:[%s664 + $0x50] sm:$0xff] %v685
                  %v687 = vld [vmem:[%s663 + $0x58] sm:$0xff]
                  %688 = vst [vmem:[%s664 + $0x58] sm:$0xff] %v687
                  %v689 = vld [vmem:[%s663 + $0x60] sm:$0xff]
                  %690 = vst [vmem:[%s664 + $0x60] sm:$0xff] %v689
                  %v691 = vld [vmem:[%s663 + $0x68] sm:$0xff]
                  %692 = vst [vmem:[%s664 + $0x68] sm:$0xff] %v691
                  %v693 = vld [vmem:[%s663 + $0x70] sm:$0xff]
                  %694 = vst [vmem:[%s664 + $0x70] sm:$0xff] %v693
                  %v695 = vld [vmem:[%s663 + $0x78] sm:$0xff]
                  %696 = vst [vmem:[%s664 + $0x78] sm:$0xff] %v695
                  %v697 = vld [vmem:[%s663 + $0x100] sm:$0xff]
                  %698 = vst [vmem:[%s664 + $0x80] sm:$0xff] %v697
                  %v699 = vld [vmem:[%s663 + $0x108] sm:$0xff]
                  %700 = vst [vmem:[%s664 + $0x88] sm:$0xff] %v699
                  %v701 = vld [vmem:[%s663 + $0x110] sm:$0xff]
                  %702 = vst [vmem:[%s664 + $0x90] sm:$0xff] %v701
                  %v703 = vld [vmem:[%s663 + $0x118] sm:$0xff]
                  %704 = vst [vmem:[%s664 + $0x98] sm:$0xff] %v703
                  %v705 = vld [vmem:[%s663 + $0x120] sm:$0xff]
                  %706 = vst [vmem:[%s664 + $0xa0] sm:$0xff] %v705
                  %v707 = vld [vmem:[%s663 + $0x128] sm:$0xff]
                  %708 = vst [vmem:[%s664 + $0xa8] sm:$0xff] %v707
                  %v709 = vld [vmem:[%s663 + $0x130] sm:$0xff]
                  %710 = vst [vmem:[%s664 + $0xb0] sm:$0xff] %v709
                  %v711 = vld [vmem:[%s663 + $0x138] sm:$0xff]
                  %712 = vst [vmem:[%s664 + $0xb8] sm:$0xff] %v711
                  %v713 = vld [vmem:[%s663 + $0x140] sm:$0xff]
                  %714 = vst [vmem:[%s664 + $0xc0] sm:$0xff] %v713
                  %v715 = vld [vmem:[%s663 + $0x148] sm:$0xff]
                  %716 = vst [vmem:[%s664 + $0xc8] sm:$0xff] %v715
                  %v717 = vld [vmem:[%s663 + $0x150] sm:$0xff]
                  %718 = vst [vmem:[%s664 + $0xd0] sm:$0xff] %v717
                  %v719 = vld [vmem:[%s663 + $0x158] sm:$0xff]
                  %720 = vst [vmem:[%s664 + $0xd8] sm:$0xff] %v719
                  %v721 = vld [vmem:[%s663 + $0x160] sm:$0xff]
                  %722 = vst [vmem:[%s664 + $0xe0] sm:$0xff] %v721
                  %v723 = vld [vmem:[%s663 + $0x168] sm:$0xff]
                  %724 = vst [vmem:[%s664 + $0xe8] sm:$0xff] %v723
                  %v725 = vld [vmem:[%s663 + $0x170] sm:$0xff]
                  %726 = vst [vmem:[%s664 + $0xf0] sm:$0xff] %v725
                  %v727 = vld [vmem:[%s663 + $0x178] sm:$0xff]
                  %728 = vst [vmem:[%s664 + $0xf8] sm:$0xff] %v727
                  %v729 = vld [vmem:[%s663 + $0x200] sm:$0xff]
                  %730 = vst [vmem:[%s664 + $0x100] sm:$0xff] %v729
                  %v731 = vld [vmem:[%s663 + $0x208] sm:$0xff]
                  %732 = vst [vmem:[%s664 + $0x108] sm:$0xff] %v731
                  %v733 = vld [vmem:[%s663 + $0x210] sm:$0xff]
                  %734 = vst [vmem:[%s664 + $0x110] sm:$0xff] %v733
                  %v735 = vld [vmem:[%s663 + $0x218] sm:$0xff]
                  %736 = vst [vmem:[%s664 + $0x118] sm:$0xff] %v735
                  %v737 = vld [vmem:[%s663 + $0x220] sm:$0xff]
                  %738 = vst [vmem:[%s664 + $0x120] sm:$0xff] %v737
                  %v739 = vld [vmem:[%s663 + $0x228] sm:$0xff]
                  %740 = vst [vmem:[%s664 + $0x128] sm:$0xff] %v739
                  %v741 = vld [vmem:[%s663 + $0x230] sm:$0xff]
                  %742 = vst [vmem:[%s664 + $0x130] sm:$0xff] %v741
                  %v743 = vld [vmem:[%s663 + $0x238] sm:$0xff]
                  %744 = vst [vmem:[%s664 + $0x138] sm:$0xff] %v743
                  %v745 = vld [vmem:[%s663 + $0x240] sm:$0xff]
                  %746 = vst [vmem:[%s664 + $0x140] sm:$0xff] %v745
                  %v747 = vld [vmem:[%s663 + $0x248] sm:$0xff]
                  %748 = vst [vmem:[%s664 + $0x148] sm:$0xff] %v747
                  %v749 = vld [vmem:[%s663 + $0x250] sm:$0xff]
                  %750 = vst [vmem:[%s664 + $0x150] sm:$0xff] %v749
                  %v751 = vld [vmem:[%s663 + $0x258] sm:$0xff]
                  %752 = vst [vmem:[%s664 + $0x158] sm:$0xff] %v751
                  %v753 = vld [vmem:[%s663 + $0x260] sm:$0xff]
                  %754 = vst [vmem:[%s664 + $0x160] sm:$0xff] %v753
                  %v755 = vld [vmem:[%s663 + $0x268] sm:$0xff]
                  %756 = vst [vmem:[%s664 + $0x168] sm:$0xff] %v755
                  %v757 = vld [vmem:[%s663 + $0x270] sm:$0xff]
                  %758 = vst [vmem:[%s664 + $0x170] sm:$0xff] %v757
                  %v759 = vld [vmem:[%s663 + $0x278] sm:$0xff]
                  %760 = vst [vmem:[%s664 + $0x178] sm:$0xff] %v759
                  %v761 = vld [vmem:[%s663 + $0x300] sm:$0xff]
                  %762 = vst [vmem:[%s664 + $0x180] sm:$0xff] %v761
                  %v763 = vld [vmem:[%s663 + $0x308] sm:$0xff]
                  %764 = vst [vmem:[%s664 + $0x188] sm:$0xff] %v763
                  %v765 = vld [vmem:[%s663 + $0x310] sm:$0xff]
                  %766 = vst [vmem:[%s664 + $0x190] sm:$0xff] %v765
                  %v767 = vld [vmem:[%s663 + $0x318] sm:$0xff]
                  %768 = vst [vmem:[%s664 + $0x198] sm:$0xff] %v767
                  %v769 = vld [vmem:[%s663 + $0x320] sm:$0xff]
                  %770 = vst [vmem:[%s664 + $0x1a0] sm:$0xff] %v769
                  %v771 = vld [vmem:[%s663 + $0x328] sm:$0xff]
                  %772 = vst [vmem:[%s664 + $0x1a8] sm:$0xff] %v771
                  %v773 = vld [vmem:[%s663 + $0x330] sm:$0xff]
                  %774 = vst [vmem:[%s664 + $0x1b0] sm:$0xff] %v773
                  %v775 = vld [vmem:[%s663 + $0x338] sm:$0xff]
                  %776 = vst [vmem:[%s664 + $0x1b8] sm:$0xff] %v775
                  %v777 = vld [vmem:[%s663 + $0x340] sm:$0xff]
                  %778 = vst [vmem:[%s664 + $0x1c0] sm:$0xff] %v777
                  %v779 = vld [vmem:[%s663 + $0x348] sm:$0xff]
                  %780 = vst [vmem:[%s664 + $0x1c8] sm:$0xff] %v779
                  %v781 = vld [vmem:[%s663 + $0x350] sm:$0xff]
                  %782 = vst [vmem:[%s664 + $0x1d0] sm:$0xff] %v781
                  %v783 = vld [vmem:[%s663 + $0x358] sm:$0xff]
                  %784 = vst [vmem:[%s664 + $0x1d8] sm:$0xff] %v783
                  %v785 = vld [vmem:[%s663 + $0x360] sm:$0xff]
                  %786 = vst [vmem:[%s664 + $0x1e0] sm:$0xff] %v785
                  %v787 = vld [vmem:[%s663 + $0x368] sm:$0xff]
                  %788 = vst [vmem:[%s664 + $0x1e8] sm:$0xff] %v787
                  %v789 = vld [vmem:[%s663 + $0x370] sm:$0xff]
                  %790 = vst [vmem:[%s664 + $0x1f0] sm:$0xff] %v789
                  %v791 = vld [vmem:[%s663 + $0x378] sm:$0xff]
                  %792 = vst [vmem:[%s664 + $0x1f8] sm:$0xff] %v791
                $region86: #{tpu_custom_call.1} parent=80 // loop_footer
                  %s662 = sadd.s32 1, %s658
                $region87: #{tpu_custom_call.1} parent=80 // loop_footer_branch
                  %657 = sbr.rel target = $region83
                $region88: #{tpu_custom_call.1} parent=80 // loop_exit
                  _
              $region81: #{tpu_custom_call.1} parent=65 // pred_fallthru
                _
              // Predicated region
              $region89: #{tpu_custom_call.1} parent=65 // pred_check
                _
              $region90: #{tpu_custom_call.1} parent=65 // pred_check_branch
                %794 = sbr.rel target = $region92
              $region91: #{tpu_custom_call.1} parent=65 // pred_region
                _
              $region92: #{tpu_custom_call.1} parent=65 // pred_fallthru
                _
            $region66: #{tpu_custom_call.1} parent=61 // pred_fallthru
              _
            // Predicated region
            $region67: #{tpu_custom_call.1} parent=61 // pred_check
              _
            $region68: #{tpu_custom_call.1} parent=61 // pred_check_branch
              %517 = sbr.rel target = $region70
            $region69: #{tpu_custom_call.1} parent=61 // pred_region
              loop: start=0, step=1, limit=1
              $region71: #{tpu_custom_call.1} parent=69 // loop_pre_header
                _
              $region72: #{tpu_custom_call.1} parent=69 // loop_header
                %s520 = sphi 0, %s524
                %p521 = scmp.ge.s32.totalorder %s520, 1
                %s525 = sphi %s511, %s511
                %s526 = sphi %s505, %s505
              $region73: #{tpu_custom_call.1} parent=69 // loop_header_branch
                %523 = sbr.rel (%p521) target = $region77
              $region74: #{tpu_custom_call.1} parent=69 // loop_body
                %v527 = vld [vmem:[%s525] sm:$0xff]
                %528 = vst [vmem:[%s526] sm:$0xff] %v527
                %v529 = vld [vmem:[%s525 + $0x8] sm:$0xff]
                %530 = vst [vmem:[%s526 + $0x8] sm:$0xff] %v529
                %v531 = vld [vmem:[%s525 + $0x10] sm:$0xff]
                %532 = vst [vmem:[%s526 + $0x10] sm:$0xff] %v531
                %v533 = vld [vmem:[%s525 + $0x18] sm:$0xff]
                %534 = vst [vmem:[%s526 + $0x18] sm:$0xff] %v533
                %v535 = vld [vmem:[%s525 + $0x20] sm:$0xff]
                %536 = vst [vmem:[%s526 + $0x20] sm:$0xff] %v535
                %v537 = vld [vmem:[%s525 + $0x28] sm:$0xff]
                %538 = vst [vmem:[%s526 + $0x28] sm:$0xff] %v537
                %v539 = vld [vmem:[%s525 + $0x30] sm:$0xff]
                %540 = vst [vmem:[%s526 + $0x30] sm:$0xff] %v539
                %v541 = vld [vmem:[%s525 + $0x38] sm:$0xff]
                %542 = vst [vmem:[%s526 + $0x38] sm:$0xff] %v541
                %v543 = vld [vmem:[%s525 + $0x40] sm:$0xff]
                %544 = vst [vmem:[%s526 + $0x40] sm:$0xff] %v543
                %v545 = vld [vmem:[%s525 + $0x48] sm:$0xff]
                %546 = vst [vmem:[%s526 + $0x48] sm:$0xff] %v545
                %v547 = vld [vmem:[%s525 + $0x50] sm:$0xff]
                %548 = vst [vmem:[%s526 + $0x50] sm:$0xff] %v547
                %v549 = vld [vmem:[%s525 + $0x58] sm:$0xff]
                %550 = vst [vmem:[%s526 + $0x58] sm:$0xff] %v549
                %v551 = vld [vmem:[%s525 + $0x60] sm:$0xff]
                %552 = vst [vmem:[%s526 + $0x60] sm:$0xff] %v551
                %v553 = vld [vmem:[%s525 + $0x68] sm:$0xff]
                %554 = vst [vmem:[%s526 + $0x68] sm:$0xff] %v553
                %v555 = vld [vmem:[%s525 + $0x70] sm:$0xff]
                %556 = vst [vmem:[%s526 + $0x70] sm:$0xff] %v555
                %v557 = vld [vmem:[%s525 + $0x78] sm:$0xff]
                %558 = vst [vmem:[%s526 + $0x78] sm:$0xff] %v557
                %v559 = vld [vmem:[%s525 + $0x100] sm:$0xff]
                %560 = vst [vmem:[%s526 + $0x80] sm:$0xff] %v559
                %v561 = vld [vmem:[%s525 + $0x108] sm:$0xff]
                %562 = vst [vmem:[%s526 + $0x88] sm:$0xff] %v561
                %v563 = vld [vmem:[%s525 + $0x110] sm:$0xff]
                %564 = vst [vmem:[%s526 + $0x90] sm:$0xff] %v563
                %v565 = vld [vmem:[%s525 + $0x118] sm:$0xff]
                %566 = vst [vmem:[%s526 + $0x98] sm:$0xff] %v565
                %v567 = vld [vmem:[%s525 + $0x120] sm:$0xff]
                %568 = vst [vmem:[%s526 + $0xa0] sm:$0xff] %v567
                %v569 = vld [vmem:[%s525 + $0x128] sm:$0xff]
                %570 = vst [vmem:[%s526 + $0xa8] sm:$0xff] %v569
                %v571 = vld [vmem:[%s525 + $0x130] sm:$0xff]
                %572 = vst [vmem:[%s526 + $0xb0] sm:$0xff] %v571
                %v573 = vld [vmem:[%s525 + $0x138] sm:$0xff]
                %574 = vst [vmem:[%s526 + $0xb8] sm:$0xff] %v573
                %v575 = vld [vmem:[%s525 + $0x140] sm:$0xff]
                %576 = vst [vmem:[%s526 + $0xc0] sm:$0xff] %v575
                %v577 = vld [vmem:[%s525 + $0x148] sm:$0xff]
                %578 = vst [vmem:[%s526 + $0xc8] sm:$0xff] %v577
                %v579 = vld [vmem:[%s525 + $0x150] sm:$0xff]
                %580 = vst [vmem:[%s526 + $0xd0] sm:$0xff] %v579
                %v581 = vld [vmem:[%s525 + $0x158] sm:$0xff]
                %582 = vst [vmem:[%s526 + $0xd8] sm:$0xff] %v581
                %v583 = vld [vmem:[%s525 + $0x160] sm:$0xff]
                %584 = vst [vmem:[%s526 + $0xe0] sm:$0xff] %v583
                %v585 = vld [vmem:[%s525 + $0x168] sm:$0xff]
                %586 = vst [vmem:[%s526 + $0xe8] sm:$0xff] %v585
                %v587 = vld [vmem:[%s525 + $0x170] sm:$0xff]
                %588 = vst [vmem:[%s526 + $0xf0] sm:$0xff] %v587
                %v589 = vld [vmem:[%s525 + $0x178] sm:$0xff]
                %590 = vst [vmem:[%s526 + $0xf8] sm:$0xff] %v589
                %v591 = vld [vmem:[%s525 + $0x200] sm:$0xff]
                %592 = vst [vmem:[%s526 + $0x100] sm:$0xff] %v591
                %v593 = vld [vmem:[%s525 + $0x208] sm:$0xff]
                %594 = vst [vmem:[%s526 + $0x108] sm:$0xff] %v593
                %v595 = vld [vmem:[%s525 + $0x210] sm:$0xff]
                %596 = vst [vmem:[%s526 + $0x110] sm:$0xff] %v595
                %v597 = vld [vmem:[%s525 + $0x218] sm:$0xff]
                %598 = vst [vmem:[%s526 + $0x118] sm:$0xff] %v597
                %v599 = vld [vmem:[%s525 + $0x220] sm:$0xff]
                %600 = vst [vmem:[%s526 + $0x120] sm:$0xff] %v599
                %v601 = vld [vmem:[%s525 + $0x228] sm:$0xff]
                %602 = vst [vmem:[%s526 + $0x128] sm:$0xff] %v601
                %v603 = vld [vmem:[%s525 + $0x230] sm:$0xff]
                %604 = vst [vmem:[%s526 + $0x130] sm:$0xff] %v603
                %v605 = vld [vmem:[%s525 + $0x238] sm:$0xff]
                %606 = vst [vmem:[%s526 + $0x138] sm:$0xff] %v605
                %v607 = vld [vmem:[%s525 + $0x240] sm:$0xff]
                %608 = vst [vmem:[%s526 + $0x140] sm:$0xff] %v607
                %v609 = vld [vmem:[%s525 + $0x248] sm:$0xff]
                %610 = vst [vmem:[%s526 + $0x148] sm:$0xff] %v609
                %v611 = vld [vmem:[%s525 + $0x250] sm:$0xff]
                %612 = vst [vmem:[%s526 + $0x150] sm:$0xff] %v611
                %v613 = vld [vmem:[%s525 + $0x258] sm:$0xff]
                %614 = vst [vmem:[%s526 + $0x158] sm:$0xff] %v613
                %v615 = vld [vmem:[%s525 + $0x260] sm:$0xff]
                %616 = vst [vmem:[%s526 + $0x160] sm:$0xff] %v615
                %v617 = vld [vmem:[%s525 + $0x268] sm:$0xff]
                %618 = vst [vmem:[%s526 + $0x168] sm:$0xff] %v617
                %v619 = vld [vmem:[%s525 + $0x270] sm:$0xff]
                %620 = vst [vmem:[%s526 + $0x170] sm:$0xff] %v619
                %v621 = vld [vmem:[%s525 + $0x278] sm:$0xff]
                %622 = vst [vmem:[%s526 + $0x178] sm:$0xff] %v621
                %v623 = vld [vmem:[%s525 + $0x300] sm:$0xff]
                %624 = vst [vmem:[%s526 + $0x180] sm:$0xff] %v623
                %v625 = vld [vmem:[%s525 + $0x308] sm:$0xff]
                %626 = vst [vmem:[%s526 + $0x188] sm:$0xff] %v625
                %v627 = vld [vmem:[%s525 + $0x310] sm:$0xff]
                %628 = vst [vmem:[%s526 + $0x190] sm:$0xff] %v627
                %v629 = vld [vmem:[%s525 + $0x318] sm:$0xff]
                %630 = vst [vmem:[%s526 + $0x198] sm:$0xff] %v629
                %v631 = vld [vmem:[%s525 + $0x320] sm:$0xff]
                %632 = vst [vmem:[%s526 + $0x1a0] sm:$0xff] %v631
                %v633 = vld [vmem:[%s525 + $0x328] sm:$0xff]
                %634 = vst [vmem:[%s526 + $0x1a8] sm:$0xff] %v633
                %v635 = vld [vmem:[%s525 + $0x330] sm:$0xff]
                %636 = vst [vmem:[%s526 + $0x1b0] sm:$0xff] %v635
                %v637 = vld [vmem:[%s525 + $0x338] sm:$0xff]
                %638 = vst [vmem:[%s526 + $0x1b8] sm:$0xff] %v637
                %v639 = vld [vmem:[%s525 + $0x340] sm:$0xff]
                %640 = vst [vmem:[%s526 + $0x1c0] sm:$0xff] %v639
                %v641 = vld [vmem:[%s525 + $0x348] sm:$0xff]
                %642 = vst [vmem:[%s526 + $0x1c8] sm:$0xff] %v641
                %v643 = vld [vmem:[%s525 + $0x350] sm:$0xff]
                %644 = vst [vmem:[%s526 + $0x1d0] sm:$0xff] %v643
                %v645 = vld [vmem:[%s525 + $0x358] sm:$0xff]
                %646 = vst [vmem:[%s526 + $0x1d8] sm:$0xff] %v645
                %v647 = vld [vmem:[%s525 + $0x360] sm:$0xff]
                %648 = vst [vmem:[%s526 + $0x1e0] sm:$0xff] %v647
                %v649 = vld [vmem:[%s525 + $0x368] sm:$0xff]
                %650 = vst [vmem:[%s526 + $0x1e8] sm:$0xff] %v649
                %v651 = vld [vmem:[%s525 + $0x370] sm:$0xff]
                %652 = vst [vmem:[%s526 + $0x1f0] sm:$0xff] %v651
                %v653 = vld [vmem:[%s525 + $0x378] sm:$0xff]
                %654 = vst [vmem:[%s526 + $0x1f8] sm:$0xff] %v653
              $region75: #{tpu_custom_call.1} parent=69 // loop_footer
                %s524 = sadd.s32 1, %s520
              $region76: #{tpu_custom_call.1} parent=69 // loop_footer_branch
                %519 = sbr.rel target = $region72
              $region77: #{tpu_custom_call.1} parent=69 // loop_exit
                _
            $region70: #{tpu_custom_call.1} parent=61 // pred_fallthru
              _
          $region62: #{tpu_custom_call.1} parent=57 // pred_fallthru
            _
          %795 = vnop
        $region58: #{tpu_custom_call.1} parent=15 // pred_fallthru
          _
        // Predicated region
        $region93: #{tpu_custom_call.1} parent=15 // pred_check
          %p796 = pneg %p118
        $region94: #{tpu_custom_call.1} parent=15 // pred_check_branch
          %798 = sbr.rel (%p796) target = $region96
        $region95: #{tpu_custom_call.1} parent=15 // pred_region
          %s799 = sand.u32 %s108, 1
          %s800 = sand.u32 %s108, 1
          %s801 = smul.addr %s800, 512
          %s802 = scalar_lea.vmem [#allocation8], %s801
          %s803 = smul.u32 %s29, 2
          %s804 = sadd.s32 %s803, %s30
          %s805 = sld [smem:[#allocation5 + %s804]]
          %s806 = smul.u32 16, %s805
          %s807 = smul.addr %s806, 8
          %s808 = scalar_lea.vmem %s4, %s807
          // Predicated region
          $region97: #{tpu_custom_call.1} parent=95 // pred_check
            _
          $region98: #{tpu_custom_call.1} parent=95 // pred_check_branch
            %810 = sbr.rel (0) target = $region100
          $region99: #{tpu_custom_call.1} parent=95 // pred_region
            // Predicated region
            $region101: #{tpu_custom_call.1} parent=99 // pred_check
              _
            $region102: #{tpu_custom_call.1} parent=99 // pred_check_branch
              %812 = sbr.rel (0) target = $region104
            $region103: #{tpu_custom_call.1} parent=99 // pred_region
              // Predicated region
              $region116: #{tpu_custom_call.1} parent=103 // pred_check
                _
              $region117: #{tpu_custom_call.1} parent=103 // pred_check_branch
                %953 = sbr.rel (0) target = $region119
              $region118: #{tpu_custom_call.1} parent=103 // pred_region
                loop: start=0, step=1, limit=1
                $region120: #{tpu_custom_call.1} parent=118 // loop_pre_header
                  _
                $region121: #{tpu_custom_call.1} parent=118 // loop_header
                  %s955 = sphi 0, %s959
                  %p956 = scmp.ge.s32.totalorder %s955, 1
                  %s960 = sphi %s808, %s808
                  %s961 = sphi %s802, %s802
                $region122: #{tpu_custom_call.1} parent=118 // loop_header_branch
                  %958 = sbr.rel (%p956) target = $region126
                $region123: #{tpu_custom_call.1} parent=118 // loop_body
                  %v962 = vld [vmem:[%s960] sm:$0xff]
                  %963 = vst [vmem:[%s961] sm:$0xff] %v962
                  %v964 = vld [vmem:[%s960 + $0x8] sm:$0xff]
                  %965 = vst [vmem:[%s961 + $0x8] sm:$0xff] %v964
                  %v966 = vld [vmem:[%s960 + $0x10] sm:$0xff]
                  %967 = vst [vmem:[%s961 + $0x10] sm:$0xff] %v966
                  %v968 = vld [vmem:[%s960 + $0x18] sm:$0xff]
                  %969 = vst [vmem:[%s961 + $0x18] sm:$0xff] %v968
                  %v970 = vld [vmem:[%s960 + $0x20] sm:$0xff]
                  %971 = vst [vmem:[%s961 + $0x20] sm:$0xff] %v970
                  %v972 = vld [vmem:[%s960 + $0x28] sm:$0xff]
                  %973 = vst [vmem:[%s961 + $0x28] sm:$0xff] %v972
                  %v974 = vld [vmem:[%s960 + $0x30] sm:$0xff]
                  %975 = vst [vmem:[%s961 + $0x30] sm:$0xff] %v974
                  %v976 = vld [vmem:[%s960 + $0x38] sm:$0xff]
                  %977 = vst [vmem:[%s961 + $0x38] sm:$0xff] %v976
                  %v978 = vld [vmem:[%s960 + $0x40] sm:$0xff]
                  %979 = vst [vmem:[%s961 + $0x40] sm:$0xff] %v978
                  %v980 = vld [vmem:[%s960 + $0x48] sm:$0xff]
                  %981 = vst [vmem:[%s961 + $0x48] sm:$0xff] %v980
                  %v982 = vld [vmem:[%s960 + $0x50] sm:$0xff]
                  %983 = vst [vmem:[%s961 + $0x50] sm:$0xff] %v982
                  %v984 = vld [vmem:[%s960 + $0x58] sm:$0xff]
                  %985 = vst [vmem:[%s961 + $0x58] sm:$0xff] %v984
                  %v986 = vld [vmem:[%s960 + $0x60] sm:$0xff]
                  %987 = vst [vmem:[%s961 + $0x60] sm:$0xff] %v986
                  %v988 = vld [vmem:[%s960 + $0x68] sm:$0xff]
                  %989 = vst [vmem:[%s961 + $0x68] sm:$0xff] %v988
                  %v990 = vld [vmem:[%s960 + $0x70] sm:$0xff]
                  %991 = vst [vmem:[%s961 + $0x70] sm:$0xff] %v990
                  %v992 = vld [vmem:[%s960 + $0x78] sm:$0xff]
                  %993 = vst [vmem:[%s961 + $0x78] sm:$0xff] %v992
                  %v994 = vld [vmem:[%s960 + $0x100] sm:$0xff]
                  %995 = vst [vmem:[%s961 + $0x80] sm:$0xff] %v994
                  %v996 = vld [vmem:[%s960 + $0x108] sm:$0xff]
                  %997 = vst [vmem:[%s961 + $0x88] sm:$0xff] %v996
                  %v998 = vld [vmem:[%s960 + $0x110] sm:$0xff]
                  %999 = vst [vmem:[%s961 + $0x90] sm:$0xff] %v998
                  %v1000 = vld [vmem:[%s960 + $0x118] sm:$0xff]
                  %1001 = vst [vmem:[%s961 + $0x98] sm:$0xff] %v1000
                  %v1002 = vld [vmem:[%s960 + $0x120] sm:$0xff]
                  %1003 = vst [vmem:[%s961 + $0xa0] sm:$0xff] %v1002
                  %v1004 = vld [vmem:[%s960 + $0x128] sm:$0xff]
                  %1005 = vst [vmem:[%s961 + $0xa8] sm:$0xff] %v1004
                  %v1006 = vld [vmem:[%s960 + $0x130] sm:$0xff]
                  %1007 = vst [vmem:[%s961 + $0xb0] sm:$0xff] %v1006
                  %v1008 = vld [vmem:[%s960 + $0x138] sm:$0xff]
                  %1009 = vst [vmem:[%s961 + $0xb8] sm:$0xff] %v1008
                  %v1010 = vld [vmem:[%s960 + $0x140] sm:$0xff]
                  %1011 = vst [vmem:[%s961 + $0xc0] sm:$0xff] %v1010
                  %v1012 = vld [vmem:[%s960 + $0x148] sm:$0xff]
                  %1013 = vst [vmem:[%s961 + $0xc8] sm:$0xff] %v1012
                  %v1014 = vld [vmem:[%s960 + $0x150] sm:$0xff]
                  %1015 = vst [vmem:[%s961 + $0xd0] sm:$0xff] %v1014
                  %v1016 = vld [vmem:[%s960 + $0x158] sm:$0xff]
                  %1017 = vst [vmem:[%s961 + $0xd8] sm:$0xff] %v1016
                  %v1018 = vld [vmem:[%s960 + $0x160] sm:$0xff]
                  %1019 = vst [vmem:[%s961 + $0xe0] sm:$0xff] %v1018
                  %v1020 = vld [vmem:[%s960 + $0x168] sm:$0xff]
                  %1021 = vst [vmem:[%s961 + $0xe8] sm:$0xff] %v1020
                  %v1022 = vld [vmem:[%s960 + $0x170] sm:$0xff]
                  %1023 = vst [vmem:[%s961 + $0xf0] sm:$0xff] %v1022
                  %v1024 = vld [vmem:[%s960 + $0x178] sm:$0xff]
                  %1025 = vst [vmem:[%s961 + $0xf8] sm:$0xff] %v1024
                  %v1026 = vld [vmem:[%s960 + $0x200] sm:$0xff]
                  %1027 = vst [vmem:[%s961 + $0x100] sm:$0xff] %v1026
                  %v1028 = vld [vmem:[%s960 + $0x208] sm:$0xff]
                  %1029 = vst [vmem:[%s961 + $0x108] sm:$0xff] %v1028
                  %v1030 = vld [vmem:[%s960 + $0x210] sm:$0xff]
                  %1031 = vst [vmem:[%s961 + $0x110] sm:$0xff] %v1030
                  %v1032 = vld [vmem:[%s960 + $0x218] sm:$0xff]
                  %1033 = vst [vmem:[%s961 + $0x118] sm:$0xff] %v1032
                  %v1034 = vld [vmem:[%s960 + $0x220] sm:$0xff]
                  %1035 = vst [vmem:[%s961 + $0x120] sm:$0xff] %v1034
                  %v1036 = vld [vmem:[%s960 + $0x228] sm:$0xff]
                  %1037 = vst [vmem:[%s961 + $0x128] sm:$0xff] %v1036
                  %v1038 = vld [vmem:[%s960 + $0x230] sm:$0xff]
                  %1039 = vst [vmem:[%s961 + $0x130] sm:$0xff] %v1038
                  %v1040 = vld [vmem:[%s960 + $0x238] sm:$0xff]
                  %1041 = vst [vmem:[%s961 + $0x138] sm:$0xff] %v1040
                  %v1042 = vld [vmem:[%s960 + $0x240] sm:$0xff]
                  %1043 = vst [vmem:[%s961 + $0x140] sm:$0xff] %v1042
                  %v1044 = vld [vmem:[%s960 + $0x248] sm:$0xff]
                  %1045 = vst [vmem:[%s961 + $0x148] sm:$0xff] %v1044
                  %v1046 = vld [vmem:[%s960 + $0x250] sm:$0xff]
                  %1047 = vst [vmem:[%s961 + $0x150] sm:$0xff] %v1046
                  %v1048 = vld [vmem:[%s960 + $0x258] sm:$0xff]
                  %1049 = vst [vmem:[%s961 + $0x158] sm:$0xff] %v1048
                  %v1050 = vld [vmem:[%s960 + $0x260] sm:$0xff]
                  %1051 = vst [vmem:[%s961 + $0x160] sm:$0xff] %v1050
                  %v1052 = vld [vmem:[%s960 + $0x268] sm:$0xff]
                  %1053 = vst [vmem:[%s961 + $0x168] sm:$0xff] %v1052
                  %v1054 = vld [vmem:[%s960 + $0x270] sm:$0xff]
                  %1055 = vst [vmem:[%s961 + $0x170] sm:$0xff] %v1054
                  %v1056 = vld [vmem:[%s960 + $0x278] sm:$0xff]
                  %1057 = vst [vmem:[%s961 + $0x178] sm:$0xff] %v1056
                  %v1058 = vld [vmem:[%s960 + $0x300] sm:$0xff]
                  %1059 = vst [vmem:[%s961 + $0x180] sm:$0xff] %v1058
                  %v1060 = vld [vmem:[%s960 + $0x308] sm:$0xff]
                  %1061 = vst [vmem:[%s961 + $0x188] sm:$0xff] %v1060
                  %v1062 = vld [vmem:[%s960 + $0x310] sm:$0xff]
                  %1063 = vst [vmem:[%s961 + $0x190] sm:$0xff] %v1062
                  %v1064 = vld [vmem:[%s960 + $0x318] sm:$0xff]
                  %1065 = vst [vmem:[%s961 + $0x198] sm:$0xff] %v1064
                  %v1066 = vld [vmem:[%s960 + $0x320] sm:$0xff]
                  %1067 = vst [vmem:[%s961 + $0x1a0] sm:$0xff] %v1066
                  %v1068 = vld [vmem:[%s960 + $0x328] sm:$0xff]
                  %1069 = vst [vmem:[%s961 + $0x1a8] sm:$0xff] %v1068
                  %v1070 = vld [vmem:[%s960 + $0x330] sm:$0xff]
                  %1071 = vst [vmem:[%s961 + $0x1b0] sm:$0xff] %v1070
                  %v1072 = vld [vmem:[%s960 + $0x338] sm:$0xff]
                  %1073 = vst [vmem:[%s961 + $0x1b8] sm:$0xff] %v1072
                  %v1074 = vld [vmem:[%s960 + $0x340] sm:$0xff]
                  %1075 = vst [vmem:[%s961 + $0x1c0] sm:$0xff] %v1074
                  %v1076 = vld [vmem:[%s960 + $0x348] sm:$0xff]
                  %1077 = vst [vmem:[%s961 + $0x1c8] sm:$0xff] %v1076
                  %v1078 = vld [vmem:[%s960 + $0x350] sm:$0xff]
                  %1079 = vst [vmem:[%s961 + $0x1d0] sm:$0xff] %v1078
                  %v1080 = vld [vmem:[%s960 + $0x358] sm:$0xff]
                  %1081 = vst [vmem:[%s961 + $0x1d8] sm:$0xff] %v1080
                  %v1082 = vld [vmem:[%s960 + $0x360] sm:$0xff]
                  %1083 = vst [vmem:[%s961 + $0x1e0] sm:$0xff] %v1082
                  %v1084 = vld [vmem:[%s960 + $0x368] sm:$0xff]
                  %1085 = vst [vmem:[%s961 + $0x1e8] sm:$0xff] %v1084
                  %v1086 = vld [vmem:[%s960 + $0x370] sm:$0xff]
                  %1087 = vst [vmem:[%s961 + $0x1f0] sm:$0xff] %v1086
                  %v1088 = vld [vmem:[%s960 + $0x378] sm:$0xff]
                  %1089 = vst [vmem:[%s961 + $0x1f8] sm:$0xff] %v1088
                $region124: #{tpu_custom_call.1} parent=118 // loop_footer
                  %s959 = sadd.s32 1, %s955
                $region125: #{tpu_custom_call.1} parent=118 // loop_footer_branch
                  %954 = sbr.rel target = $region121
                $region126: #{tpu_custom_call.1} parent=118 // loop_exit
                  _
              $region119: #{tpu_custom_call.1} parent=103 // pred_fallthru
                _
              // Predicated region
              $region127: #{tpu_custom_call.1} parent=103 // pred_check
                _
              $region128: #{tpu_custom_call.1} parent=103 // pred_check_branch
                %1091 = sbr.rel target = $region130
              $region129: #{tpu_custom_call.1} parent=103 // pred_region
                _
              $region130: #{tpu_custom_call.1} parent=103 // pred_fallthru
                _
            $region104: #{tpu_custom_call.1} parent=99 // pred_fallthru
              _
            // Predicated region
            $region105: #{tpu_custom_call.1} parent=99 // pred_check
              _
            $region106: #{tpu_custom_call.1} parent=99 // pred_check_branch
              %814 = sbr.rel target = $region108
            $region107: #{tpu_custom_call.1} parent=99 // pred_region
              loop: start=0, step=1, limit=1
              $region109: #{tpu_custom_call.1} parent=107 // loop_pre_header
                _
              $region110: #{tpu_custom_call.1} parent=107 // loop_header
                %s817 = sphi 0, %s821
                %p818 = scmp.ge.s32.totalorder %s817, 1
                %s822 = sphi %s808, %s808
                %s823 = sphi %s802, %s802
              $region111: #{tpu_custom_call.1} parent=107 // loop_header_branch
                %820 = sbr.rel (%p818) target = $region115
              $region112: #{tpu_custom_call.1} parent=107 // loop_body
                %v824 = vld [vmem:[%s822] sm:$0xff]
                %825 = vst [vmem:[%s823] sm:$0xff] %v824
                %v826 = vld [vmem:[%s822 + $0x8] sm:$0xff]
                %827 = vst [vmem:[%s823 + $0x8] sm:$0xff] %v826
                %v828 = vld [vmem:[%s822 + $0x10] sm:$0xff]
                %829 = vst [vmem:[%s823 + $0x10] sm:$0xff] %v828
                %v830 = vld [vmem:[%s822 + $0x18] sm:$0xff]
                %831 = vst [vmem:[%s823 + $0x18] sm:$0xff] %v830
                %v832 = vld [vmem:[%s822 + $0x20] sm:$0xff]
                %833 = vst [vmem:[%s823 + $0x20] sm:$0xff] %v832
                %v834 = vld [vmem:[%s822 + $0x28] sm:$0xff]
                %835 = vst [vmem:[%s823 + $0x28] sm:$0xff] %v834
                %v836 = vld [vmem:[%s822 + $0x30] sm:$0xff]
                %837 = vst [vmem:[%s823 + $0x30] sm:$0xff] %v836
                %v838 = vld [vmem:[%s822 + $0x38] sm:$0xff]
                %839 = vst [vmem:[%s823 + $0x38] sm:$0xff] %v838
                %v840 = vld [vmem:[%s822 + $0x40] sm:$0xff]
                %841 = vst [vmem:[%s823 + $0x40] sm:$0xff] %v840
                %v842 = vld [vmem:[%s822 + $0x48] sm:$0xff]
                %843 = vst [vmem:[%s823 + $0x48] sm:$0xff] %v842
                %v844 = vld [vmem:[%s822 + $0x50] sm:$0xff]
                %845 = vst [vmem:[%s823 + $0x50] sm:$0xff] %v844
                %v846 = vld [vmem:[%s822 + $0x58] sm:$0xff]
                %847 = vst [vmem:[%s823 + $0x58] sm:$0xff] %v846
                %v848 = vld [vmem:[%s822 + $0x60] sm:$0xff]
                %849 = vst [vmem:[%s823 + $0x60] sm:$0xff] %v848
                %v850 = vld [vmem:[%s822 + $0x68] sm:$0xff]
                %851 = vst [vmem:[%s823 + $0x68] sm:$0xff] %v850
                %v852 = vld [vmem:[%s822 + $0x70] sm:$0xff]
                %853 = vst [vmem:[%s823 + $0x70] sm:$0xff] %v852
                %v854 = vld [vmem:[%s822 + $0x78] sm:$0xff]
                %855 = vst [vmem:[%s823 + $0x78] sm:$0xff] %v854
                %v856 = vld [vmem:[%s822 + $0x100] sm:$0xff]
                %857 = vst [vmem:[%s823 + $0x80] sm:$0xff] %v856
                %v858 = vld [vmem:[%s822 + $0x108] sm:$0xff]
                %859 = vst [vmem:[%s823 + $0x88] sm:$0xff] %v858
                %v860 = vld [vmem:[%s822 + $0x110] sm:$0xff]
                %861 = vst [vmem:[%s823 + $0x90] sm:$0xff] %v860
                %v862 = vld [vmem:[%s822 + $0x118] sm:$0xff]
                %863 = vst [vmem:[%s823 + $0x98] sm:$0xff] %v862
                %v864 = vld [vmem:[%s822 + $0x120] sm:$0xff]
                %865 = vst [vmem:[%s823 + $0xa0] sm:$0xff] %v864
                %v866 = vld [vmem:[%s822 + $0x128] sm:$0xff]
                %867 = vst [vmem:[%s823 + $0xa8] sm:$0xff] %v866
                %v868 = vld [vmem:[%s822 + $0x130] sm:$0xff]
                %869 = vst [vmem:[%s823 + $0xb0] sm:$0xff] %v868
                %v870 = vld [vmem:[%s822 + $0x138] sm:$0xff]
                %871 = vst [vmem:[%s823 + $0xb8] sm:$0xff] %v870
                %v872 = vld [vmem:[%s822 + $0x140] sm:$0xff]
                %873 = vst [vmem:[%s823 + $0xc0] sm:$0xff] %v872
                %v874 = vld [vmem:[%s822 + $0x148] sm:$0xff]
                %875 = vst [vmem:[%s823 + $0xc8] sm:$0xff] %v874
                %v876 = vld [vmem:[%s822 + $0x150] sm:$0xff]
                %877 = vst [vmem:[%s823 + $0xd0] sm:$0xff] %v876
                %v878 = vld [vmem:[%s822 + $0x158] sm:$0xff]
                %879 = vst [vmem:[%s823 + $0xd8] sm:$0xff] %v878
                %v880 = vld [vmem:[%s822 + $0x160] sm:$0xff]
                %881 = vst [vmem:[%s823 + $0xe0] sm:$0xff] %v880
                %v882 = vld [vmem:[%s822 + $0x168] sm:$0xff]
                %883 = vst [vmem:[%s823 + $0xe8] sm:$0xff] %v882
                %v884 = vld [vmem:[%s822 + $0x170] sm:$0xff]
                %885 = vst [vmem:[%s823 + $0xf0] sm:$0xff] %v884
                %v886 = vld [vmem:[%s822 + $0x178] sm:$0xff]
                %887 = vst [vmem:[%s823 + $0xf8] sm:$0xff] %v886
                %v888 = vld [vmem:[%s822 + $0x200] sm:$0xff]
                %889 = vst [vmem:[%s823 + $0x100] sm:$0xff] %v888
                %v890 = vld [vmem:[%s822 + $0x208] sm:$0xff]
                %891 = vst [vmem:[%s823 + $0x108] sm:$0xff] %v890
                %v892 = vld [vmem:[%s822 + $0x210] sm:$0xff]
                %893 = vst [vmem:[%s823 + $0x110] sm:$0xff] %v892
                %v894 = vld [vmem:[%s822 + $0x218] sm:$0xff]
                %895 = vst [vmem:[%s823 + $0x118] sm:$0xff] %v894
                %v896 = vld [vmem:[%s822 + $0x220] sm:$0xff]
                %897 = vst [vmem:[%s823 + $0x120] sm:$0xff] %v896
                %v898 = vld [vmem:[%s822 + $0x228] sm:$0xff]
                %899 = vst [vmem:[%s823 + $0x128] sm:$0xff] %v898
                %v900 = vld [vmem:[%s822 + $0x230] sm:$0xff]
                %901 = vst [vmem:[%s823 + $0x130] sm:$0xff] %v900
                %v902 = vld [vmem:[%s822 + $0x238] sm:$0xff]
                %903 = vst [vmem:[%s823 + $0x138] sm:$0xff] %v902
                %v904 = vld [vmem:[%s822 + $0x240] sm:$0xff]
                %905 = vst [vmem:[%s823 + $0x140] sm:$0xff] %v904
                %v906 = vld [vmem:[%s822 + $0x248] sm:$0xff]
                %907 = vst [vmem:[%s823 + $0x148] sm:$0xff] %v906
                %v908 = vld [vmem:[%s822 + $0x250] sm:$0xff]
                %909 = vst [vmem:[%s823 + $0x150] sm:$0xff] %v908
                %v910 = vld [vmem:[%s822 + $0x258] sm:$0xff]
                %911 = vst [vmem:[%s823 + $0x158] sm:$0xff] %v910
                %v912 = vld [vmem:[%s822 + $0x260] sm:$0xff]
                %913 = vst [vmem:[%s823 + $0x160] sm:$0xff] %v912
                %v914 = vld [vmem:[%s822 + $0x268] sm:$0xff]
                %915 = vst [vmem:[%s823 + $0x168] sm:$0xff] %v914
                %v916 = vld [vmem:[%s822 + $0x270] sm:$0xff]
                %917 = vst [vmem:[%s823 + $0x170] sm:$0xff] %v916
                %v918 = vld [vmem:[%s822 + $0x278] sm:$0xff]
                %919 = vst [vmem:[%s823 + $0x178] sm:$0xff] %v918
                %v920 = vld [vmem:[%s822 + $0x300] sm:$0xff]
                %921 = vst [vmem:[%s823 + $0x180] sm:$0xff] %v920
                %v922 = vld [vmem:[%s822 + $0x308] sm:$0xff]
                %923 = vst [vmem:[%s823 + $0x188] sm:$0xff] %v922
                %v924 = vld [vmem:[%s822 + $0x310] sm:$0xff]
                %925 = vst [vmem:[%s823 + $0x190] sm:$0xff] %v924
                %v926 = vld [vmem:[%s822 + $0x318] sm:$0xff]
                %927 = vst [vmem:[%s823 + $0x198] sm:$0xff] %v926
                %v928 = vld [vmem:[%s822 + $0x320] sm:$0xff]
                %929 = vst [vmem:[%s823 + $0x1a0] sm:$0xff] %v928
                %v930 = vld [vmem:[%s822 + $0x328] sm:$0xff]
                %931 = vst [vmem:[%s823 + $0x1a8] sm:$0xff] %v930
                %v932 = vld [vmem:[%s822 + $0x330] sm:$0xff]
                %933 = vst [vmem:[%s823 + $0x1b0] sm:$0xff] %v932
                %v934 = vld [vmem:[%s822 + $0x338] sm:$0xff]
                %935 = vst [vmem:[%s823 + $0x1b8] sm:$0xff] %v934
                %v936 = vld [vmem:[%s822 + $0x340] sm:$0xff]
                %937 = vst [vmem:[%s823 + $0x1c0] sm:$0xff] %v936
                %v938 = vld [vmem:[%s822 + $0x348] sm:$0xff]
                %939 = vst [vmem:[%s823 + $0x1c8] sm:$0xff] %v938
                %v940 = vld [vmem:[%s822 + $0x350] sm:$0xff]
                %941 = vst [vmem:[%s823 + $0x1d0] sm:$0xff] %v940
                %v942 = vld [vmem:[%s822 + $0x358] sm:$0xff]
                %943 = vst [vmem:[%s823 + $0x1d8] sm:$0xff] %v942
                %v944 = vld [vmem:[%s822 + $0x360] sm:$0xff]
                %945 = vst [vmem:[%s823 + $0x1e0] sm:$0xff] %v944
                %v946 = vld [vmem:[%s822 + $0x368] sm:$0xff]
                %947 = vst [vmem:[%s823 + $0x1e8] sm:$0xff] %v946
                %v948 = vld [vmem:[%s822 + $0x370] sm:$0xff]
                %949 = vst [vmem:[%s823 + $0x1f0] sm:$0xff] %v948
                %v950 = vld [vmem:[%s822 + $0x378] sm:$0xff]
                %951 = vst [vmem:[%s823 + $0x1f8] sm:$0xff] %v950
              $region113: #{tpu_custom_call.1} parent=107 // loop_footer
                %s821 = sadd.s32 1, %s817
              $region114: #{tpu_custom_call.1} parent=107 // loop_footer_branch
                %816 = sbr.rel target = $region110
              $region115: #{tpu_custom_call.1} parent=107 // loop_exit
                _
            $region108: #{tpu_custom_call.1} parent=99 // pred_fallthru
              _
          $region100: #{tpu_custom_call.1} parent=95 // pred_fallthru
            _
          %1092 = vnop
        $region96: #{tpu_custom_call.1} parent=15 // pred_fallthru
          _
        // Predicated region
        $region131: #{tpu_custom_call.1} parent=15 // pred_check
          %p1093 = pneg %p154
        $region132: #{tpu_custom_call.1} parent=15 // pred_check_branch
          %1095 = sbr.rel (%p1093) target = $region134
        $region133: #{tpu_custom_call.1} parent=15 // pred_region
          %s1096 = sand.u32 %s144, 1
          %s1097 = sand.u32 %s144, 1
          %s1098 = smul.addr %s1097, 64
          %s1099 = scalar_lea.vmem [#allocation9], %s1098
          %s1100 = smul.u32 %s29, 2
          %s1101 = sadd.s32 %s1100, %s30
          %s1102 = sld [smem:[#allocation4 + %s1101]]
          %s1103 = sld [smem:[#allocation5 + %s1101]]
          %s1104 = smul.u32 16, %s1102
          %s1105 = smul.addr %s1104, 2
          %s1106 = sadd.s32 %s1103, %s1105
          %s1107 = smul.addr %s1106, 4
          %s1108 = scalar_lea.vmem %s5, %s1107
          // Predicated region
          $region135: #{tpu_custom_call.1} parent=133 // pred_check
            _
          $region136: #{tpu_custom_call.1} parent=133 // pred_check_branch
            %1110 = sbr.rel (0) target = $region138
          $region137: #{tpu_custom_call.1} parent=133 // pred_region
            // Predicated region
            $region139: #{tpu_custom_call.1} parent=137 // pred_check
              _
            $region140: #{tpu_custom_call.1} parent=137 // pred_check_branch
              %1112 = sbr.rel target = $region142
            $region141: #{tpu_custom_call.1} parent=137 // pred_region
              // Predicated region
              $region154: #{tpu_custom_call.1} parent=141 // pred_check
                _
              $region155: #{tpu_custom_call.1} parent=141 // pred_check_branch
                %1157 = sbr.rel (0) target = $region157
              $region156: #{tpu_custom_call.1} parent=141 // pred_region
                loop: start=0, step=1, limit=1
                $region158: #{tpu_custom_call.1} parent=156 // loop_pre_header
                  _
                $region159: #{tpu_custom_call.1} parent=156 // loop_header
                  %s1159 = sphi 0, %s1163
                  %p1160 = scmp.ge.s32.totalorder %s1159, 1
                  %s1164 = sphi %s1108, %s1108
                  %s1165 = sphi %s1099, %s1099
                $region160: #{tpu_custom_call.1} parent=156 // loop_header_branch
                  %1162 = sbr.rel (%p1160) target = $region164
                $region161: #{tpu_custom_call.1} parent=156 // loop_body
                  _
                $region162: #{tpu_custom_call.1} parent=156 // loop_footer
                  %s1163 = sadd.s32 1, %s1159
                $region163: #{tpu_custom_call.1} parent=156 // loop_footer_branch
                  %1158 = sbr.rel target = $region159
                $region164: #{tpu_custom_call.1} parent=156 // loop_exit
                  _
                loop: start=0, step=1, limit=1
                $region165: #{tpu_custom_call.1} parent=156 // loop_pre_header
                  _
                $region166: #{tpu_custom_call.1} parent=156 // loop_header
                  %s1168 = sphi 0, %s1172
                  %p1169 = scmp.ge.s32.totalorder %s1168, 1
                  %s1173 = sphi %s1108, %s1108
                  %s1174 = sphi %s1099, %s1099
                $region167: #{tpu_custom_call.1} parent=156 // loop_header_branch
                  %1171 = sbr.rel (%p1169) target = $region171
                $region168: #{tpu_custom_call.1} parent=156 // loop_body
                  %v1175 = vld [vmem:[%s1173] sm:$0xf]
                  %1176 = vst [vmem:[%s1174] sm:$0xf] %v1175
                  %v1177 = vld [vmem:[%s1173 + $0x8] sm:$0xf]
                  %1178 = vst [vmem:[%s1174 + $0x4] sm:$0xf] %v1177
                  %v1179 = vld [vmem:[%s1173 + $0x10] sm:$0xf]
                  %1180 = vst [vmem:[%s1174 + $0x8] sm:$0xf] %v1179
                  %v1181 = vld [vmem:[%s1173 + $0x18] sm:$0xf]
                  %1182 = vst [vmem:[%s1174 + $0xc] sm:$0xf] %v1181
                  %v1183 = vld [vmem:[%s1173 + $0x20] sm:$0xf]
                  %1184 = vst [vmem:[%s1174 + $0x10] sm:$0xf] %v1183
                  %v1185 = vld [vmem:[%s1173 + $0x28] sm:$0xf]
                  %1186 = vst [vmem:[%s1174 + $0x14] sm:$0xf] %v1185
                  %v1187 = vld [vmem:[%s1173 + $0x30] sm:$0xf]
                  %1188 = vst [vmem:[%s1174 + $0x18] sm:$0xf] %v1187
                  %v1189 = vld [vmem:[%s1173 + $0x38] sm:$0xf]
                  %1190 = vst [vmem:[%s1174 + $0x1c] sm:$0xf] %v1189
                  %v1191 = vld [vmem:[%s1173 + $0x40] sm:$0xf]
                  %1192 = vst [vmem:[%s1174 + $0x20] sm:$0xf] %v1191
                  %v1193 = vld [vmem:[%s1173 + $0x48] sm:$0xf]
                  %1194 = vst [vmem:[%s1174 + $0x24] sm:$0xf] %v1193
                  %v1195 = vld [vmem:[%s1173 + $0x50] sm:$0xf]
                  %1196 = vst [vmem:[%s1174 + $0x28] sm:$0xf] %v1195
                  %v1197 = vld [vmem:[%s1173 + $0x58] sm:$0xf]
                  %1198 = vst [vmem:[%s1174 + $0x2c] sm:$0xf] %v1197
                  %v1199 = vld [vmem:[%s1173 + $0x60] sm:$0xf]
                  %1200 = vst [vmem:[%s1174 + $0x30] sm:$0xf] %v1199
                  %v1201 = vld [vmem:[%s1173 + $0x68] sm:$0xf]
                  %1202 = vst [vmem:[%s1174 + $0x34] sm:$0xf] %v1201
                  %v1203 = vld [vmem:[%s1173 + $0x70] sm:$0xf]
                  %1204 = vst [vmem:[%s1174 + $0x38] sm:$0xf] %v1203
                  %v1205 = vld [vmem:[%s1173 + $0x78] sm:$0xf]
                  %1206 = vst [vmem:[%s1174 + $0x3c] sm:$0xf] %v1205
                $region169: #{tpu_custom_call.1} parent=156 // loop_footer
                  %s1172 = sadd.s32 1, %s1168
                $region170: #{tpu_custom_call.1} parent=156 // loop_footer_branch
                  %1167 = sbr.rel target = $region166
                $region171: #{tpu_custom_call.1} parent=156 // loop_exit
                  _
              $region157: #{tpu_custom_call.1} parent=141 // pred_fallthru
                _
            $region142: #{tpu_custom_call.1} parent=137 // pred_fallthru
              _
            // Predicated region
            $region143: #{tpu_custom_call.1} parent=137 // pred_check
              _
            $region144: #{tpu_custom_call.1} parent=137 // pred_check_branch
              %1114 = sbr.rel (0) target = $region146
            $region145: #{tpu_custom_call.1} parent=137 // pred_region
              loop: start=0, step=1, limit=1
              $region147: #{tpu_custom_call.1} parent=145 // loop_pre_header
                _
              $region148: #{tpu_custom_call.1} parent=145 // loop_header
                %s1117 = sphi 0, %s1121
                %p1118 = scmp.ge.s32.totalorder %s1117, 1
                %s1122 = sphi %s1108, %s1108
                %s1123 = sphi %s1099, %s1099
              $region149: #{tpu_custom_call.1} parent=145 // loop_header_branch
                %1120 = sbr.rel (%p1118) target = $region153
              $region150: #{tpu_custom_call.1} parent=145 // loop_body
                %v1124 = vld [vmem:[%s1122] sm:$0xf]
                %1125 = vst [vmem:[%s1123] sm:$0xf] %v1124
                %v1126 = vld [vmem:[%s1122 + $0x8] sm:$0xf]
                %1127 = vst [vmem:[%s1123 + $0x4] sm:$0xf] %v1126
                %v1128 = vld [vmem:[%s1122 + $0x10] sm:$0xf]
                %1129 = vst [vmem:[%s1123 + $0x8] sm:$0xf] %v1128
                %v1130 = vld [vmem:[%s1122 + $0x18] sm:$0xf]
                %1131 = vst [vmem:[%s1123 + $0xc] sm:$0xf] %v1130
                %v1132 = vld [vmem:[%s1122 + $0x20] sm:$0xf]
                %1133 = vst [vmem:[%s1123 + $0x10] sm:$0xf] %v1132
                %v1134 = vld [vmem:[%s1122 + $0x28] sm:$0xf]
                %1135 = vst [vmem:[%s1123 + $0x14] sm:$0xf] %v1134
                %v1136 = vld [vmem:[%s1122 + $0x30] sm:$0xf]
                %1137 = vst [vmem:[%s1123 + $0x18] sm:$0xf] %v1136
                %v1138 = vld [vmem:[%s1122 + $0x38] sm:$0xf]
                %1139 = vst [vmem:[%s1123 + $0x1c] sm:$0xf] %v1138
                %v1140 = vld [vmem:[%s1122 + $0x40] sm:$0xf]
                %1141 = vst [vmem:[%s1123 + $0x20] sm:$0xf] %v1140
                %v1142 = vld [vmem:[%s1122 + $0x48] sm:$0xf]
                %1143 = vst [vmem:[%s1123 + $0x24] sm:$0xf] %v1142
                %v1144 = vld [vmem:[%s1122 + $0x50] sm:$0xf]
                %1145 = vst [vmem:[%s1123 + $0x28] sm:$0xf] %v1144
                %v1146 = vld [vmem:[%s1122 + $0x58] sm:$0xf]
                %1147 = vst [vmem:[%s1123 + $0x2c] sm:$0xf] %v1146
                %v1148 = vld [vmem:[%s1122 + $0x60] sm:$0xf]
                %1149 = vst [vmem:[%s1123 + $0x30] sm:$0xf] %v1148
                %v1150 = vld [vmem:[%s1122 + $0x68] sm:$0xf]
                %1151 = vst [vmem:[%s1123 + $0x34] sm:$0xf] %v1150
                %v1152 = vld [vmem:[%s1122 + $0x70] sm:$0xf]
                %1153 = vst [vmem:[%s1123 + $0x38] sm:$0xf] %v1152
                %v1154 = vld [vmem:[%s1122 + $0x78] sm:$0xf]
                %1155 = vst [vmem:[%s1123 + $0x3c] sm:$0xf] %v1154
              $region151: #{tpu_custom_call.1} parent=145 // loop_footer
                %s1121 = sadd.s32 1, %s1117
              $region152: #{tpu_custom_call.1} parent=145 // loop_footer_branch
                %1116 = sbr.rel target = $region148
              $region153: #{tpu_custom_call.1} parent=145 // loop_exit
                _
            $region146: #{tpu_custom_call.1} parent=137 // pred_fallthru
              _
          $region138: #{tpu_custom_call.1} parent=133 // pred_fallthru
            _
          %1207 = vnop
        $region134: #{tpu_custom_call.1} parent=15 // pred_fallthru
          _
      $region16: #{tpu_custom_call.1} parent=5 // pred_fallthru
        _
      %p1208 = scmp.le.s32.totalorder 1, %s22
      %p1209 = scmp.lt.s32.totalorder %s22, 5
      %p1210 = pnand %p1208, %p1209
      %p1211 = pneg %p1210
      // Predicated region
      $region172: #{tpu_custom_call.1} parent=5 // pred_check
        _
      $region173: #{tpu_custom_call.1} parent=5 // pred_check_branch
        %1213 = sbr.rel (%p1210) target = $region175
      $region174: #{tpu_custom_call.1} parent=5 // pred_region
        %s1214 = ssub.s32 %s22, 1
        %s1215 = sand.u32 %s47, 1
        %s1216 = sand.u32 %s47, 1
        %s1217 = smul.addr %s1216, 512
        %s1218 = scalar_lea.vmem [#allocation6], %s1217
        // Predicated region
        $region176: #{tpu_custom_call.1} parent=174 // pred_check
          %p1219 = pneg %p60
        $region177: #{tpu_custom_call.1} parent=174 // pred_check_branch
          %1221 = sbr.rel (%p1219) target = $region179
        $region178: #{tpu_custom_call.1} parent=174 // pred_region
          _
        $region179: #{tpu_custom_call.1} parent=174 // pred_fallthru
          _
        %s1222 = sand.u32 %s79, 1
        %s1223 = sand.u32 %s79, 1
        %s1224 = smul.addr %s1223, 512
        %s1225 = scalar_lea.vmem [#allocation7], %s1224
        // Predicated region
        $region180: #{tpu_custom_call.1} parent=174 // pred_check
          %p1226 = pneg %p92
        $region181: #{tpu_custom_call.1} parent=174 // pred_check_branch
          %1228 = sbr.rel (%p1226) target = $region183
        $region182: #{tpu_custom_call.1} parent=174 // pred_region
          _
        $region183: #{tpu_custom_call.1} parent=174 // pred_fallthru
          _
        %s1229 = sand.u32 %s111, 1
        %s1230 = sand.u32 %s111, 1
        %s1231 = smul.addr %s1230, 512
        %s1232 = scalar_lea.vmem [#allocation8], %s1231
        // Predicated region
        $region184: #{tpu_custom_call.1} parent=174 // pred_check
          %p1233 = pneg %p124
        $region185: #{tpu_custom_call.1} parent=174 // pred_check_branch
          %1235 = sbr.rel (%p1233) target = $region187
        $region186: #{tpu_custom_call.1} parent=174 // pred_region
          _
        $region187: #{tpu_custom_call.1} parent=174 // pred_fallthru
          _
        %s1236 = sand.u32 %s147, 1
        %s1237 = sand.u32 %s147, 1
        %s1238 = smul.addr %s1237, 64
        %s1239 = scalar_lea.vmem [#allocation9], %s1238
        // Predicated region
        $region188: #{tpu_custom_call.1} parent=174 // pred_check
          %p1240 = pneg %p160
        $region189: #{tpu_custom_call.1} parent=174 // pred_check_branch
          %1242 = sbr.rel (%p1240) target = $region191
        $region190: #{tpu_custom_call.1} parent=174 // pred_region
          _
        $region191: #{tpu_custom_call.1} parent=174 // pred_fallthru
          _
        %s1243 = sand.u32 %s47, 1
        %s1244 = sand.u32 %s47, 1
        %s1245 = smul.addr %s1244, 512
        %s1246 = scalar_lea.vmem [#allocation6], %s1245
        %p1247 = pneg %p60
        %p1248 = pneg %p57
        %s1249 = sand.u32 %s79, 1
        %s1250 = sand.u32 %s79, 1
        %s1251 = smul.addr %s1250, 512
        %s1252 = scalar_lea.vmem [#allocation7], %s1251
        %p1253 = pneg %p92
        %p1254 = pneg %p89
        %s1255 = sand.u32 %s111, 1
        %s1256 = sand.u32 %s111, 1
        %s1257 = smul.addr %s1256, 512
        %s1258 = scalar_lea.vmem [#allocation8], %s1257
        %p1259 = pneg %p124
        %p1260 = pneg %p121
        %s1261 = sand.u32 %s147, 1
        %s1262 = sand.u32 %s147, 1
        %s1263 = smul.addr %s1262, 64
        %s1264 = scalar_lea.vmem [#allocation9], %s1263
        %p1265 = pneg %p160
        %p1266 = pneg %p157
        %p1267 = pneg %p186
        %p1268 = pneg %p183
        %s1269 = sand.u32 %s173, 1
        %s1270 = sand.u32 %s173, 1
        %s1271 = smul.addr %s1270, 512
        %s1272 = scalar_lea.vmem [#allocation10], %s1271
        %s1273 = smul.u32 16, %s31
        %s1274 = smul.u32 %s31, 2
        %s1275 = sadd.s32 %s1274, %s32
        %s1276 = sld [smem:[#allocation5 + %s1275]]
        %s1277 = smul.u32 16, %s1276
        %s1278 = smul.u32 %s31, 2
        %s1279 = sadd.s32 %s1278, %s32
        %s1280 = sld [smem:[#allocation5 + %s1279]]
        %s1281 = smul.u32 16, %s1280
        %s1282 = smul.u32 %s31, 2
        %s1283 = sadd.s32 %s1282, %s32
        %s1284 = sld [smem:[#allocation4 + %s1283]]
        %s1285 = sld [smem:[#allocation5 + %s1283]]
        %s1286 = smul.u32 16, %s1284
        %s1287 = smul.u32 16, %s31
        %s1288 = smul.u32 %s31, 2
        %s1289 = sadd.s32 %s1288, %s32
        %p1290 = scmp.eq.s32.totalorder %s32, 0
        // Predicated region
        $region192: #{tpu_custom_call.1} parent=174 // pred_check
          %p1291 = pneg %p1290
        $region193: #{tpu_custom_call.1} parent=174 // pred_check_branch
          %1293 = sbr.rel (%p1291) target = $region195
        $region194: #{tpu_custom_call.1} parent=174 // pred_region
          %vm1294 = vcmask 138240
          %1295 = vst.msk [vmem:[#allocation2] sm:$0xff] %vm1294, 0.0
          %1296 = vst.msk [vmem:[#allocation2 + $0x8] sm:$0xff] %vm1294, 0.0
          %1297 = vst.msk [vmem:[#allocation2 + $0x10] sm:$0xff] %vm1294, 0.0
          %1298 = vst.msk [vmem:[#allocation2 + $0x18] sm:$0xff] %vm1294, 0.0
          %1299 = vst.msk [vmem:[#allocation2 + $0x20] sm:$0xff] %vm1294, 0.0
          %1300 = vst.msk [vmem:[#allocation2 + $0x28] sm:$0xff] %vm1294, 0.0
          %1301 = vst.msk [vmem:[#allocation2 + $0x30] sm:$0xff] %vm1294, 0.0
          %1302 = vst.msk [vmem:[#allocation2 + $0x38] sm:$0xff] %vm1294, 0.0
          %1303 = vst.msk [vmem:[#allocation2 + $0x40] sm:$0xff] %vm1294, 0.0
          %1304 = vst.msk [vmem:[#allocation2 + $0x48] sm:$0xff] %vm1294, 0.0
          %1305 = vst.msk [vmem:[#allocation2 + $0x50] sm:$0xff] %vm1294, 0.0
          %1306 = vst.msk [vmem:[#allocation2 + $0x58] sm:$0xff] %vm1294, 0.0
          %1307 = vst.msk [vmem:[#allocation2 + $0x60] sm:$0xff] %vm1294, 0.0
          %1308 = vst.msk [vmem:[#allocation2 + $0x68] sm:$0xff] %vm1294, 0.0
          %1309 = vst.msk [vmem:[#allocation2 + $0x70] sm:$0xff] %vm1294, 0.0
          %1310 = vst.msk [vmem:[#allocation2 + $0x78] sm:$0xff] %vm1294, 0.0
          %1311 = vst.msk [vmem:[#allocation2 + $0x80] sm:$0xff] %vm1294, 0.0
          %1312 = vst.msk [vmem:[#allocation2 + $0x88] sm:$0xff] %vm1294, 0.0
          %1313 = vst.msk [vmem:[#allocation2 + $0x90] sm:$0xff] %vm1294, 0.0
          %1314 = vst.msk [vmem:[#allocation2 + $0x98] sm:$0xff] %vm1294, 0.0
          %1315 = vst.msk [vmem:[#allocation2 + $0xa0] sm:$0xff] %vm1294, 0.0
          %1316 = vst.msk [vmem:[#allocation2 + $0xa8] sm:$0xff] %vm1294, 0.0
          %1317 = vst.msk [vmem:[#allocation2 + $0xb0] sm:$0xff] %vm1294, 0.0
          %1318 = vst.msk [vmem:[#allocation2 + $0xb8] sm:$0xff] %vm1294, 0.0
          %1319 = vst.msk [vmem:[#allocation2 + $0xc0] sm:$0xff] %vm1294, 0.0
          %1320 = vst.msk [vmem:[#allocation2 + $0xc8] sm:$0xff] %vm1294, 0.0
          %1321 = vst.msk [vmem:[#allocation2 + $0xd0] sm:$0xff] %vm1294, 0.0
          %1322 = vst.msk [vmem:[#allocation2 + $0xd8] sm:$0xff] %vm1294, 0.0
          %1323 = vst.msk [vmem:[#allocation2 + $0xe0] sm:$0xff] %vm1294, 0.0
          %1324 = vst.msk [vmem:[#allocation2 + $0xe8] sm:$0xff] %vm1294, 0.0
          %1325 = vst.msk [vmem:[#allocation2 + $0xf0] sm:$0xff] %vm1294, 0.0
          %1326 = vst.msk [vmem:[#allocation2 + $0xf8] sm:$0xff] %vm1294, 0.0
          %1327 = vst.msk [vmem:[#allocation2 + $0x100] sm:$0xff] %vm1294, 0.0
          %1328 = vst.msk [vmem:[#allocation2 + $0x108] sm:$0xff] %vm1294, 0.0
          %1329 = vst.msk [vmem:[#allocation2 + $0x110] sm:$0xff] %vm1294, 0.0
          %1330 = vst.msk [vmem:[#allocation2 + $0x118] sm:$0xff] %vm1294, 0.0
          %1331 = vst.msk [vmem:[#allocation2 + $0x120] sm:$0xff] %vm1294, 0.0
          %1332 = vst.msk [vmem:[#allocation2 + $0x128] sm:$0xff] %vm1294, 0.0
          %1333 = vst.msk [vmem:[#allocation2 + $0x130] sm:$0xff] %vm1294, 0.0
          %1334 = vst.msk [vmem:[#allocation2 + $0x138] sm:$0xff] %vm1294, 0.0
          %1335 = vst.msk [vmem:[#allocation2 + $0x140] sm:$0xff] %vm1294, 0.0
          %1336 = vst.msk [vmem:[#allocation2 + $0x148] sm:$0xff] %vm1294, 0.0
          %1337 = vst.msk [vmem:[#allocation2 + $0x150] sm:$0xff] %vm1294, 0.0
          %1338 = vst.msk [vmem:[#allocation2 + $0x158] sm:$0xff] %vm1294, 0.0
          %1339 = vst.msk [vmem:[#allocation2 + $0x160] sm:$0xff] %vm1294, 0.0
          %1340 = vst.msk [vmem:[#allocation2 + $0x168] sm:$0xff] %vm1294, 0.0
          %1341 = vst.msk [vmem:[#allocation2 + $0x170] sm:$0xff] %vm1294, 0.0
          %1342 = vst.msk [vmem:[#allocation2 + $0x178] sm:$0xff] %vm1294, 0.0
          %1343 = vst.msk [vmem:[#allocation2 + $0x180] sm:$0xff] %vm1294, 0.0
          %1344 = vst.msk [vmem:[#allocation2 + $0x188] sm:$0xff] %vm1294, 0.0
          %1345 = vst.msk [vmem:[#allocation2 + $0x190] sm:$0xff] %vm1294, 0.0
          %1346 = vst.msk [vmem:[#allocation2 + $0x198] sm:$0xff] %vm1294, 0.0
          %1347 = vst.msk [vmem:[#allocation2 + $0x1a0] sm:$0xff] %vm1294, 0.0
          %1348 = vst.msk [vmem:[#allocation2 + $0x1a8] sm:$0xff] %vm1294, 0.0
          %1349 = vst.msk [vmem:[#allocation2 + $0x1b0] sm:$0xff] %vm1294, 0.0
          %1350 = vst.msk [vmem:[#allocation2 + $0x1b8] sm:$0xff] %vm1294, 0.0
          %1351 = vst.msk [vmem:[#allocation2 + $0x1c0] sm:$0xff] %vm1294, 0.0
          %1352 = vst.msk [vmem:[#allocation2 + $0x1c8] sm:$0xff] %vm1294, 0.0
          %1353 = vst.msk [vmem:[#allocation2 + $0x1d0] sm:$0xff] %vm1294, 0.0
          %1354 = vst.msk [vmem:[#allocation2 + $0x1d8] sm:$0xff] %vm1294, 0.0
          %1355 = vst.msk [vmem:[#allocation2 + $0x1e0] sm:$0xff] %vm1294, 0.0
          %1356 = vst.msk [vmem:[#allocation2 + $0x1e8] sm:$0xff] %vm1294, 0.0
          %1357 = vst.msk [vmem:[#allocation2 + $0x1f0] sm:$0xff] %vm1294, 0.0
          %1358 = vst.msk [vmem:[#allocation2 + $0x1f8] sm:$0xff] %vm1294, 0.0
        $region195: #{tpu_custom_call.1} parent=174 // pred_fallthru
          _
        %s1359 = sld [smem:[#allocation4 + %s1289]]
        %p1360 = scmp.eq.s32.totalorder %s1359, %s31
        %s1361 = sld [smem:[#allocation5 + %s1289]]
        %p1362 = scmp.eq.s32.totalorder %s1361, %s32
        %p1363 = pnand %p1360, %p1362
        %p1364 = pneg %p1363
        // Predicated region
        $region196: #{tpu_custom_call.1} parent=174 // pred_check
          _
        $region197: #{tpu_custom_call.1} parent=174 // pred_check_branch
          %1366 = sbr.rel (%p1363) target = $region199
        $region198: #{tpu_custom_call.1} parent=174 // pred_region
          %v1367 = vld [vmem:[%s1239] sm:$0xf]
          %v1368 = vld [vmem:[%s1239 + $0x4] sm:$0xf]
          %v1369 = vld [vmem:[%s1239 + $0x8] sm:$0xf]
          %v1370 = vld [vmem:[%s1239 + $0xc] sm:$0xf]
          %v1371 = vld [vmem:[%s1239 + $0x10] sm:$0xf]
          %v1372 = vld [vmem:[%s1239 + $0x14] sm:$0xf]
          %v1373 = vld [vmem:[%s1239 + $0x18] sm:$0xf]
          %v1374 = vld [vmem:[%s1239 + $0x1c] sm:$0xf]
          %v1375 = vld [vmem:[%s1239 + $0x20] sm:$0xf]
          %v1376 = vld [vmem:[%s1239 + $0x24] sm:$0xf]
          %v1377 = vld [vmem:[%s1239 + $0x28] sm:$0xf]
          %v1378 = vld [vmem:[%s1239 + $0x2c] sm:$0xf]
          %v1379 = vld [vmem:[%s1239 + $0x30] sm:$0xf]
          %v1380 = vld [vmem:[%s1239 + $0x34] sm:$0xf]
          %v1381 = vld [vmem:[%s1239 + $0x38] sm:$0xf]
          %v1382 = vld [vmem:[%s1239 + $0x3c] sm:$0xf]
          %v1383 = vunpack.c.l.bf16 %v1367
          %v1384 = vunpack.c.l.bf16 %v1368
          %v1385 = vunpack.c.l.bf16 %v1369
          %v1386 = vunpack.c.l.bf16 %v1370
          %v1387 = vunpack.c.l.bf16 %v1371
          %v1388 = vunpack.c.l.bf16 %v1372
          %v1389 = vunpack.c.l.bf16 %v1373
          %v1390 = vunpack.c.l.bf16 %v1374
          %v1391 = vunpack.c.l.bf16 %v1375
          %v1392 = vunpack.c.l.bf16 %v1376
          %v1393 = vunpack.c.l.bf16 %v1377
          %v1394 = vunpack.c.l.bf16 %v1378
          %v1395 = vunpack.c.l.bf16 %v1379
          %v1396 = vunpack.c.l.bf16 %v1380
          %v1397 = vunpack.c.l.bf16 %v1381
          %v1398 = vunpack.c.l.bf16 %v1382
          %v1399 = vld [vmem:[%s1218] sm:$0xff]
          %v1400 = vld [vmem:[%s1218 + $0x8] sm:$0xff]
          %v1401 = vld [vmem:[%s1218 + $0x10] sm:$0xff]
          %v1402 = vld [vmem:[%s1218 + $0x18] sm:$0xff]
          %v1403 = vld [vmem:[%s1218 + $0x20] sm:$0xff]
          %v1404 = vld [vmem:[%s1218 + $0x28] sm:$0xff]
          %v1405 = vld [vmem:[%s1218 + $0x30] sm:$0xff]
          %v1406 = vld [vmem:[%s1218 + $0x38] sm:$0xff]
          %v1407 = vld [vmem:[%s1218 + $0x40] sm:$0xff]
          %v1408 = vld [vmem:[%s1218 + $0x48] sm:$0xff]
          %v1409 = vld [vmem:[%s1218 + $0x50] sm:$0xff]
          %v1410 = vld [vmem:[%s1218 + $0x58] sm:$0xff]
          %v1411 = vld [vmem:[%s1218 + $0x60] sm:$0xff]
          %v1412 = vld [vmem:[%s1218 + $0x68] sm:$0xff]
          %v1413 = vld [vmem:[%s1218 + $0x70] sm:$0xff]
          %v1414 = vld [vmem:[%s1218 + $0x78] sm:$0xff]
          %v1415 = vld [vmem:[%s1218 + $0x80] sm:$0xff]
          %v1416 = vld [vmem:[%s1218 + $0x88] sm:$0xff]
          %v1417 = vld [vmem:[%s1218 + $0x90] sm:$0xff]
          %v1418 = vld [vmem:[%s1218 + $0x98] sm:$0xff]
          %v1419 = vld [vmem:[%s1218 + $0xa0] sm:$0xff]
          %v1420 = vld [vmem:[%s1218 + $0xa8] sm:$0xff]
          %v1421 = vld [vmem:[%s1218 + $0xb0] sm:$0xff]
          %v1422 = vld [vmem:[%s1218 + $0xb8] sm:$0xff]
          %v1423 = vld [vmem:[%s1218 + $0xc0] sm:$0xff]
          %v1424 = vld [vmem:[%s1218 + $0xc8] sm:$0xff]
          %v1425 = vld [vmem:[%s1218 + $0xd0] sm:$0xff]
          %v1426 = vld [vmem:[%s1218 + $0xd8] sm:$0xff]
          %v1427 = vld [vmem:[%s1218 + $0xe0] sm:$0xff]
          %v1428 = vld [vmem:[%s1218 + $0xe8] sm:$0xff]
          %v1429 = vld [vmem:[%s1218 + $0xf0] sm:$0xff]
          %v1430 = vld [vmem:[%s1218 + $0xf8] sm:$0xff]
          %v1431 = vld [vmem:[%s1218 + $0x100] sm:$0xff]
          %v1432 = vld [vmem:[%s1218 + $0x108] sm:$0xff]
          %v1433 = vld [vmem:[%s1218 + $0x110] sm:$0xff]
          %v1434 = vld [vmem:[%s1218 + $0x118] sm:$0xff]
          %v1435 = vld [vmem:[%s1218 + $0x120] sm:$0xff]
          %v1436 = vld [vmem:[%s1218 + $0x128] sm:$0xff]
          %v1437 = vld [vmem:[%s1218 + $0x130] sm:$0xff]
          %v1438 = vld [vmem:[%s1218 + $0x138] sm:$0xff]
          %v1439 = vld [vmem:[%s1218 + $0x140] sm:$0xff]
          %v1440 = vld [vmem:[%s1218 + $0x148] sm:$0xff]
          %v1441 = vld [vmem:[%s1218 + $0x150] sm:$0xff]
          %v1442 = vld [vmem:[%s1218 + $0x158] sm:$0xff]
          %v1443 = vld [vmem:[%s1218 + $0x160] sm:$0xff]
          %v1444 = vld [vmem:[%s1218 + $0x168] sm:$0xff]
          %v1445 = vld [vmem:[%s1218 + $0x170] sm:$0xff]
          %v1446 = vld [vmem:[%s1218 + $0x178] sm:$0xff]
          %v1447 = vld [vmem:[%s1218 + $0x180] sm:$0xff]
          %v1448 = vld [vmem:[%s1218 + $0x188] sm:$0xff]
          %v1449 = vld [vmem:[%s1218 + $0x190] sm:$0xff]
          %v1450 = vld [vmem:[%s1218 + $0x198] sm:$0xff]
          %v1451 = vld [vmem:[%s1218 + $0x1a0] sm:$0xff]
          %v1452 = vld [vmem:[%s1218 + $0x1a8] sm:$0xff]
          %v1453 = vld [vmem:[%s1218 + $0x1b0] sm:$0xff]
          %v1454 = vld [vmem:[%s1218 + $0x1b8] sm:$0xff]
          %v1455 = vld [vmem:[%s1218 + $0x1c0] sm:$0xff]
          %v1456 = vld [vmem:[%s1218 + $0x1c8] sm:$0xff]
          %v1457 = vld [vmem:[%s1218 + $0x1d0] sm:$0xff]
          %v1458 = vld [vmem:[%s1218 + $0x1d8] sm:$0xff]
          %v1459 = vld [vmem:[%s1218 + $0x1e0] sm:$0xff]
          %v1460 = vld [vmem:[%s1218 + $0x1e8] sm:$0xff]
          %v1461 = vld [vmem:[%s1218 + $0x1f0] sm:$0xff]
          %v1462 = vld [vmem:[%s1218 + $0x1f8] sm:$0xff]
          %v1463 = vld [vmem:[%s1225] sm:$0xff]
          %v1464 = vld [vmem:[%s1225 + $0x8] sm:$0xff]
          %v1465 = vld [vmem:[%s1225 + $0x10] sm:$0xff]
          %v1466 = vld [vmem:[%s1225 + $0x18] sm:$0xff]
          %v1467 = vld [vmem:[%s1225 + $0x20] sm:$0xff]
          %v1468 = vld [vmem:[%s1225 + $0x28] sm:$0xff]
          %v1469 = vld [vmem:[%s1225 + $0x30] sm:$0xff]
          %v1470 = vld [vmem:[%s1225 + $0x38] sm:$0xff]
          %v1471 = vld [vmem:[%s1225 + $0x40] sm:$0xff]
          %v1472 = vld [vmem:[%s1225 + $0x48] sm:$0xff]
          %v1473 = vld [vmem:[%s1225 + $0x50] sm:$0xff]
          %v1474 = vld [vmem:[%s1225 + $0x58] sm:$0xff]
          %v1475 = vld [vmem:[%s1225 + $0x60] sm:$0xff]
          %v1476 = vld [vmem:[%s1225 + $0x68] sm:$0xff]
          %v1477 = vld [vmem:[%s1225 + $0x70] sm:$0xff]
          %v1478 = vld [vmem:[%s1225 + $0x78] sm:$0xff]
          %v1479 = vld [vmem:[%s1225 + $0x80] sm:$0xff]
          %v1480 = vld [vmem:[%s1225 + $0x88] sm:$0xff]
          %v1481 = vld [vmem:[%s1225 + $0x90] sm:$0xff]
          %v1482 = vld [vmem:[%s1225 + $0x98] sm:$0xff]
          %v1483 = vld [vmem:[%s1225 + $0xa0] sm:$0xff]
          %v1484 = vld [vmem:[%s1225 + $0xa8] sm:$0xff]
          %v1485 = vld [vmem:[%s1225 + $0xb0] sm:$0xff]
          %v1486 = vld [vmem:[%s1225 + $0xb8] sm:$0xff]
          %v1487 = vld [vmem:[%s1225 + $0xc0] sm:$0xff]
          %v1488 = vld [vmem:[%s1225 + $0xc8] sm:$0xff]
          %v1489 = vld [vmem:[%s1225 + $0xd0] sm:$0xff]
          %v1490 = vld [vmem:[%s1225 + $0xd8] sm:$0xff]
          %v1491 = vld [vmem:[%s1225 + $0xe0] sm:$0xff]
          %v1492 = vld [vmem:[%s1225 + $0xe8] sm:$0xff]
          %v1493 = vld [vmem:[%s1225 + $0xf0] sm:$0xff]
          %v1494 = vld [vmem:[%s1225 + $0xf8] sm:$0xff]
          %v1495 = vld [vmem:[%s1225 + $0x100] sm:$0xff]
          %v1496 = vld [vmem:[%s1225 + $0x108] sm:$0xff]
          %v1497 = vld [vmem:[%s1225 + $0x110] sm:$0xff]
          %v1498 = vld [vmem:[%s1225 + $0x118] sm:$0xff]
          %v1499 = vld [vmem:[%s1225 + $0x120] sm:$0xff]
          %v1500 = vld [vmem:[%s1225 + $0x128] sm:$0xff]
          %v1501 = vld [vmem:[%s1225 + $0x130] sm:$0xff]
          %v1502 = vld [vmem:[%s1225 + $0x138] sm:$0xff]
          %v1503 = vld [vmem:[%s1225 + $0x140] sm:$0xff]
          %v1504 = vld [vmem:[%s1225 + $0x148] sm:$0xff]
          %v1505 = vld [vmem:[%s1225 + $0x150] sm:$0xff]
          %v1506 = vld [vmem:[%s1225 + $0x158] sm:$0xff]
          %v1507 = vld [vmem:[%s1225 + $0x160] sm:$0xff]
          %v1508 = vld [vmem:[%s1225 + $0x168] sm:$0xff]
          %v1509 = vld [vmem:[%s1225 + $0x170] sm:$0xff]
          %v1510 = vld [vmem:[%s1225 + $0x178] sm:$0xff]
          %v1511 = vld [vmem:[%s1225 + $0x180] sm:$0xff]
          %v1512 = vld [vmem:[%s1225 + $0x188] sm:$0xff]
          %v1513 = vld [vmem:[%s1225 + $0x190] sm:$0xff]
          %v1514 = vld [vmem:[%s1225 + $0x198] sm:$0xff]
          %v1515 = vld [vmem:[%s1225 + $0x1a0] sm:$0xff]
          %v1516 = vld [vmem:[%s1225 + $0x1a8] sm:$0xff]
          %v1517 = vld [vmem:[%s1225 + $0x1b0] sm:$0xff]
          %v1518 = vld [vmem:[%s1225 + $0x1b8] sm:$0xff]
          %v1519 = vld [vmem:[%s1225 + $0x1c0] sm:$0xff]
          %v1520 = vld [vmem:[%s1225 + $0x1c8] sm:$0xff]
          %v1521 = vld [vmem:[%s1225 + $0x1d0] sm:$0xff]
          %v1522 = vld [vmem:[%s1225 + $0x1d8] sm:$0xff]
          %v1523 = vld [vmem:[%s1225 + $0x1e0] sm:$0xff]
          %v1524 = vld [vmem:[%s1225 + $0x1e8] sm:$0xff]
          %v1525 = vld [vmem:[%s1225 + $0x1f0] sm:$0xff]
          %v1526 = vld [vmem:[%s1225 + $0x1f8] sm:$0xff]
          %vm1527 = vcmask 130048
          %v1529 = vsel %vm1527, %v1399, 0
          %v1532 = vsel %vm1527, %v1400, 0
          %v1535 = vsel %vm1527, %v1401, 0
          %v1538 = vsel %vm1527, %v1402, 0
          %v1541 = vsel %vm1527, %v1403, 0
          %v1544 = vsel %vm1527, %v1404, 0
          %v1547 = vsel %vm1527, %v1405, 0
          %v1550 = vsel %vm1527, %v1406, 0
          %v1553 = vsel %vm1527, %v1407, 0
          %v1556 = vsel %vm1527, %v1408, 0
          %v1559 = vsel %vm1527, %v1409, 0
          %v1562 = vsel %vm1527, %v1410, 0
          %v1565 = vsel %vm1527, %v1411, 0
          %v1568 = vsel %vm1527, %v1412, 0
          %v1571 = vsel %vm1527, %v1413, 0
          %v1574 = vsel %vm1527, %v1414, 0
          %v1577 = vsel %vm1527, %v1463, 0
          %v1580 = vsel %vm1527, %v1464, 0
          %v1583 = vsel %vm1527, %v1465, 0
          %v1586 = vsel %vm1527, %v1466, 0
          %v1589 = vsel %vm1527, %v1467, 0
          %v1592 = vsel %vm1527, %v1468, 0
          %v1595 = vsel %vm1527, %v1469, 0
          %v1598 = vsel %vm1527, %v1470, 0
          %v1601 = vsel %vm1527, %v1471, 0
          %v1604 = vsel %vm1527, %v1472, 0
          %v1607 = vsel %vm1527, %v1473, 0
          %v1610 = vsel %vm1527, %v1474, 0
          %v1613 = vsel %vm1527, %v1475, 0
          %v1616 = vsel %vm1527, %v1476, 0
          %v1619 = vsel %vm1527, %v1477, 0
          %v1622 = vsel %vm1527, %v1478, 0
          %1624 = vmatprep.subr.mxu0 0.0
          %1625 = vmatpush1.xpose.msra.mxu0 %v1577
          %1626 = vmatprep.subr.mxu0 0.0
          %1627 = vmatpush1.xpose.msra.mxu0 %v1580
          %1628 = vmatprep.subr.mxu0 0.0
          %1629 = vmatpush1.xpose.msra.mxu0 %v1583
          %1630 = vmatprep.subr.mxu0 0.0
          %1631 = vmatpush1.xpose.msra.mxu0 %v1586
          %1632 = vmatprep.subr.mxu0 0.0
          %1633 = vmatpush1.xpose.msra.mxu0 %v1589
          %1634 = vmatprep.subr.mxu0 0.0
          %1635 = vmatpush1.xpose.msra.mxu0 %v1592
          %1636 = vmatprep.subr.mxu0 0.0
          %1637 = vmatpush1.xpose.msra.mxu0 %v1595
          %1638 = vmatprep.subr.mxu0 0.0
          %1639 = vmatpush1.xpose.msra.mxu0 %v1598
          %1640 = vmatprep.subr.mxu0 0.0
          %1641 = vmatpush1.xpose.msra.mxu0 %v1601
          %1642 = vmatprep.subr.mxu0 0.0
          %1643 = vmatpush1.xpose.msra.mxu0 %v1604
          %1644 = vmatprep.subr.mxu0 0.0
          %1645 = vmatpush1.xpose.msra.mxu0 %v1607
          %1646 = vmatprep.subr.mxu0 0.0
          %1647 = vmatpush1.xpose.msra.mxu0 %v1610
          %1648 = vmatprep.subr.mxu0 0.0
          %1649 = vmatpush1.xpose.msra.mxu0 %v1613
          %1650 = vmatprep.subr.mxu0 0.0
          %1651 = vmatpush1.xpose.msra.mxu0 %v1616
          %1652 = vmatprep.subr.mxu0 0.0
          %1653 = vmatpush1.xpose.msra.mxu0 %v1619
          %1654 = vmatprep.subr.mxu0 0.0
          %1655 = vmatpush1.xpose.msra.mxu0 %v1622
          %1656 = vmatprep.subr.mxu0 0.0
          %1657 = vmatpush1.xpose.msra.mxu0 0.0
          %1658 = vmatprep.subr.mxu0 0.0
          %1659 = vmatpush1.xpose.msra.mxu0 0.0
          %1660 = vmatprep.subr.mxu0 0.0
          %1661 = vmatpush1.xpose.msra.mxu0 0.0
          %1662 = vmatprep.subr.mxu0 0.0
          %1663 = vmatpush1.xpose.msra.mxu0 0.0
          %1664 = vmatprep.subr.mxu0 0.0
          %1665 = vmatpush1.xpose.msra.mxu0 0.0
          %1666 = vmatprep.subr.mxu0 0.0
          %1667 = vmatpush1.xpose.msra.mxu0 0.0
          %1668 = vmatprep.subr.mxu0 0.0
          %1669 = vmatpush1.xpose.msra.mxu0 0.0
          %1670 = vmatprep.subr.mxu0 0.0
          %1671 = vmatpush1.xpose.msra.mxu0 0.0
          %1672 = vmatprep.subr.mxu0 0.0
          %1673 = vmatpush1.xpose.msra.mxu0 0.0
          %1674 = vmatprep.subr.mxu0 0.0
          %1675 = vmatpush1.xpose.msra.mxu0 0.0
          %1676 = vmatprep.subr.mxu0 0.0
          %1677 = vmatpush1.xpose.msra.mxu0 0.0
          %1678 = vmatprep.subr.mxu0 0.0
          %1679 = vmatpush1.xpose.msra.mxu0 0.0
          %1680 = vmatprep.subr.mxu0 0.0
          %1681 = vmatpush1.xpose.msra.mxu0 0.0
          %1682 = vmatprep.subr.mxu0 0.0
          %1683 = vmatpush1.xpose.msra.mxu0 0.0
          %1684 = vmatprep.subr.mxu0 0.0
          %1685 = vmatpush1.xpose.msra.mxu0 0.0
          %1686 = vmatprep.subr.mxu0 0.0
          %1687 = vmatpush1.xpose.msra.mxu0 0.0
          %1688 = vmatprep.mubr.f32.mxu0 0.0
          %1689 = vmatmul.mubr.f32.gmra.mrb[0].mxu0 %v1529
          %v1690 = vpop.f32.mrb[0].mxu0
          %v1691 = vadd.f32 0.0, %v1690
          %v1692 = vpop.f32.mrb[0].mxu0
          %1693 = vmatprep.mubr.f32.mxu0 0.0
          %1694 = vmatmul.mubr.f32.gmra.mrb[0].mxu0 %v1532
          %v1695 = vpop.f32.mrb[0].mxu0
          %v1696 = vadd.f32 0.0, %v1695
          %v1697 = vpop.f32.mrb[0].mxu0
          %1698 = vmatprep.mubr.f32.mxu0 0.0
          %1699 = vmatmul.mubr.f32.gmra.mrb[0].mxu0 %v1535
          %v1700 = vpop.f32.mrb[0].mxu0
          %v1701 = vadd.f32 0.0, %v1700
          %v1702 = vpop.f32.mrb[0].mxu0
          %1703 = vmatprep.mubr.f32.mxu0 0.0
          %1704 = vmatmul.mubr.f32.gmra.mrb[0].mxu0 %v1538
          %v1705 = vpop.f32.mrb[0].mxu0
          %v1706 = vadd.f32 0.0, %v1705
          %v1707 = vpop.f32.mrb[0].mxu0
          %1708 = vmatprep.mubr.f32.mxu0 0.0
          %1709 = vmatmul.mubr.f32.gmra.mrb[0].mxu0 %v1541
          %v1710 = vpop.f32.mrb[0].mxu0
          %v1711 = vadd.f32 0.0, %v1710
          %v1712 = vpop.f32.mrb[0].mxu0
          %1713 = vmatprep.mubr.f32.mxu0 0.0
          %1714 = vmatmul.mubr.f32.gmra.mrb[0].mxu0 %v1544
          %v1715 = vpop.f32.mrb[0].mxu0
          %v1716 = vadd.f32 0.0, %v1715
          %v1717 = vpop.f32.mrb[0].mxu0
          %1718 = vmatprep.mubr.f32.mxu0 0.0
          %1719 = vmatmul.mubr.f32.gmra.mrb[0].mxu0 %v1547
          %v1720 = vpop.f32.mrb[0].mxu0
          %v1721 = vadd.f32 0.0, %v1720
          %v1722 = vpop.f32.mrb[0].mxu0
          %1723 = vmatprep.mubr.f32.mxu0 0.0
          %1724 = vmatmul.mubr.f32.gmra.mrb[0].mxu0 %v1550
          %v1725 = vpop.f32.mrb[0].mxu0
          %v1726 = vadd.f32 0.0, %v1725
          %v1727 = vpop.f32.mrb[0].mxu0
          %1728 = vmatprep.mubr.f32.mxu0 0.0
          %1729 = vmatmul.mubr.f32.gmra.mrb[0].mxu0 %v1553
          %v1730 = vpop.f32.mrb[0].mxu0
          %v1731 = vadd.f32 0.0, %v1730
          %v1732 = vpop.f32.mrb[0].mxu0
          %1733 = vmatprep.mubr.f32.mxu0 0.0
          %1734 = vmatmul.mubr.f32.gmra.mrb[0].mxu0 %v1556
          %v1735 = vpop.f32.mrb[0].mxu0
          %v1736 = vadd.f32 0.0, %v1735
          %v1737 = vpop.f32.mrb[0].mxu0
          %1738 = vmatprep.mubr.f32.mxu0 0.0
          %1739 = vmatmul.mubr.f32.gmra.mrb[0].mxu0 %v1559
          %v1740 = vpop.f32.mrb[0].mxu0
          %v1741 = vadd.f32 0.0, %v1740
          %v1742 = vpop.f32.mrb[0].mxu0
          %1743 = vmatprep.mubr.f32.mxu0 0.0
          %1744 = vmatmul.mubr.f32.gmra.mrb[0].mxu0 %v1562
          %v1745 = vpop.f32.mrb[0].mxu0
          %v1746 = vadd.f32 0.0, %v1745
          %v1747 = vpop.f32.mrb[0].mxu0
          %1748 = vmatprep.mubr.f32.mxu0 0.0
          %1749 = vmatmul.mubr.f32.gmra.mrb[0].mxu0 %v1565
          %v1750 = vpop.f32.mrb[0].mxu0
          %v1751 = vadd.f32 0.0, %v1750
          %v1752 = vpop.f32.mrb[0].mxu0
          %1753 = vmatprep.mubr.f32.mxu0 0.0
          %1754 = vmatmul.mubr.f32.gmra.mrb[0].mxu0 %v1568
          %v1755 = vpop.f32.mrb[0].mxu0
          %v1756 = vadd.f32 0.0, %v1755
          %v1757 = vpop.f32.mrb[0].mxu0
          %1758 = vmatprep.mubr.f32.mxu0 0.0
          %1759 = vmatmul.mubr.f32.gmra.mrb[0].mxu0 %v1571
          %v1760 = vpop.f32.mrb[0].mxu0
          %v1761 = vadd.f32 0.0, %v1760
          %v1762 = vpop.f32.mrb[0].mxu0
          %1763 = vmatprep.mubr.f32.mxu0 0.0
          %1764 = vmatmul.mubr.f32.gmra.mrb[0].mxu0 %v1574
          %v1765 = vpop.f32.mrb[0].mxu0
          %v1766 = vadd.f32 0.0, %v1765
          %v1767 = vpop.f32.mrb[0].mxu0
          %1768 = vdwg.mxu0
          %v1770 = vsel %vm1527, %v1415, 0
          %v1773 = vsel %vm1527, %v1416, 0
          %v1776 = vsel %vm1527, %v1417, 0
          %v1779 = vsel %vm1527, %v1418, 0
          %v1782 = vsel %vm1527, %v1419, 0
          %v1785 = vsel %vm1527, %v1420, 0
          %v1788 = vsel %vm1527, %v1421, 0
          %v1791 = vsel %vm1527, %v1422, 0
          %v1794 = vsel %vm1527, %v1423, 0
          %v1797 = vsel %vm1527, %v1424, 0
          %v1800 = vsel %vm1527, %v1425, 0
          %v1803 = vsel %vm1527, %v1426, 0
          %v1806 = vsel %vm1527, %v1427, 0
          %v1809 = vsel %vm1527, %v1428, 0
          %v1812 = vsel %vm1527, %v1429, 0
          %v1815 = vsel %vm1527, %v1430, 0
          %v1818 = vsel %vm1527, %v1479, 0
          %v1821 = vsel %vm1527, %v1480, 0
          %v1824 = vsel %vm1527, %v1481, 0
          %v1827 = vsel %vm1527, %v1482, 0
          %v1830 = vsel %vm1527, %v1483, 0
          %v1833 = vsel %vm1527, %v1484, 0
          %v1836 = vsel %vm1527, %v1485, 0
          %v1839 = vsel %vm1527, %v1486, 0
          %v1842 = vsel %vm1527, %v1487, 0
          %v1845 = vsel %vm1527, %v1488, 0
          %v1848 = vsel %vm1527, %v1489, 0
          %v1851 = vsel %vm1527, %v1490, 0
          %v1854 = vsel %vm1527, %v1491, 0
          %v1857 = vsel %vm1527, %v1492, 0
          %v1860 = vsel %vm1527, %v1493, 0
          %v1863 = vsel %vm1527, %v1494, 0
          %1865 = vmatprep.subr.mxu0 0.0
          %1866 = vmatpush1.xpose.msra.mxu0 %v1818
          %1867 = vmatprep.subr.mxu0 0.0
          %1868 = vmatpush1.xpose.msra.mxu0 %v1821
          %1869 = vmatprep.subr.mxu0 0.0
          %1870 = vmatpush1.xpose.msra.mxu0 %v1824
          %1871 = vmatprep.subr.mxu0 0.0
          %1872 = vmatpush1.xpose.msra.mxu0 %v1827
          %1873 = vmatprep.subr.mxu0 0.0
          %1874 = vmatpush1.xpose.msra.mxu0 %v1830
          %1875 = vmatprep.subr.mxu0 0.0
          %1876 = vmatpush1.xpose.msra.mxu0 %v1833
          %1877 = vmatprep.subr.mxu0 0.0
          %1878 = vmatpush1.xpose.msra.mxu0 %v1836
          %1879 = vmatprep.subr.mxu0 0.0
          %1880 = vmatpush1.xpose.msra.mxu0 %v1839
          %1881 = vmatprep.subr.mxu0 0.0
          %1882 = vmatpush1.xpose.msra.mxu0 %v1842
          %1883 = vmatprep.subr.mxu0 0.0
          %1884 = vmatpush1.xpose.msra.mxu0 %v1845
          %1885 = vmatprep.subr.mxu0 0.0
          %1886 = vmatpush1.xpose.msra.mxu0 %v1848
          %1887 = vmatprep.subr.mxu0 0.0
          %1888 = vmatpush1.xpose.msra.mxu0 %v1851
          %1889 = vmatprep.subr.mxu0 0.0
          %1890 = vmatpush1.xpose.msra.mxu0 %v1854
          %1891 = vmatprep.subr.mxu0 0.0
          %1892 = vmatpush1.xpose.msra.mxu0 %v1857
          %1893 = vmatprep.subr.mxu0 0.0
          %1894 = vmatpush1.xpose.msra.mxu0 %v1860
          %1895 = vmatprep.subr.mxu0 0.0
          %1896 = vmatpush1.xpose.msra.mxu0 %v1863
          %1897 = vmatprep.subr.mxu0 0.0
          %1898 = vmatpush1.xpose.msra.mxu0 0.0
          %1899 = vmatprep.subr.mxu0 0.0
          %1900 = vmatpush1.xpose.msra.mxu0 0.0
          %1901 = vmatprep.subr.mxu0 0.0
          %1902 = vmatpush1.xpose.msra.mxu0 0.0
          %1903 = vmatprep.subr.mxu0 0.0
          %1904 = vmatpush1.xpose.msra.mxu0 0.0
          %1905 = vmatprep.subr.mxu0 0.0
          %1906 = vmatpush1.xpose.msra.mxu0 0.0
          %1907 = vmatprep.subr.mxu0 0.0
          %1908 = vmatpush1.xpose.msra.mxu0 0.0
          %1909 = vmatprep.subr.mxu0 0.0
          %1910 = vmatpush1.xpose.msra.mxu0 0.0
          %1911 = vmatprep.subr.mxu0 0.0
          %1912 = vmatpush1.xpose.msra.mxu0 0.0
          %1913 = vmatprep.subr.mxu0 0.0
          %1914 = vmatpush1.xpose.msra.mxu0 0.0
          %1915 = vmatprep.subr.mxu0 0.0
          %1916 = vmatpush1.xpose.msra.mxu0 0.0
          %1917 = vmatprep.subr.mxu0 0.0
          %1918 = vmatpush1.xpose.msra.mxu0 0.0
          %1919 = vmatprep.subr.mxu0 0.0
          %1920 = vmatpush1.xpose.msra.mxu0 0.0
          %1921 = vmatprep.subr.mxu0 0.0
          %1922 = vmatpush1.xpose.msra.mxu0 0.0
          %1923 = vmatprep.subr.mxu0 0.0
          %1924 = vmatpush1.xpose.msra.mxu0 0.0
          %1925 = vmatprep.subr.mxu0 0.0
          %1926 = vmatpush1.xpose.msra.mxu0 0.0
          %1927 = vmatprep.subr.mxu0 0.0
          %1928 = vmatpush1.xpose.msra.mxu0 0.0
          %1929 = vmatprep.mubr.f32.mxu0 0.0
          %1930 = vmatmul.mubr.f32.gmra.mrb[0].mxu0 %v1770
          %v1931 = vpop.f32.mrb[0].mxu0
          %v1932 = vadd.f32 0.0, %v1931
          %v1933 = vpop.f32.mrb[0].mxu0
          %1934 = vmatprep.mubr.f32.mxu0 0.0
          %1935 = vmatmul.mubr.f32.gmra.mrb[0].mxu0 %v1773
          %v1936 = vpop.f32.mrb[0].mxu0
          %v1937 = vadd.f32 0.0, %v1936
          %v1938 = vpop.f32.mrb[0].mxu0
          %1939 = vmatprep.mubr.f32.mxu0 0.0
          %1940 = vmatmul.mubr.f32.gmra.mrb[0].mxu0 %v1776
          %v1941 = vpop.f32.mrb[0].mxu0
          %v1942 = vadd.f32 0.0, %v1941
          %v1943 = vpop.f32.mrb[0].mxu0
          %1944 = vmatprep.mubr.f32.mxu0 0.0
          %1945 = vmatmul.mubr.f32.gmra.mrb[0].mxu0 %v1779
          %v1946 = vpop.f32.mrb[0].mxu0
          %v1947 = vadd.f32 0.0, %v1946
          %v1948 = vpop.f32.mrb[0].mxu0
          %1949 = vmatprep.mubr.f32.mxu0 0.0
          %1950 = vmatmul.mubr.f32.gmra.mrb[0].mxu0 %v1782
          %v1951 = vpop.f32.mrb[0].mxu0
          %v1952 = vadd.f32 0.0, %v1951
          %v1953 = vpop.f32.mrb[0].mxu0
          %1954 = vmatprep.mubr.f32.mxu0 0.0
          %1955 = vmatmul.mubr.f32.gmra.mrb[0].mxu0 %v1785
          %v1956 = vpop.f32.mrb[0].mxu0
          %v1957 = vadd.f32 0.0, %v1956
          %v1958 = vpop.f32.mrb[0].mxu0
          %1959 = vmatprep.mubr.f32.mxu0 0.0
          %1960 = vmatmul.mubr.f32.gmra.mrb[0].mxu0 %v1788
          %v1961 = vpop.f32.mrb[0].mxu0
          %v1962 = vadd.f32 0.0, %v1961
          %v1963 = vpop.f32.mrb[0].mxu0
          %1964 = vmatprep.mubr.f32.mxu0 0.0
          %1965 = vmatmul.mubr.f32.gmra.mrb[0].mxu0 %v1791
          %v1966 = vpop.f32.mrb[0].mxu0
          %v1967 = vadd.f32 0.0, %v1966
          %v1968 = vpop.f32.mrb[0].mxu0
          %1969 = vmatprep.mubr.f32.mxu0 0.0
          %1970 = vmatmul.mubr.f32.gmra.mrb[0].mxu0 %v1794
          %v1971 = vpop.f32.mrb[0].mxu0
          %v1972 = vadd.f32 0.0, %v1971
          %v1973 = vpop.f32.mrb[0].mxu0
          %1974 = vmatprep.mubr.f32.mxu0 0.0
          %1975 = vmatmul.mubr.f32.gmra.mrb[0].mxu0 %v1797
          %v1976 = vpop.f32.mrb[0].mxu0
          %v1977 = vadd.f32 0.0, %v1976
          %v1978 = vpop.f32.mrb[0].mxu0
          %1979 = vmatprep.mubr.f32.mxu0 0.0
          %1980 = vmatmul.mubr.f32.gmra.mrb[0].mxu0 %v1800
          %v1981 = vpop.f32.mrb[0].mxu0
          %v1982 = vadd.f32 0.0, %v1981
          %v1983 = vpop.f32.mrb[0].mxu0
          %1984 = vmatprep.mubr.f32.mxu0 0.0
          %1985 = vmatmul.mubr.f32.gmra.mrb[0].mxu0 %v1803
          %v1986 = vpop.f32.mrb[0].mxu0
          %v1987 = vadd.f32 0.0, %v1986
          %v1988 = vpop.f32.mrb[0].mxu0
          %1989 = vmatprep.mubr.f32.mxu0 0.0
          %1990 = vmatmul.mubr.f32.gmra.mrb[0].mxu0 %v1806
          %v1991 = vpop.f32.mrb[0].mxu0
          %v1992 = vadd.f32 0.0, %v1991
          %v1993 = vpop.f32.mrb[0].mxu0
          %1994 = vmatprep.mubr.f32.mxu0 0.0
          %1995 = vmatmul.mubr.f32.gmra.mrb[0].mxu0 %v1809
          %v1996 = vpop.f32.mrb[0].mxu0
          %v1997 = vadd.f32 0.0, %v1996
          %v1998 = vpop.f32.mrb[0].mxu0
          %1999 = vmatprep.mubr.f32.mxu0 0.0
          %2000 = vmatmul.mubr.f32.gmra.mrb[0].mxu0 %v1812
          %v2001 = vpop.f32.mrb[0].mxu0
          %v2002 = vadd.f32 0.0, %v2001
          %v2003 = vpop.f32.mrb[0].mxu0
          %2004 = vmatprep.mubr.f32.mxu0 0.0
          %2005 = vmatmul.mubr.f32.gmra.mrb[0].mxu0 %v1815
          %v2006 = vpop.f32.mrb[0].mxu0
          %v2007 = vadd.f32 0.0, %v2006
          %v2008 = vpop.f32.mrb[0].mxu0
          %2009 = vdwg.mxu0
          %v2011 = vsel %vm1527, %v1431, 0
          %v2014 = vsel %vm1527, %v1432, 0
          %v2017 = vsel %vm1527, %v1433, 0
          %v2020 = vsel %vm1527, %v1434, 0
          %v2023 = vsel %vm1527, %v1435, 0
          %v2026 = vsel %vm1527, %v1436, 0
          %v2029 = vsel %vm1527, %v1437, 0
          %v2032 = vsel %vm1527, %v1438, 0
          %v2035 = vsel %vm1527, %v1439, 0
          %v2038 = vsel %vm1527, %v1440, 0
          %v2041 = vsel %vm1527, %v1441, 0
          %v2044 = vsel %vm1527, %v1442, 0
          %v2047 = vsel %vm1527, %v1443, 0
          %v2050 = vsel %vm1527, %v1444, 0
          %v2053 = vsel %vm1527, %v1445, 0
          %v2056 = vsel %vm1527, %v1446, 0
          %v2059 = vsel %vm1527, %v1495, 0
          %v2062 = vsel %vm1527, %v1496, 0
          %v2065 = vsel %vm1527, %v1497, 0
          %v2068 = vsel %vm1527, %v1498, 0
          %v2071 = vsel %vm1527, %v1499, 0
          %v2074 = vsel %vm1527, %v1500, 0
          %v2077 = vsel %vm1527, %v1501, 0
          %v2080 = vsel %vm1527, %v1502, 0
          %v2083 = vsel %vm1527, %v1503, 0
          %v2086 = vsel %vm1527, %v1504, 0
          %v2089 = vsel %vm1527, %v1505, 0
          %v2092 = vsel %vm1527, %v1506, 0
          %v2095 = vsel %vm1527, %v1507, 0
          %v2098 = vsel %vm1527, %v1508, 0
          %v2101 = vsel %vm1527, %v1509, 0
          %v2104 = vsel %vm1527, %v1510, 0
          %2106 = vmatprep.subr.mxu0 0.0
          %2107 = vmatpush1.xpose.msra.mxu0 %v2059
          %2108 = vmatprep.subr.mxu0 0.0
          %2109 = vmatpush1.xpose.msra.mxu0 %v2062
          %2110 = vmatprep.subr.mxu0 0.0
          %2111 = vmatpush1.xpose.msra.mxu0 %v2065
          %2112 = vmatprep.subr.mxu0 0.0
          %2113 = vmatpush1.xpose.msra.mxu0 %v2068
          %2114 = vmatprep.subr.mxu0 0.0
          %2115 = vmatpush1.xpose.msra.mxu0 %v2071
          %2116 = vmatprep.subr.mxu0 0.0
          %2117 = vmatpush1.xpose.msra.mxu0 %v2074
          %2118 = vmatprep.subr.mxu0 0.0
          %2119 = vmatpush1.xpose.msra.mxu0 %v2077
          %2120 = vmatprep.subr.mxu0 0.0
          %2121 = vmatpush1.xpose.msra.mxu0 %v2080
          %2122 = vmatprep.subr.mxu0 0.0
          %2123 = vmatpush1.xpose.msra.mxu0 %v2083
          %2124 = vmatprep.subr.mxu0 0.0
          %2125 = vmatpush1.xpose.msra.mxu0 %v2086
          %2126 = vmatprep.subr.mxu0 0.0
          %2127 = vmatpush1.xpose.msra.mxu0 %v2089
          %2128 = vmatprep.subr.mxu0 0.0
          %2129 = vmatpush1.xpose.msra.mxu0 %v2092
          %2130 = vmatprep.subr.mxu0 0.0
          %2131 = vmatpush1.xpose.msra.mxu0 %v2095
          %2132 = vmatprep.subr.mxu0 0.0
          %2133 = vmatpush1.xpose.msra.mxu0 %v2098
          %2134 = vmatprep.subr.mxu0 0.0
          %2135 = vmatpush1.xpose.msra.mxu0 %v2101
          %2136 = vmatprep.subr.mxu0 0.0
          %2137 = vmatpush1.xpose.msra.mxu0 %v2104
          %2138 = vmatprep.subr.mxu0 0.0
          %2139 = vmatpush1.xpose.msra.mxu0 0.0
          %2140 = vmatprep.subr.mxu0 0.0
          %2141 = vmatpush1.xpose.msra.mxu0 0.0
          %2142 = vmatprep.subr.mxu0 0.0
          %2143 = vmatpush1.xpose.msra.mxu0 0.0
          %2144 = vmatprep.subr.mxu0 0.0
          %2145 = vmatpush1.xpose.msra.mxu0 0.0
          %2146 = vmatprep.subr.mxu0 0.0
          %2147 = vmatpush1.xpose.msra.mxu0 0.0
          %2148 = vmatprep.subr.mxu0 0.0
          %2149 = vmatpush1.xpose.msra.mxu0 0.0
          %2150 = vmatprep.subr.mxu0 0.0
          %2151 = vmatpush1.xpose.msra.mxu0 0.0
          %2152 = vmatprep.subr.mxu0 0.0
          %2153 = vmatpush1.xpose.msra.mxu0 0.0
          %2154 = vmatprep.subr.mxu0 0.0
          %2155 = vmatpush1.xpose.msra.mxu0 0.0
          %2156 = vmatprep.subr.mxu0 0.0
          %2157 = vmatpush1.xpose.msra.mxu0 0.0
          %2158 = vmatprep.subr.mxu0 0.0
          %2159 = vmatpush1.xpose.msra.mxu0 0.0
          %2160 = vmatprep.subr.mxu0 0.0
          %2161 = vmatpush1.xpose.msra.mxu0 0.0
          %2162 = vmatprep.subr.mxu0 0.0
          %2163 = vmatpush1.xpose.msra.mxu0 0.0
          %2164 = vmatprep.subr.mxu0 0.0
          %2165 = vmatpush1.xpose.msra.mxu0 0.0
          %2166 = vmatprep.subr.mxu0 0.0
          %2167 = vmatpush1.xpose.msra.mxu0 0.0
          %2168 = vmatprep.subr.mxu0 0.0
          %2169 = vmatpush1.xpose.msra.mxu0 0.0
          %2170 = vmatprep.mubr.f32.mxu0 0.0
          %2171 = vmatmul.mubr.f32.gmra.mrb[0].mxu0 %v2011
          %v2172 = vpop.f32.mrb[0].mxu0
          %v2173 = vadd.f32 0.0, %v2172
          %v2174 = vpop.f32.mrb[0].mxu0
          %2175 = vmatprep.mubr.f32.mxu0 0.0
          %2176 = vmatmul.mubr.f32.gmra.mrb[0].mxu0 %v2014
          %v2177 = vpop.f32.mrb[0].mxu0
          %v2178 = vadd.f32 0.0, %v2177
          %v2179 = vpop.f32.mrb[0].mxu0
          %2180 = vmatprep.mubr.f32.mxu0 0.0
          %2181 = vmatmul.mubr.f32.gmra.mrb[0].mxu0 %v2017
          %v2182 = vpop.f32.mrb[0].mxu0
          %v2183 = vadd.f32 0.0, %v2182
          %v2184 = vpop.f32.mrb[0].mxu0
          %2185 = vmatprep.mubr.f32.mxu0 0.0
          %2186 = vmatmul.mubr.f32.gmra.mrb[0].mxu0 %v2020
          %v2187 = vpop.f32.mrb[0].mxu0
          %v2188 = vadd.f32 0.0, %v2187
          %v2189 = vpop.f32.mrb[0].mxu0
          %2190 = vmatprep.mubr.f32.mxu0 0.0
          %2191 = vmatmul.mubr.f32.gmra.mrb[0].mxu0 %v2023
          %v2192 = vpop.f32.mrb[0].mxu0
          %v2193 = vadd.f32 0.0, %v2192
          %v2194 = vpop.f32.mrb[0].mxu0
          %2195 = vmatprep.mubr.f32.mxu0 0.0
          %2196 = vmatmul.mubr.f32.gmra.mrb[0].mxu0 %v2026
          %v2197 = vpop.f32.mrb[0].mxu0
          %v2198 = vadd.f32 0.0, %v2197
          %v2199 = vpop.f32.mrb[0].mxu0
          %2200 = vmatprep.mubr.f32.mxu0 0.0
          %2201 = vmatmul.mubr.f32.gmra.mrb[0].mxu0 %v2029
          %v2202 = vpop.f32.mrb[0].mxu0
          %v2203 = vadd.f32 0.0, %v2202
          %v2204 = vpop.f32.mrb[0].mxu0
          %2205 = vmatprep.mubr.f32.mxu0 0.0
          %2206 = vmatmul.mubr.f32.gmra.mrb[0].mxu0 %v2032
          %v2207 = vpop.f32.mrb[0].mxu0
          %v2208 = vadd.f32 0.0, %v2207
          %v2209 = vpop.f32.mrb[0].mxu0
          %2210 = vmatprep.mubr.f32.mxu0 0.0
          %2211 = vmatmul.mubr.f32.gmra.mrb[0].mxu0 %v2035
          %v2212 = vpop.f32.mrb[0].mxu0
          %v2213 = vadd.f32 0.0, %v2212
          %v2214 = vpop.f32.mrb[0].mxu0
          %2215 = vmatprep.mubr.f32.mxu0 0.0
          %2216 = vmatmul.mubr.f32.gmra.mrb[0].mxu0 %v2038
          %v2217 = vpop.f32.mrb[0].mxu0
          %v2218 = vadd.f32 0.0, %v2217
          %v2219 = vpop.f32.mrb[0].mxu0
          %2220 = vmatprep.mubr.f32.mxu0 0.0
          %2221 = vmatmul.mubr.f32.gmra.mrb[0].mxu0 %v2041
          %v2222 = vpop.f32.mrb[0].mxu0
          %v2223 = vadd.f32 0.0, %v2222
          %v2224 = vpop.f32.mrb[0].mxu0
          %2225 = vmatprep.mubr.f32.mxu0 0.0
          %2226 = vmatmul.mubr.f32.gmra.mrb[0].mxu0 %v2044
          %v2227 = vpop.f32.mrb[0].mxu0
          %v2228 = vadd.f32 0.0, %v2227
          %v2229 = vpop.f32.mrb[0].mxu0
          %2230 = vmatprep.mubr.f32.mxu0 0.0
          %2231 = vmatmul.mubr.f32.gmra.mrb[0].mxu0 %v2047
          %v2232 = vpop.f32.mrb[0].mxu0
          %v2233 = vadd.f32 0.0, %v2232
          %v2234 = vpop.f32.mrb[0].mxu0
          %2235 = vmatprep.mubr.f32.mxu0 0.0
          %2236 = vmatmul.mubr.f32.gmra.mrb[0].mxu0 %v2050
          %v2237 = vpop.f32.mrb[0].mxu0
          %v2238 = vadd.f32 0.0, %v2237
          %v2239 = vpop.f32.mrb[0].mxu0
          %2240 = vmatprep.mubr.f32.mxu0 0.0
          %2241 = vmatmul.mubr.f32.gmra.mrb[0].mxu0 %v2053
          %v2242 = vpop.f32.mrb[0].mxu0
          %v2243 = vadd.f32 0.0, %v2242
          %v2244 = vpop.f32.mrb[0].mxu0
          %2245 = vmatprep.mubr.f32.mxu0 0.0
          %2246 = vmatmul.mubr.f32.gmra.mrb[0].mxu0 %v2056
          %v2247 = vpop.f32.mrb[0].mxu0
          %v2248 = vadd.f32 0.0, %v2247
          %v2249 = vpop.f32.mrb[0].mxu0
          %2250 = vdwg.mxu0
          %v2252 = vsel %vm1527, %v1447, 0
          %v2255 = vsel %vm1527, %v1448, 0
          %v2258 = vsel %vm1527, %v1449, 0
          %v2261 = vsel %vm1527, %v1450, 0
          %v2264 = vsel %vm1527, %v1451, 0
          %v2267 = vsel %vm1527, %v1452, 0
          %v2270 = vsel %vm1527, %v1453, 0
          %v2273 = vsel %vm1527, %v1454, 0
          %v2276 = vsel %vm1527, %v1455, 0
          %v2279 = vsel %vm1527, %v1456, 0
          %v2282 = vsel %vm1527, %v1457, 0
          %v2285 = vsel %vm1527, %v1458, 0
          %v2288 = vsel %vm1527, %v1459, 0
          %v2291 = vsel %vm1527, %v1460, 0
          %v2294 = vsel %vm1527, %v1461, 0
          %v2297 = vsel %vm1527, %v1462, 0
          %v2300 = vsel %vm1527, %v1511, 0
          %v2303 = vsel %vm1527, %v1512, 0
          %v2306 = vsel %vm1527, %v1513, 0
          %v2309 = vsel %vm1527, %v1514, 0
          %v2312 = vsel %vm1527, %v1515, 0
          %v2315 = vsel %vm1527, %v1516, 0
          %v2318 = vsel %vm1527, %v1517, 0
          %v2321 = vsel %vm1527, %v1518, 0
          %v2324 = vsel %vm1527, %v1519, 0
          %v2327 = vsel %vm1527, %v1520, 0
          %v2330 = vsel %vm1527, %v1521, 0
          %v2333 = vsel %vm1527, %v1522, 0
          %v2336 = vsel %vm1527, %v1523, 0
          %v2339 = vsel %vm1527, %v1524, 0
          %v2342 = vsel %vm1527, %v1525, 0
          %v2345 = vsel %vm1527, %v1526, 0
          %2347 = vmatprep.subr.mxu0 0.0
          %2348 = vmatpush1.xpose.msra.mxu0 %v2300
          %2349 = vmatprep.subr.mxu0 0.0
          %2350 = vmatpush1.xpose.msra.mxu0 %v2303
          %2351 = vmatprep.subr.mxu0 0.0
          %2352 = vmatpush1.xpose.msra.mxu0 %v2306
          %2353 = vmatprep.subr.mxu0 0.0
          %2354 = vmatpush1.xpose.msra.mxu0 %v2309
          %2355 = vmatprep.subr.mxu0 0.0
          %2356 = vmatpush1.xpose.msra.mxu0 %v2312
          %2357 = vmatprep.subr.mxu0 0.0
          %2358 = vmatpush1.xpose.msra.mxu0 %v2315
          %2359 = vmatprep.subr.mxu0 0.0
          %2360 = vmatpush1.xpose.msra.mxu0 %v2318
          %2361 = vmatprep.subr.mxu0 0.0
          %2362 = vmatpush1.xpose.msra.mxu0 %v2321
          %2363 = vmatprep.subr.mxu0 0.0
          %2364 = vmatpush1.xpose.msra.mxu0 %v2324
          %2365 = vmatprep.subr.mxu0 0.0
          %2366 = vmatpush1.xpose.msra.mxu0 %v2327
          %2367 = vmatprep.subr.mxu0 0.0
          %2368 = vmatpush1.xpose.msra.mxu0 %v2330
          %2369 = vmatprep.subr.mxu0 0.0
          %2370 = vmatpush1.xpose.msra.mxu0 %v2333
          %2371 = vmatprep.subr.mxu0 0.0
          %2372 = vmatpush1.xpose.msra.mxu0 %v2336
          %2373 = vmatprep.subr.mxu0 0.0
          %2374 = vmatpush1.xpose.msra.mxu0 %v2339
          %2375 = vmatprep.subr.mxu0 0.0
          %2376 = vmatpush1.xpose.msra.mxu0 %v2342
          %2377 = vmatprep.subr.mxu0 0.0
          %2378 = vmatpush1.xpose.msra.mxu0 %v2345
          %2379 = vmatprep.subr.mxu0 0.0
          %2380 = vmatpush1.xpose.msra.mxu0 0.0
          %2381 = vmatprep.subr.mxu0 0.0
          %2382 = vmatpush1.xpose.msra.mxu0 0.0
          %2383 = vmatprep.subr.mxu0 0.0
          %2384 = vmatpush1.xpose.msra.mxu0 0.0
          %2385 = vmatprep.subr.mxu0 0.0
          %2386 = vmatpush1.xpose.msra.mxu0 0.0
          %2387 = vmatprep.subr.mxu0 0.0
          %2388 = vmatpush1.xpose.msra.mxu0 0.0
          %2389 = vmatprep.subr.mxu0 0.0
          %2390 = vmatpush1.xpose.msra.mxu0 0.0
          %2391 = vmatprep.subr.mxu0 0.0
          %2392 = vmatpush1.xpose.msra.mxu0 0.0
          %2393 = vmatprep.subr.mxu0 0.0
          %2394 = vmatpush1.xpose.msra.mxu0 0.0
          %2395 = vmatprep.subr.mxu0 0.0
          %2396 = vmatpush1.xpose.msra.mxu0 0.0
          %2397 = vmatprep.subr.mxu0 0.0
          %2398 = vmatpush1.xpose.msra.mxu0 0.0
          %2399 = vmatprep.subr.mxu0 0.0
          %2400 = vmatpush1.xpose.msra.mxu0 0.0
          %2401 = vmatprep.subr.mxu0 0.0
          %2402 = vmatpush1.xpose.msra.mxu0 0.0
          %2403 = vmatprep.subr.mxu0 0.0
          %2404 = vmatpush1.xpose.msra.mxu0 0.0
          %2405 = vmatprep.subr.mxu0 0.0
          %2406 = vmatpush1.xpose.msra.mxu0 0.0
          %2407 = vmatprep.subr.mxu0 0.0
          %2408 = vmatpush1.xpose.msra.mxu0 0.0
          %2409 = vmatprep.subr.mxu0 0.0
          %2410 = vmatpush1.xpose.msra.mxu0 0.0
          %2411 = vmatprep.mubr.f32.mxu0 0.0
          %2412 = vmatmul.mubr.f32.gmra.mrb[0].mxu0 %v2252
          %v2413 = vpop.f32.mrb[0].mxu0
          %v2414 = vadd.f32 0.0, %v2413
          %v2415 = vpop.f32.mrb[0].mxu0
          %2416 = vmatprep.mubr.f32.mxu0 0.0
          %2417 = vmatmul.mubr.f32.gmra.mrb[0].mxu0 %v2255
          %v2418 = vpop.f32.mrb[0].mxu0
          %v2419 = vadd.f32 0.0, %v2418
          %v2420 = vpop.f32.mrb[0].mxu0
          %2421 = vmatprep.mubr.f32.mxu0 0.0
          %2422 = vmatmul.mubr.f32.gmra.mrb[0].mxu0 %v2258
          %v2423 = vpop.f32.mrb[0].mxu0
          %v2424 = vadd.f32 0.0, %v2423
          %v2425 = vpop.f32.mrb[0].mxu0
          %2426 = vmatprep.mubr.f32.mxu0 0.0
          %2427 = vmatmul.mubr.f32.gmra.mrb[0].mxu0 %v2261
          %v2428 = vpop.f32.mrb[0].mxu0
          %v2429 = vadd.f32 0.0, %v2428
          %v2430 = vpop.f32.mrb[0].mxu0
          %2431 = vmatprep.mubr.f32.mxu0 0.0
          %2432 = vmatmul.mubr.f32.gmra.mrb[0].mxu0 %v2264
          %v2433 = vpop.f32.mrb[0].mxu0
          %v2434 = vadd.f32 0.0, %v2433
          %v2435 = vpop.f32.mrb[0].mxu0
          %2436 = vmatprep.mubr.f32.mxu0 0.0
          %2437 = vmatmul.mubr.f32.gmra.mrb[0].mxu0 %v2267
          %v2438 = vpop.f32.mrb[0].mxu0
          %v2439 = vadd.f32 0.0, %v2438
          %v2440 = vpop.f32.mrb[0].mxu0
          %2441 = vmatprep.mubr.f32.mxu0 0.0
          %2442 = vmatmul.mubr.f32.gmra.mrb[0].mxu0 %v2270
          %v2443 = vpop.f32.mrb[0].mxu0
          %v2444 = vadd.f32 0.0, %v2443
          %v2445 = vpop.f32.mrb[0].mxu0
          %2446 = vmatprep.mubr.f32.mxu0 0.0
          %2447 = vmatmul.mubr.f32.gmra.mrb[0].mxu0 %v2273
          %v2448 = vpop.f32.mrb[0].mxu0
          %v2449 = vadd.f32 0.0, %v2448
          %v2450 = vpop.f32.mrb[0].mxu0
          %2451 = vmatprep.mubr.f32.mxu0 0.0
          %2452 = vmatmul.mubr.f32.gmra.mrb[0].mxu0 %v2276
          %v2453 = vpop.f32.mrb[0].mxu0
          %v2454 = vadd.f32 0.0, %v2453
          %v2455 = vpop.f32.mrb[0].mxu0
          %2456 = vmatprep.mubr.f32.mxu0 0.0
          %2457 = vmatmul.mubr.f32.gmra.mrb[0].mxu0 %v2279
          %v2458 = vpop.f32.mrb[0].mxu0
          %v2459 = vadd.f32 0.0, %v2458
          %v2460 = vpop.f32.mrb[0].mxu0
          %2461 = vmatprep.mubr.f32.mxu0 0.0
          %2462 = vmatmul.mubr.f32.gmra.mrb[0].mxu0 %v2282
          %v2463 = vpop.f32.mrb[0].mxu0
          %v2464 = vadd.f32 0.0, %v2463
          %v2465 = vpop.f32.mrb[0].mxu0
          %2466 = vmatprep.mubr.f32.mxu0 0.0
          %2467 = vmatmul.mubr.f32.gmra.mrb[0].mxu0 %v2285
          %v2468 = vpop.f32.mrb[0].mxu0
          %v2469 = vadd.f32 0.0, %v2468
          %v2470 = vpop.f32.mrb[0].mxu0
          %2471 = vmatprep.mubr.f32.mxu0 0.0
          %2472 = vmatmul.mubr.f32.gmra.mrb[0].mxu0 %v2288
          %v2473 = vpop.f32.mrb[0].mxu0
          %v2474 = vadd.f32 0.0, %v2473
          %v2475 = vpop.f32.mrb[0].mxu0
          %2476 = vmatprep.mubr.f32.mxu0 0.0
          %2477 = vmatmul.mubr.f32.gmra.mrb[0].mxu0 %v2291
          %v2478 = vpop.f32.mrb[0].mxu0
          %v2479 = vadd.f32 0.0, %v2478
          %v2480 = vpop.f32.mrb[0].mxu0
          %2481 = vmatprep.mubr.f32.mxu0 0.0
          %2482 = vmatmul.mubr.f32.gmra.mrb[0].mxu0 %v2294
          %v2483 = vpop.f32.mrb[0].mxu0
          %v2484 = vadd.f32 0.0, %v2483
          %v2485 = vpop.f32.mrb[0].mxu0
          %2486 = vmatprep.mubr.f32.mxu0 0.0
          %2487 = vmatmul.mubr.f32.gmra.mrb[0].mxu0 %v2297
          %v2488 = vpop.f32.mrb[0].mxu0
          %v2489 = vadd.f32 0.0, %v2488
          %v2490 = vpop.f32.mrb[0].mxu0
          %2491 = vdwg.mxu0
          %v2492 = vmul.f32 %v1691, %v1383
          %v2493 = vmul.f32 %v1696, %v1384
          %v2494 = vmul.f32 %v1701, %v1385
          %v2495 = vmul.f32 %v1706, %v1386
          %v2496 = vmul.f32 %v1711, %v1387
          %v2497 = vmul.f32 %v1716, %v1388
          %v2498 = vmul.f32 %v1721, %v1389
          %v2499 = vmul.f32 %v1726, %v1390
          %v2500 = vmul.f32 %v1731, %v1391
          %v2501 = vmul.f32 %v1736, %v1392
          %v2502 = vmul.f32 %v1741, %v1393
          %v2503 = vmul.f32 %v1746, %v1394
          %v2504 = vmul.f32 %v1751, %v1395
          %v2505 = vmul.f32 %v1756, %v1396
          %v2506 = vmul.f32 %v1761, %v1397
          %v2507 = vmul.f32 %v1766, %v1398
          %v2508 = vmul.f32 %v1932, %v1383
          %v2509 = vmul.f32 %v1937, %v1384
          %v2510 = vmul.f32 %v1942, %v1385
          %v2511 = vmul.f32 %v1947, %v1386
          %v2512 = vmul.f32 %v1952, %v1387
          %v2513 = vmul.f32 %v1957, %v1388
          %v2514 = vmul.f32 %v1962, %v1389
          %v2515 = vmul.f32 %v1967, %v1390
          %v2516 = vmul.f32 %v1972, %v1391
          %v2517 = vmul.f32 %v1977, %v1392
          %v2518 = vmul.f32 %v1982, %v1393
          %v2519 = vmul.f32 %v1987, %v1394
          %v2520 = vmul.f32 %v1992, %v1395
          %v2521 = vmul.f32 %v1997, %v1396
          %v2522 = vmul.f32 %v2002, %v1397
          %v2523 = vmul.f32 %v2007, %v1398
          %v2524 = vmul.f32 %v2173, %v1383
          %v2525 = vmul.f32 %v2178, %v1384
          %v2526 = vmul.f32 %v2183, %v1385
          %v2527 = vmul.f32 %v2188, %v1386
          %v2528 = vmul.f32 %v2193, %v1387
          %v2529 = vmul.f32 %v2198, %v1388
          %v2530 = vmul.f32 %v2203, %v1389
          %v2531 = vmul.f32 %v2208, %v1390
          %v2532 = vmul.f32 %v2213, %v1391
          %v2533 = vmul.f32 %v2218, %v1392
          %v2534 = vmul.f32 %v2223, %v1393
          %v2535 = vmul.f32 %v2228, %v1394
          %v2536 = vmul.f32 %v2233, %v1395
          %v2537 = vmul.f32 %v2238, %v1396
          %v2538 = vmul.f32 %v2243, %v1397
          %v2539 = vmul.f32 %v2248, %v1398
          %v2540 = vmul.f32 %v2414, %v1383
          %v2541 = vmul.f32 %v2419, %v1384
          %v2542 = vmul.f32 %v2424, %v1385
          %v2543 = vmul.f32 %v2429, %v1386
          %v2544 = vmul.f32 %v2434, %v1387
          %v2545 = vmul.f32 %v2439, %v1388
          %v2546 = vmul.f32 %v2444, %v1389
          %v2547 = vmul.f32 %v2449, %v1390
          %v2548 = vmul.f32 %v2454, %v1391
          %v2549 = vmul.f32 %v2459, %v1392
          %v2550 = vmul.f32 %v2464, %v1393
          %v2551 = vmul.f32 %v2469, %v1394
          %v2552 = vmul.f32 %v2474, %v1395
          %v2553 = vmul.f32 %v2479, %v1396
          %v2554 = vmul.f32 %v2484, %v1397
          %v2555 = vmul.f32 %v2489, %v1398
          %v2556 = vmax.f32 %v2492, -5.0
          %v2557 = vmax.f32 %v2493, -5.0
          %v2558 = vmax.f32 %v2494, -5.0
          %v2559 = vmax.f32 %v2495, -5.0
          %v2560 = vmax.f32 %v2496, -5.0
          %v2561 = vmax.f32 %v2497, -5.0
          %v2562 = vmax.f32 %v2498, -5.0
          %v2563 = vmax.f32 %v2499, -5.0
          %v2564 = vmax.f32 %v2500, -5.0
          %v2565 = vmax.f32 %v2501, -5.0
          %v2566 = vmax.f32 %v2502, -5.0
          %v2567 = vmax.f32 %v2503, -5.0
          %v2568 = vmax.f32 %v2504, -5.0
          %v2569 = vmax.f32 %v2505, -5.0
          %v2570 = vmax.f32 %v2506, -5.0
          %v2571 = vmax.f32 %v2507, -5.0
          %v2572 = vmax.f32 %v2508, -5.0
          %v2573 = vmax.f32 %v2509, -5.0
          %v2574 = vmax.f32 %v2510, -5.0
          %v2575 = vmax.f32 %v2511, -5.0
          %v2576 = vmax.f32 %v2512, -5.0
          %v2577 = vmax.f32 %v2513, -5.0
          %v2578 = vmax.f32 %v2514, -5.0
          %v2579 = vmax.f32 %v2515, -5.0
          %v2580 = vmax.f32 %v2516, -5.0
          %v2581 = vmax.f32 %v2517, -5.0
          %v2582 = vmax.f32 %v2518, -5.0
          %v2583 = vmax.f32 %v2519, -5.0
          %v2584 = vmax.f32 %v2520, -5.0
          %v2585 = vmax.f32 %v2521, -5.0
          %v2586 = vmax.f32 %v2522, -5.0
          %v2587 = vmax.f32 %v2523, -5.0
          %v2588 = vmax.f32 %v2524, -5.0
          %v2589 = vmax.f32 %v2525, -5.0
          %v2590 = vmax.f32 %v2526, -5.0
          %v2591 = vmax.f32 %v2527, -5.0
          %v2592 = vmax.f32 %v2528, -5.0
          %v2593 = vmax.f32 %v2529, -5.0
          %v2594 = vmax.f32 %v2530, -5.0
          %v2595 = vmax.f32 %v2531, -5.0
          %v2596 = vmax.f32 %v2532, -5.0
          %v2597 = vmax.f32 %v2533, -5.0
          %v2598 = vmax.f32 %v2534, -5.0
          %v2599 = vmax.f32 %v2535, -5.0
          %v2600 = vmax.f32 %v2536, -5.0
          %v2601 = vmax.f32 %v2537, -5.0
          %v2602 = vmax.f32 %v2538, -5.0
          %v2603 = vmax.f32 %v2539, -5.0
          %v2604 = vmax.f32 %v2540, -5.0
          %v2605 = vmax.f32 %v2541, -5.0
          %v2606 = vmax.f32 %v2542, -5.0
          %v2607 = vmax.f32 %v2543, -5.0
          %v2608 = vmax.f32 %v2544, -5.0
          %v2609 = vmax.f32 %v2545, -5.0
          %v2610 = vmax.f32 %v2546, -5.0
          %v2611 = vmax.f32 %v2547, -5.0
          %v2612 = vmax.f32 %v2548, -5.0
          %v2613 = vmax.f32 %v2549, -5.0
          %v2614 = vmax.f32 %v2550, -5.0
          %v2615 = vmax.f32 %v2551, -5.0
          %v2616 = vmax.f32 %v2552, -5.0
          %v2617 = vmax.f32 %v2553, -5.0
          %v2618 = vmax.f32 %v2554, -5.0
          %v2619 = vmax.f32 %v2555, -5.0
          %v2620 = vmin.f32 %v2556, 5.0
          %v2621 = vmin.f32 %v2557, 5.0
          %v2622 = vmin.f32 %v2558, 5.0
          %v2623 = vmin.f32 %v2559, 5.0
          %v2624 = vmin.f32 %v2560, 5.0
          %v2625 = vmin.f32 %v2561, 5.0
          %v2626 = vmin.f32 %v2562, 5.0
          %v2627 = vmin.f32 %v2563, 5.0
          %v2628 = vmin.f32 %v2564, 5.0
          %v2629 = vmin.f32 %v2565, 5.0
          %v2630 = vmin.f32 %v2566, 5.0
          %v2631 = vmin.f32 %v2567, 5.0
          %v2632 = vmin.f32 %v2568, 5.0
          %v2633 = vmin.f32 %v2569, 5.0
          %v2634 = vmin.f32 %v2570, 5.0
          %v2635 = vmin.f32 %v2571, 5.0
          %v2636 = vmin.f32 %v2572, 5.0
          %v2637 = vmin.f32 %v2573, 5.0
          %v2638 = vmin.f32 %v2574, 5.0
          %v2639 = vmin.f32 %v2575, 5.0
          %v2640 = vmin.f32 %v2576, 5.0
          %v2641 = vmin.f32 %v2577, 5.0
          %v2642 = vmin.f32 %v2578, 5.0
          %v2643 = vmin.f32 %v2579, 5.0
          %v2644 = vmin.f32 %v2580, 5.0
          %v2645 = vmin.f32 %v2581, 5.0
          %v2646 = vmin.f32 %v2582, 5.0
          %v2647 = vmin.f32 %v2583, 5.0
          %v2648 = vmin.f32 %v2584, 5.0
          %v2649 = vmin.f32 %v2585, 5.0
          %v2650 = vmin.f32 %v2586, 5.0
          %v2651 = vmin.f32 %v2587, 5.0
          %v2652 = vmin.f32 %v2588, 5.0
          %v2653 = vmin.f32 %v2589, 5.0
          %v2654 = vmin.f32 %v2590, 5.0
          %v2655 = vmin.f32 %v2591, 5.0
          %v2656 = vmin.f32 %v2592, 5.0
          %v2657 = vmin.f32 %v2593, 5.0
          %v2658 = vmin.f32 %v2594, 5.0
          %v2659 = vmin.f32 %v2595, 5.0
          %v2660 = vmin.f32 %v2596, 5.0
          %v2661 = vmin.f32 %v2597, 5.0
          %v2662 = vmin.f32 %v2598, 5.0
          %v2663 = vmin.f32 %v2599, 5.0
          %v2664 = vmin.f32 %v2600, 5.0
          %v2665 = vmin.f32 %v2601, 5.0
          %v2666 = vmin.f32 %v2602, 5.0
          %v2667 = vmin.f32 %v2603, 5.0
          %v2668 = vmin.f32 %v2604, 5.0
          %v2669 = vmin.f32 %v2605, 5.0
          %v2670 = vmin.f32 %v2606, 5.0
          %v2671 = vmin.f32 %v2607, 5.0
          %v2672 = vmin.f32 %v2608, 5.0
          %v2673 = vmin.f32 %v2609, 5.0
          %v2674 = vmin.f32 %v2610, 5.0
          %v2675 = vmin.f32 %v2611, 5.0
          %v2676 = vmin.f32 %v2612, 5.0
          %v2677 = vmin.f32 %v2613, 5.0
          %v2678 = vmin.f32 %v2614, 5.0
          %v2679 = vmin.f32 %v2615, 5.0
          %v2680 = vmin.f32 %v2616, 5.0
          %v2681 = vmin.f32 %v2617, 5.0
          %v2682 = vmin.f32 %v2618, 5.0
          %v2683 = vmin.f32 %v2619, 5.0
          %vm2684 = vcmp.ne.f32.partialorder %v1383, 0.0
          %vm2685 = vcmp.ne.f32.partialorder %v1384, 0.0
          %vm2686 = vcmp.ne.f32.partialorder %v1385, 0.0
          %vm2687 = vcmp.ne.f32.partialorder %v1386, 0.0
          %vm2688 = vcmp.ne.f32.partialorder %v1387, 0.0
          %vm2689 = vcmp.ne.f32.partialorder %v1388, 0.0
          %vm2690 = vcmp.ne.f32.partialorder %v1389, 0.0
          %vm2691 = vcmp.ne.f32.partialorder %v1390, 0.0
          %vm2692 = vcmp.ne.f32.partialorder %v1391, 0.0
          %vm2693 = vcmp.ne.f32.partialorder %v1392, 0.0
          %vm2694 = vcmp.ne.f32.partialorder %v1393, 0.0
          %vm2695 = vcmp.ne.f32.partialorder %v1394, 0.0
          %vm2696 = vcmp.ne.f32.partialorder %v1395, 0.0
          %vm2697 = vcmp.ne.f32.partialorder %v1396, 0.0
          %vm2698 = vcmp.ne.f32.partialorder %v1397, 0.0
          %vm2699 = vcmp.ne.f32.partialorder %v1398, 0.0
          %v2700 = vmul.f32 %v2620, 1.442695
          %v2701 = vpow.pop %v2700
          %v2702 = vmul.f32 %v2621, 1.442695
          %v2703 = vpow.pop %v2702
          %v2704 = vmul.f32 %v2622, 1.442695
          %v2705 = vpow.pop %v2704
          %v2706 = vmul.f32 %v2623, 1.442695
          %v2707 = vpow.pop %v2706
          %v2708 = vmul.f32 %v2624, 1.442695
          %v2709 = vpow.pop %v2708
          %v2710 = vmul.f32 %v2625, 1.442695
          %v2711 = vpow.pop %v2710
          %v2712 = vmul.f32 %v2626, 1.442695
          %v2713 = vpow.pop %v2712
          %v2714 = vmul.f32 %v2627, 1.442695
          %v2715 = vpow.pop %v2714
          %v2716 = vmul.f32 %v2628, 1.442695
          %v2717 = vpow.pop %v2716
          %v2718 = vmul.f32 %v2629, 1.442695
          %v2719 = vpow.pop %v2718
          %v2720 = vmul.f32 %v2630, 1.442695
          %v2721 = vpow.pop %v2720
          %v2722 = vmul.f32 %v2631, 1.442695
          %v2723 = vpow.pop %v2722
          %v2724 = vmul.f32 %v2632, 1.442695
          %v2725 = vpow.pop %v2724
          %v2726 = vmul.f32 %v2633, 1.442695
          %v2727 = vpow.pop %v2726
          %v2728 = vmul.f32 %v2634, 1.442695
          %v2729 = vpow.pop %v2728
          %v2730 = vmul.f32 %v2635, 1.442695
          %v2731 = vpow.pop %v2730
          %v2732 = vmul.f32 %v2636, 1.442695
          %v2733 = vpow.pop %v2732
          %v2734 = vmul.f32 %v2637, 1.442695
          %v2735 = vpow.pop %v2734
          %v2736 = vmul.f32 %v2638, 1.442695
          %v2737 = vpow.pop %v2736
          %v2738 = vmul.f32 %v2639, 1.442695
          %v2739 = vpow.pop %v2738
          %v2740 = vmul.f32 %v2640, 1.442695
          %v2741 = vpow.pop %v2740
          %v2742 = vmul.f32 %v2641, 1.442695
          %v2743 = vpow.pop %v2742
          %v2744 = vmul.f32 %v2642, 1.442695
          %v2745 = vpow.pop %v2744
          %v2746 = vmul.f32 %v2643, 1.442695
          %v2747 = vpow.pop %v2746
          %v2748 = vmul.f32 %v2644, 1.442695
          %v2749 = vpow.pop %v2748
          %v2750 = vmul.f32 %v2645, 1.442695
          %v2751 = vpow.pop %v2750
          %v2752 = vmul.f32 %v2646, 1.442695
          %v2753 = vpow.pop %v2752
          %v2754 = vmul.f32 %v2647, 1.442695
          %v2755 = vpow.pop %v2754
          %v2756 = vmul.f32 %v2648, 1.442695
          %v2757 = vpow.pop %v2756
          %v2758 = vmul.f32 %v2649, 1.442695
          %v2759 = vpow.pop %v2758
          %v2760 = vmul.f32 %v2650, 1.442695
          %v2761 = vpow.pop %v2760
          %v2762 = vmul.f32 %v2651, 1.442695
          %v2763 = vpow.pop %v2762
          %v2764 = vmul.f32 %v2652, 1.442695
          %v2765 = vpow.pop %v2764
          %v2766 = vmul.f32 %v2653, 1.442695
          %v2767 = vpow.pop %v2766
          %v2768 = vmul.f32 %v2654, 1.442695
          %v2769 = vpow.pop %v2768
          %v2770 = vmul.f32 %v2655, 1.442695
          %v2771 = vpow.pop %v2770
          %v2772 = vmul.f32 %v2656, 1.442695
          %v2773 = vpow.pop %v2772
          %v2774 = vmul.f32 %v2657, 1.442695
          %v2775 = vpow.pop %v2774
          %v2776 = vmul.f32 %v2658, 1.442695
          %v2777 = vpow.pop %v2776
          %v2778 = vmul.f32 %v2659, 1.442695
          %v2779 = vpow.pop %v2778
          %v2780 = vmul.f32 %v2660, 1.442695
          %v2781 = vpow.pop %v2780
          %v2782 = vmul.f32 %v2661, 1.442695
          %v2783 = vpow.pop %v2782
          %v2784 = vmul.f32 %v2662, 1.442695
          %v2785 = vpow.pop %v2784
          %v2786 = vmul.f32 %v2663, 1.442695
          %v2787 = vpow.pop %v2786
          %v2788 = vmul.f32 %v2664, 1.442695
          %v2789 = vpow.pop %v2788
          %v2790 = vmul.f32 %v2665, 1.442695
          %v2791 = vpow.pop %v2790
          %v2792 = vmul.f32 %v2666, 1.442695
          %v2793 = vpow.pop %v2792
          %v2794 = vmul.f32 %v2667, 1.442695
          %v2795 = vpow.pop %v2794
          %v2796 = vmul.f32 %v2668, 1.442695
          %v2797 = vpow.pop %v2796
          %v2798 = vmul.f32 %v2669, 1.442695
          %v2799 = vpow.pop %v2798
          %v2800 = vmul.f32 %v2670, 1.442695
          %v2801 = vpow.pop %v2800
          %v2802 = vmul.f32 %v2671, 1.442695
          %v2803 = vpow.pop %v2802
          %v2804 = vmul.f32 %v2672, 1.442695
          %v2805 = vpow.pop %v2804
          %v2806 = vmul.f32 %v2673, 1.442695
          %v2807 = vpow.pop %v2806
          %v2808 = vmul.f32 %v2674, 1.442695
          %v2809 = vpow.pop %v2808
          %v2810 = vmul.f32 %v2675, 1.442695
          %v2811 = vpow.pop %v2810
          %v2812 = vmul.f32 %v2676, 1.442695
          %v2813 = vpow.pop %v2812
          %v2814 = vmul.f32 %v2677, 1.442695
          %v2815 = vpow.pop %v2814
          %v2816 = vmul.f32 %v2678, 1.442695
          %v2817 = vpow.pop %v2816
          %v2818 = vmul.f32 %v2679, 1.442695
          %v2819 = vpow.pop %v2818
          %v2820 = vmul.f32 %v2680, 1.442695
          %v2821 = vpow.pop %v2820
          %v2822 = vmul.f32 %v2681, 1.442695
          %v2823 = vpow.pop %v2822
          %v2824 = vmul.f32 %v2682, 1.442695
          %v2825 = vpow.pop %v2824
          %v2826 = vmul.f32 %v2683, 1.442695
          %v2827 = vpow.pop %v2826
          %v2828 = vsel %vm2684, 1, 0
          %v2829 = vsel %vm2685, 1, 0
          %v2830 = vsel %vm2686, 1, 0
          %v2831 = vsel %vm2687, 1, 0
          %v2832 = vsel %vm2688, 1, 0
          %v2833 = vsel %vm2689, 1, 0
          %v2834 = vsel %vm2690, 1, 0
          %v2835 = vsel %vm2691, 1, 0
          %v2836 = vsel %vm2692, 1, 0
          %v2837 = vsel %vm2693, 1, 0
          %v2838 = vsel %vm2694, 1, 0
          %v2839 = vsel %vm2695, 1, 0
          %v2840 = vsel %vm2696, 1, 0
          %v2841 = vsel %vm2697, 1, 0
          %v2842 = vsel %vm2698, 1, 0
          %v2843 = vsel %vm2699, 1, 0
          %vm2844 = vcmp.eq.s32.totalorder %v2828, 1
          %vm2845 = vcmp.eq.s32.totalorder %v2829, 1
          %vm2846 = vcmp.eq.s32.totalorder %v2830, 1
          %vm2847 = vcmp.eq.s32.totalorder %v2831, 1
          %vm2848 = vcmp.eq.s32.totalorder %v2832, 1
          %vm2849 = vcmp.eq.s32.totalorder %v2833, 1
          %vm2850 = vcmp.eq.s32.totalorder %v2834, 1
          %vm2851 = vcmp.eq.s32.totalorder %v2835, 1
          %vm2852 = vcmp.eq.s32.totalorder %v2836, 1
          %vm2853 = vcmp.eq.s32.totalorder %v2837, 1
          %vm2854 = vcmp.eq.s32.totalorder %v2838, 1
          %vm2855 = vcmp.eq.s32.totalorder %v2839, 1
          %vm2856 = vcmp.eq.s32.totalorder %v2840, 1
          %vm2857 = vcmp.eq.s32.totalorder %v2841, 1
          %vm2858 = vcmp.eq.s32.totalorder %v2842, 1
          %vm2859 = vcmp.eq.s32.totalorder %v2843, 1
          %v2860 = vsel %vm2844, %v2701, 0.0
          %v2861 = vsel %vm2845, %v2703, 0.0
          %v2862 = vsel %vm2846, %v2705, 0.0
          %v2863 = vsel %vm2847, %v2707, 0.0
          %v2864 = vsel %vm2848, %v2709, 0.0
          %v2865 = vsel %vm2849, %v2711, 0.0
          %v2866 = vsel %vm2850, %v2713, 0.0
          %v2867 = vsel %vm2851, %v2715, 0.0
          %v2868 = vsel %vm2852, %v2717, 0.0
          %v2869 = vsel %vm2853, %v2719, 0.0
          %v2870 = vsel %vm2854, %v2721, 0.0
          %v2871 = vsel %vm2855, %v2723, 0.0
          %v2872 = vsel %vm2856, %v2725, 0.0
          %v2873 = vsel %vm2857, %v2727, 0.0
          %v2874 = vsel %vm2858, %v2729, 0.0
          %v2875 = vsel %vm2859, %v2731, 0.0
          %v2876 = vsel %vm2844, %v2733, 0.0
          %v2877 = vsel %vm2845, %v2735, 0.0
          %v2878 = vsel %vm2846, %v2737, 0.0
          %v2879 = vsel %vm2847, %v2739, 0.0
          %v2880 = vsel %vm2848, %v2741, 0.0
          %v2881 = vsel %vm2849, %v2743, 0.0
          %v2882 = vsel %vm2850, %v2745, 0.0
          %v2883 = vsel %vm2851, %v2747, 0.0
          %v2884 = vsel %vm2852, %v2749, 0.0
          %v2885 = vsel %vm2853, %v2751, 0.0
          %v2886 = vsel %vm2854, %v2753, 0.0
          %v2887 = vsel %vm2855, %v2755, 0.0
          %v2888 = vsel %vm2856, %v2757, 0.0
          %v2889 = vsel %vm2857, %v2759, 0.0
          %v2890 = vsel %vm2858, %v2761, 0.0
          %v2891 = vsel %vm2859, %v2763, 0.0
          %v2892 = vsel %vm2844, %v2765, 0.0
          %v2893 = vsel %vm2845, %v2767, 0.0
          %v2894 = vsel %vm2846, %v2769, 0.0
          %v2895 = vsel %vm2847, %v2771, 0.0
          %v2896 = vsel %vm2848, %v2773, 0.0
          %v2897 = vsel %vm2849, %v2775, 0.0
          %v2898 = vsel %vm2850, %v2777, 0.0
          %v2899 = vsel %vm2851, %v2779, 0.0
          %v2900 = vsel %vm2852, %v2781, 0.0
          %v2901 = vsel %vm2853, %v2783, 0.0
          %v2902 = vsel %vm2854, %v2785, 0.0
          %v2903 = vsel %vm2855, %v2787, 0.0
          %v2904 = vsel %vm2856, %v2789, 0.0
          %v2905 = vsel %vm2857, %v2791, 0.0
          %v2906 = vsel %vm2858, %v2793, 0.0
          %v2907 = vsel %vm2859, %v2795, 0.0
          %v2908 = vsel %vm2844, %v2797, 0.0
          %v2909 = vsel %vm2845, %v2799, 0.0
          %v2910 = vsel %vm2846, %v2801, 0.0
          %v2911 = vsel %vm2847, %v2803, 0.0
          %v2912 = vsel %vm2848, %v2805, 0.0
          %v2913 = vsel %vm2849, %v2807, 0.0
          %v2914 = vsel %vm2850, %v2809, 0.0
          %v2915 = vsel %vm2851, %v2811, 0.0
          %v2916 = vsel %vm2852, %v2813, 0.0
          %v2917 = vsel %vm2853, %v2815, 0.0
          %v2918 = vsel %vm2854, %v2817, 0.0
          %v2919 = vsel %vm2855, %v2819, 0.0
          %v2920 = vsel %vm2856, %v2821, 0.0
          %v2921 = vsel %vm2857, %v2823, 0.0
          %v2922 = vsel %vm2858, %v2825, 0.0
          %v2923 = vsel %vm2859, %v2827, 0.0
          %v2924 = vld [vmem:[#allocation2] sm:$0xff]
          %v2925 = vld [vmem:[#allocation2 + $0x8] sm:$0xff]
          %v2926 = vld [vmem:[#allocation2 + $0x10] sm:$0xff]
          %v2927 = vld [vmem:[#allocation2 + $0x18] sm:$0xff]
          %v2928 = vld [vmem:[#allocation2 + $0x20] sm:$0xff]
          %v2929 = vld [vmem:[#allocation2 + $0x28] sm:$0xff]
          %v2930 = vld [vmem:[#allocation2 + $0x30] sm:$0xff]
          %v2931 = vld [vmem:[#allocation2 + $0x38] sm:$0xff]
          %v2932 = vld [vmem:[#allocation2 + $0x40] sm:$0xff]
          %v2933 = vld [vmem:[#allocation2 + $0x48] sm:$0xff]
          %v2934 = vld [vmem:[#allocation2 + $0x50] sm:$0xff]
          %v2935 = vld [vmem:[#allocation2 + $0x58] sm:$0xff]
          %v2936 = vld [vmem:[#allocation2 + $0x60] sm:$0xff]
          %v2937 = vld [vmem:[#allocation2 + $0x68] sm:$0xff]
          %v2938 = vld [vmem:[#allocation2 + $0x70] sm:$0xff]
          %v2939 = vld [vmem:[#allocation2 + $0x78] sm:$0xff]
          %v2940 = vld [vmem:[#allocation2 + $0x80] sm:$0xff]
          %v2941 = vld [vmem:[#allocation2 + $0x88] sm:$0xff]
          %v2942 = vld [vmem:[#allocation2 + $0x90] sm:$0xff]
          %v2943 = vld [vmem:[#allocation2 + $0x98] sm:$0xff]
          %v2944 = vld [vmem:[#allocation2 + $0xa0] sm:$0xff]
          %v2945 = vld [vmem:[#allocation2 + $0xa8] sm:$0xff]
          %v2946 = vld [vmem:[#allocation2 + $0xb0] sm:$0xff]
          %v2947 = vld [vmem:[#allocation2 + $0xb8] sm:$0xff]
          %v2948 = vld [vmem:[#allocation2 + $0xc0] sm:$0xff]
          %v2949 = vld [vmem:[#allocation2 + $0xc8] sm:$0xff]
          %v2950 = vld [vmem:[#allocation2 + $0xd0] sm:$0xff]
          %v2951 = vld [vmem:[#allocation2 + $0xd8] sm:$0xff]
          %v2952 = vld [vmem:[#allocation2 + $0xe0] sm:$0xff]
          %v2953 = vld [vmem:[#allocation2 + $0xe8] sm:$0xff]
          %v2954 = vld [vmem:[#allocation2 + $0xf0] sm:$0xff]
          %v2955 = vld [vmem:[#allocation2 + $0xf8] sm:$0xff]
          %v2956 = vld [vmem:[#allocation2 + $0x100] sm:$0xff]
          %v2957 = vld [vmem:[#allocation2 + $0x108] sm:$0xff]
          %v2958 = vld [vmem:[#allocation2 + $0x110] sm:$0xff]
          %v2959 = vld [vmem:[#allocation2 + $0x118] sm:$0xff]
          %v2960 = vld [vmem:[#allocation2 + $0x120] sm:$0xff]
          %v2961 = vld [vmem:[#allocation2 + $0x128] sm:$0xff]
          %v2962 = vld [vmem:[#allocation2 + $0x130] sm:$0xff]
          %v2963 = vld [vmem:[#allocation2 + $0x138] sm:$0xff]
          %v2964 = vld [vmem:[#allocation2 + $0x140] sm:$0xff]
          %v2965 = vld [vmem:[#allocation2 + $0x148] sm:$0xff]
          %v2966 = vld [vmem:[#allocation2 + $0x150] sm:$0xff]
          %v2967 = vld [vmem:[#allocation2 + $0x158] sm:$0xff]
          %v2968 = vld [vmem:[#allocation2 + $0x160] sm:$0xff]
          %v2969 = vld [vmem:[#allocation2 + $0x168] sm:$0xff]
          %v2970 = vld [vmem:[#allocation2 + $0x170] sm:$0xff]
          %v2971 = vld [vmem:[#allocation2 + $0x178] sm:$0xff]
          %v2972 = vld [vmem:[#allocation2 + $0x180] sm:$0xff]
          %v2973 = vld [vmem:[#allocation2 + $0x188] sm:$0xff]
          %v2974 = vld [vmem:[#allocation2 + $0x190] sm:$0xff]
          %v2975 = vld [vmem:[#allocation2 + $0x198] sm:$0xff]
          %v2976 = vld [vmem:[#allocation2 + $0x1a0] sm:$0xff]
          %v2977 = vld [vmem:[#allocation2 + $0x1a8] sm:$0xff]
          %v2978 = vld [vmem:[#allocation2 + $0x1b0] sm:$0xff]
          %v2979 = vld [vmem:[#allocation2 + $0x1b8] sm:$0xff]
          %v2980 = vld [vmem:[#allocation2 + $0x1c0] sm:$0xff]
          %v2981 = vld [vmem:[#allocation2 + $0x1c8] sm:$0xff]
          %v2982 = vld [vmem:[#allocation2 + $0x1d0] sm:$0xff]
          %v2983 = vld [vmem:[#allocation2 + $0x1d8] sm:$0xff]
          %v2984 = vld [vmem:[#allocation2 + $0x1e0] sm:$0xff]
          %v2985 = vld [vmem:[#allocation2 + $0x1e8] sm:$0xff]
          %v2986 = vld [vmem:[#allocation2 + $0x1f0] sm:$0xff]
          %v2987 = vld [vmem:[#allocation2 + $0x1f8] sm:$0xff]
          %v2988 = vld [vmem:[%s1232] sm:$0xff]
          %v2989 = vld [vmem:[%s1232 + $0x8] sm:$0xff]
          %v2990 = vld [vmem:[%s1232 + $0x10] sm:$0xff]
          %v2991 = vld [vmem:[%s1232 + $0x18] sm:$0xff]
          %v2992 = vld [vmem:[%s1232 + $0x20] sm:$0xff]
          %v2993 = vld [vmem:[%s1232 + $0x28] sm:$0xff]
          %v2994 = vld [vmem:[%s1232 + $0x30] sm:$0xff]
          %v2995 = vld [vmem:[%s1232 + $0x38] sm:$0xff]
          %v2996 = vld [vmem:[%s1232 + $0x40] sm:$0xff]
          %v2997 = vld [vmem:[%s1232 + $0x48] sm:$0xff]
          %v2998 = vld [vmem:[%s1232 + $0x50] sm:$0xff]
          %v2999 = vld [vmem:[%s1232 + $0x58] sm:$0xff]
          %v3000 = vld [vmem:[%s1232 + $0x60] sm:$0xff]
          %v3001 = vld [vmem:[%s1232 + $0x68] sm:$0xff]
          %v3002 = vld [vmem:[%s1232 + $0x70] sm:$0xff]
          %v3003 = vld [vmem:[%s1232 + $0x78] sm:$0xff]
          %v3004 = vld [vmem:[%s1232 + $0x80] sm:$0xff]
          %v3005 = vld [vmem:[%s1232 + $0x88] sm:$0xff]
          %v3006 = vld [vmem:[%s1232 + $0x90] sm:$0xff]
          %v3007 = vld [vmem:[%s1232 + $0x98] sm:$0xff]
          %v3008 = vld [vmem:[%s1232 + $0xa0] sm:$0xff]
          %v3009 = vld [vmem:[%s1232 + $0xa8] sm:$0xff]
          %v3010 = vld [vmem:[%s1232 + $0xb0] sm:$0xff]
          %v3011 = vld [vmem:[%s1232 + $0xb8] sm:$0xff]
          %v3012 = vld [vmem:[%s1232 + $0xc0] sm:$0xff]
          %v3013 = vld [vmem:[%s1232 + $0xc8] sm:$0xff]
          %v3014 = vld [vmem:[%s1232 + $0xd0] sm:$0xff]
          %v3015 = vld [vmem:[%s1232 + $0xd8] sm:$0xff]
          %v3016 = vld [vmem:[%s1232 + $0xe0] sm:$0xff]
          %v3017 = vld [vmem:[%s1232 + $0xe8] sm:$0xff]
          %v3018 = vld [vmem:[%s1232 + $0xf0] sm:$0xff]
          %v3019 = vld [vmem:[%s1232 + $0xf8] sm:$0xff]
          %v3020 = vld [vmem:[%s1232 + $0x100] sm:$0xff]
          %v3021 = vld [vmem:[%s1232 + $0x108] sm:$0xff]
          %v3022 = vld [vmem:[%s1232 + $0x110] sm:$0xff]
          %v3023 = vld [vmem:[%s1232 + $0x118] sm:$0xff]
          %v3024 = vld [vmem:[%s1232 + $0x120] sm:$0xff]
          %v3025 = vld [vmem:[%s1232 + $0x128] sm:$0xff]
          %v3026 = vld [vmem:[%s1232 + $0x130] sm:$0xff]
          %v3027 = vld [vmem:[%s1232 + $0x138] sm:$0xff]
          %v3028 = vld [vmem:[%s1232 + $0x140] sm:$0xff]
          %v3029 = vld [vmem:[%s1232 + $0x148] sm:$0xff]
          %v3030 = vld [vmem:[%s1232 + $0x150] sm:$0xff]
          %v3031 = vld [vmem:[%s1232 + $0x158] sm:$0xff]
          %v3032 = vld [vmem:[%s1232 + $0x160] sm:$0xff]
          %v3033 = vld [vmem:[%s1232 + $0x168] sm:$0xff]
          %v3034 = vld [vmem:[%s1232 + $0x170] sm:$0xff]
          %v3035 = vld [vmem:[%s1232 + $0x178] sm:$0xff]
          %v3036 = vld [vmem:[%s1232 + $0x180] sm:$0xff]
          %v3037 = vld [vmem:[%s1232 + $0x188] sm:$0xff]
          %v3038 = vld [vmem:[%s1232 + $0x190] sm:$0xff]
          %v3039 = vld [vmem:[%s1232 + $0x198] sm:$0xff]
          %v3040 = vld [vmem:[%s1232 + $0x1a0] sm:$0xff]
          %v3041 = vld [vmem:[%s1232 + $0x1a8] sm:$0xff]
          %v3042 = vld [vmem:[%s1232 + $0x1b0] sm:$0xff]
          %v3043 = vld [vmem:[%s1232 + $0x1b8] sm:$0xff]
          %v3044 = vld [vmem:[%s1232 + $0x1c0] sm:$0xff]
          %v3045 = vld [vmem:[%s1232 + $0x1c8] sm:$0xff]
          %v3046 = vld [vmem:[%s1232 + $0x1d0] sm:$0xff]
          %v3047 = vld [vmem:[%s1232 + $0x1d8] sm:$0xff]
          %v3048 = vld [vmem:[%s1232 + $0x1e0] sm:$0xff]
          %v3049 = vld [vmem:[%s1232 + $0x1e8] sm:$0xff]
          %v3050 = vld [vmem:[%s1232 + $0x1f0] sm:$0xff]
          %v3051 = vld [vmem:[%s1232 + $0x1f8] sm:$0xff]
          %3052 = vmatprep.subr.mxu0 0.0
          %3053 = vmatpush1.msra.mxu0 %v2988
          %3054 = vmatprep.subr.mxu0 0.0
          %3055 = vmatpush1.msra.mxu0 %v2989
          %3056 = vmatprep.subr.mxu0 0.0
          %3057 = vmatpush1.msra.mxu0 %v2990
          %3058 = vmatprep.subr.mxu0 0.0
          %3059 = vmatpush1.msra.mxu0 %v2991
          %3060 = vmatprep.subr.mxu0 0.0
          %3061 = vmatpush1.msra.mxu0 %v2992
          %3062 = vmatprep.subr.mxu0 0.0
          %3063 = vmatpush1.msra.mxu0 %v2993
          %3064 = vmatprep.subr.mxu0 0.0
          %3065 = vmatpush1.msra.mxu0 %v2994
          %3066 = vmatprep.subr.mxu0 0.0
          %3067 = vmatpush1.msra.mxu0 %v2995
          %3068 = vmatprep.subr.mxu0 0.0
          %3069 = vmatpush1.msra.mxu0 %v2996
          %3070 = vmatprep.subr.mxu0 0.0
          %3071 = vmatpush1.msra.mxu0 %v2997
          %3072 = vmatprep.subr.mxu0 0.0
          %3073 = vmatpush1.msra.mxu0 %v2998
          %3074 = vmatprep.subr.mxu0 0.0
          %3075 = vmatpush1.msra.mxu0 %v2999
          %3076 = vmatprep.subr.mxu0 0.0
          %3077 = vmatpush1.msra.mxu0 %v3000
          %3078 = vmatprep.subr.mxu0 0.0
          %3079 = vmatpush1.msra.mxu0 %v3001
          %3080 = vmatprep.subr.mxu0 0.0
          %3081 = vmatpush1.msra.mxu0 %v3002
          %3082 = vmatprep.subr.mxu0 0.0
          %3083 = vmatpush1.msra.mxu0 %v3003
          %3084 = vmatprep.subr.mxu0 0.0
          %3085 = vmatpush1.msra.mxu0 0.0
          %3086 = vmatprep.subr.mxu0 0.0
          %3087 = vmatpush1.msra.mxu0 0.0
          %3088 = vmatprep.subr.mxu0 0.0
          %3089 = vmatpush1.msra.mxu0 0.0
          %3090 = vmatprep.subr.mxu0 0.0
          %3091 = vmatpush1.msra.mxu0 0.0
          %3092 = vmatprep.subr.mxu0 0.0
          %3093 = vmatpush1.msra.mxu0 0.0
          %3094 = vmatprep.subr.mxu0 0.0
          %3095 = vmatpush1.msra.mxu0 0.0
          %3096 = vmatprep.subr.mxu0 0.0
          %3097 = vmatpush1.msra.mxu0 0.0
          %3098 = vmatprep.subr.mxu0 0.0
          %3099 = vmatpush1.msra.mxu0 0.0
          %3100 = vmatprep.subr.mxu0 0.0
          %3101 = vmatpush1.msra.mxu0 0.0
          %3102 = vmatprep.subr.mxu0 0.0
          %3103 = vmatpush1.msra.mxu0 0.0
          %3104 = vmatprep.subr.mxu0 0.0
          %3105 = vmatpush1.msra.mxu0 0.0
          %3106 = vmatprep.subr.mxu0 0.0
          %3107 = vmatpush1.msra.mxu0 0.0
          %3108 = vmatprep.subr.mxu0 0.0
          %3109 = vmatpush1.msra.mxu0 0.0
          %3110 = vmatprep.subr.mxu0 0.0
          %3111 = vmatpush1.msra.mxu0 0.0
          %3112 = vmatprep.subr.mxu0 0.0
          %3113 = vmatpush1.msra.mxu0 0.0
          %3114 = vmatprep.subr.mxu0 0.0
          %3115 = vmatpush1.msra.mxu0 0.0
          %3116 = vmatprep.mubr.f32.mxu0 0.0
          %3117 = vmatmul.mubr.f32.gmra.mrb[0].mxu0 %v2860
          %v3118 = vpop.f32.mrb[0].mxu0
          %v3119 = vadd.f32 0.0, %v3118
          %v3120 = vpop.f32.mrb[0].mxu0
          %3121 = vmatprep.mubr.f32.mxu0 0.0
          %3122 = vmatmul.mubr.f32.gmra.mrb[0].mxu0 %v2861
          %v3123 = vpop.f32.mrb[0].mxu0
          %v3124 = vadd.f32 0.0, %v3123
          %v3125 = vpop.f32.mrb[0].mxu0
          %3126 = vmatprep.mubr.f32.mxu0 0.0
          %3127 = vmatmul.mubr.f32.gmra.mrb[0].mxu0 %v2862
          %v3128 = vpop.f32.mrb[0].mxu0
          %v3129 = vadd.f32 0.0, %v3128
          %v3130 = vpop.f32.mrb[0].mxu0
          %3131 = vmatprep.mubr.f32.mxu0 0.0
          %3132 = vmatmul.mubr.f32.gmra.mrb[0].mxu0 %v2863
          %v3133 = vpop.f32.mrb[0].mxu0
          %v3134 = vadd.f32 0.0, %v3133
          %v3135 = vpop.f32.mrb[0].mxu0
          %3136 = vmatprep.mubr.f32.mxu0 0.0
          %3137 = vmatmul.mubr.f32.gmra.mrb[0].mxu0 %v2864
          %v3138 = vpop.f32.mrb[0].mxu0
          %v3139 = vadd.f32 0.0, %v3138
          %v3140 = vpop.f32.mrb[0].mxu0
          %3141 = vmatprep.mubr.f32.mxu0 0.0
          %3142 = vmatmul.mubr.f32.gmra.mrb[0].mxu0 %v2865
          %v3143 = vpop.f32.mrb[0].mxu0
          %v3144 = vadd.f32 0.0, %v3143
          %v3145 = vpop.f32.mrb[0].mxu0
          %3146 = vmatprep.mubr.f32.mxu0 0.0
          %3147 = vmatmul.mubr.f32.gmra.mrb[0].mxu0 %v2866
          %v3148 = vpop.f32.mrb[0].mxu0
          %v3149 = vadd.f32 0.0, %v3148
          %v3150 = vpop.f32.mrb[0].mxu0
          %3151 = vmatprep.mubr.f32.mxu0 0.0
          %3152 = vmatmul.mubr.f32.gmra.mrb[0].mxu0 %v2867
          %v3153 = vpop.f32.mrb[0].mxu0
          %v3154 = vadd.f32 0.0, %v3153
          %v3155 = vpop.f32.mrb[0].mxu0
          %3156 = vmatprep.mubr.f32.mxu0 0.0
          %3157 = vmatmul.mubr.f32.gmra.mrb[0].mxu0 %v2868
          %v3158 = vpop.f32.mrb[0].mxu0
          %v3159 = vadd.f32 0.0, %v3158
          %v3160 = vpop.f32.mrb[0].mxu0
          %3161 = vmatprep.mubr.f32.mxu0 0.0
          %3162 = vmatmul.mubr.f32.gmra.mrb[0].mxu0 %v2869
          %v3163 = vpop.f32.mrb[0].mxu0
          %v3164 = vadd.f32 0.0, %v3163
          %v3165 = vpop.f32.mrb[0].mxu0
          %3166 = vmatprep.mubr.f32.mxu0 0.0
          %3167 = vmatmul.mubr.f32.gmra.mrb[0].mxu0 %v2870
          %v3168 = vpop.f32.mrb[0].mxu0
          %v3169 = vadd.f32 0.0, %v3168
          %v3170 = vpop.f32.mrb[0].mxu0
          %3171 = vmatprep.mubr.f32.mxu0 0.0
          %3172 = vmatmul.mubr.f32.gmra.mrb[0].mxu0 %v2871
          %v3173 = vpop.f32.mrb[0].mxu0
          %v3174 = vadd.f32 0.0, %v3173
          %v3175 = vpop.f32.mrb[0].mxu0
          %3176 = vmatprep.mubr.f32.mxu0 0.0
          %3177 = vmatmul.mubr.f32.gmra.mrb[0].mxu0 %v2872
          %v3178 = vpop.f32.mrb[0].mxu0
          %v3179 = vadd.f32 0.0, %v3178
          %v3180 = vpop.f32.mrb[0].mxu0
          %3181 = vmatprep.mubr.f32.mxu0 0.0
          %3182 = vmatmul.mubr.f32.gmra.mrb[0].mxu0 %v2873
          %v3183 = vpop.f32.mrb[0].mxu0
          %v3184 = vadd.f32 0.0, %v3183
          %v3185 = vpop.f32.mrb[0].mxu0
          %3186 = vmatprep.mubr.f32.mxu0 0.0
          %3187 = vmatmul.mubr.f32.gmra.mrb[0].mxu0 %v2874
          %v3188 = vpop.f32.mrb[0].mxu0
          %v3189 = vadd.f32 0.0, %v3188
          %v3190 = vpop.f32.mrb[0].mxu0
          %3191 = vmatprep.mubr.f32.mxu0 0.0
          %3192 = vmatmul.mubr.f32.gmra.mrb[0].mxu0 %v2875
          %v3193 = vpop.f32.mrb[0].mxu0
          %v3194 = vadd.f32 0.0, %v3193
          %v3195 = vpop.f32.mrb[0].mxu0
          %3196 = vdwg.mxu0
          %3197 = vmatprep.subr.mxu0 0.0
          %3198 = vmatpush1.msra.mxu0 %v3004
          %3199 = vmatprep.subr.mxu0 0.0
          %3200 = vmatpush1.msra.mxu0 %v3005
          %3201 = vmatprep.subr.mxu0 0.0
          %3202 = vmatpush1.msra.mxu0 %v3006
          %3203 = vmatprep.subr.mxu0 0.0
          %3204 = vmatpush1.msra.mxu0 %v3007
          %3205 = vmatprep.subr.mxu0 0.0
          %3206 = vmatpush1.msra.mxu0 %v3008
          %3207 = vmatprep.subr.mxu0 0.0
          %3208 = vmatpush1.msra.mxu0 %v3009
          %3209 = vmatprep.subr.mxu0 0.0
          %3210 = vmatpush1.msra.mxu0 %v3010
          %3211 = vmatprep.subr.mxu0 0.0
          %3212 = vmatpush1.msra.mxu0 %v3011
          %3213 = vmatprep.subr.mxu0 0.0
          %3214 = vmatpush1.msra.mxu0 %v3012
          %3215 = vmatprep.subr.mxu0 0.0
          %3216 = vmatpush1.msra.mxu0 %v3013
          %3217 = vmatprep.subr.mxu0 0.0
          %3218 = vmatpush1.msra.mxu0 %v3014
          %3219 = vmatprep.subr.mxu0 0.0
          %3220 = vmatpush1.msra.mxu0 %v3015
          %3221 = vmatprep.subr.mxu0 0.0
          %3222 = vmatpush1.msra.mxu0 %v3016
          %3223 = vmatprep.subr.mxu0 0.0
          %3224 = vmatpush1.msra.mxu0 %v3017
          %3225 = vmatprep.subr.mxu0 0.0
          %3226 = vmatpush1.msra.mxu0 %v3018
          %3227 = vmatprep.subr.mxu0 0.0
          %3228 = vmatpush1.msra.mxu0 %v3019
          %3229 = vmatprep.subr.mxu0 0.0
          %3230 = vmatpush1.msra.mxu0 0.0
          %3231 = vmatprep.subr.mxu0 0.0
          %3232 = vmatpush1.msra.mxu0 0.0
          %3233 = vmatprep.subr.mxu0 0.0
          %3234 = vmatpush1.msra.mxu0 0.0
          %3235 = vmatprep.subr.mxu0 0.0
          %3236 = vmatpush1.msra.mxu0 0.0
          %3237 = vmatprep.subr.mxu0 0.0
          %3238 = vmatpush1.msra.mxu0 0.0
          %3239 = vmatprep.subr.mxu0 0.0
          %3240 = vmatpush1.msra.mxu0 0.0
          %3241 = vmatprep.subr.mxu0 0.0
          %3242 = vmatpush1.msra.mxu0 0.0
          %3243 = vmatprep.subr.mxu0 0.0
          %3244 = vmatpush1.msra.mxu0 0.0
          %3245 = vmatprep.subr.mxu0 0.0
          %3246 = vmatpush1.msra.mxu0 0.0
          %3247 = vmatprep.subr.mxu0 0.0
          %3248 = vmatpush1.msra.mxu0 0.0
          %3249 = vmatprep.subr.mxu0 0.0
          %3250 = vmatpush1.msra.mxu0 0.0
          %3251 = vmatprep.subr.mxu0 0.0
          %3252 = vmatpush1.msra.mxu0 0.0
          %3253 = vmatprep.subr.mxu0 0.0
          %3254 = vmatpush1.msra.mxu0 0.0
          %3255 = vmatprep.subr.mxu0 0.0
          %3256 = vmatpush1.msra.mxu0 0.0
          %3257 = vmatprep.subr.mxu0 0.0
          %3258 = vmatpush1.msra.mxu0 0.0
          %3259 = vmatprep.subr.mxu0 0.0
          %3260 = vmatpush1.msra.mxu0 0.0
          %3261 = vmatprep.mubr.f32.mxu0 0.0
          %3262 = vmatmul.mubr.f32.gmra.mrb[0].mxu0 %v2876
          %v3263 = vpop.f32.mrb[0].mxu0
          %v3264 = vadd.f32 0.0, %v3263
          %v3265 = vpop.f32.mrb[0].mxu0
          %3266 = vmatprep.mubr.f32.mxu0 0.0
          %3267 = vmatmul.mubr.f32.gmra.mrb[0].mxu0 %v2877
          %v3268 = vpop.f32.mrb[0].mxu0
          %v3269 = vadd.f32 0.0, %v3268
          %v3270 = vpop.f32.mrb[0].mxu0
          %3271 = vmatprep.mubr.f32.mxu0 0.0
          %3272 = vmatmul.mubr.f32.gmra.mrb[0].mxu0 %v2878
          %v3273 = vpop.f32.mrb[0].mxu0
          %v3274 = vadd.f32 0.0, %v3273
          %v3275 = vpop.f32.mrb[0].mxu0
          %3276 = vmatprep.mubr.f32.mxu0 0.0
          %3277 = vmatmul.mubr.f32.gmra.mrb[0].mxu0 %v2879
          %v3278 = vpop.f32.mrb[0].mxu0
          %v3279 = vadd.f32 0.0, %v3278
          %v3280 = vpop.f32.mrb[0].mxu0
          %3281 = vmatprep.mubr.f32.mxu0 0.0
          %3282 = vmatmul.mubr.f32.gmra.mrb[0].mxu0 %v2880
          %v3283 = vpop.f32.mrb[0].mxu0
          %v3284 = vadd.f32 0.0, %v3283
          %v3285 = vpop.f32.mrb[0].mxu0
          %3286 = vmatprep.mubr.f32.mxu0 0.0
          %3287 = vmatmul.mubr.f32.gmra.mrb[0].mxu0 %v2881
          %v3288 = vpop.f32.mrb[0].mxu0
          %v3289 = vadd.f32 0.0, %v3288
          %v3290 = vpop.f32.mrb[0].mxu0
          %3291 = vmatprep.mubr.f32.mxu0 0.0
          %3292 = vmatmul.mubr.f32.gmra.mrb[0].mxu0 %v2882
          %v3293 = vpop.f32.mrb[0].mxu0
          %v3294 = vadd.f32 0.0, %v3293
          %v3295 = vpop.f32.mrb[0].mxu0
          %3296 = vmatprep.mubr.f32.mxu0 0.0
          %3297 = vmatmul.mubr.f32.gmra.mrb[0].mxu0 %v2883
          %v3298 = vpop.f32.mrb[0].mxu0
          %v3299 = vadd.f32 0.0, %v3298
          %v3300 = vpop.f32.mrb[0].mxu0
          %3301 = vmatprep.mubr.f32.mxu0 0.0
          %3302 = vmatmul.mubr.f32.gmra.mrb[0].mxu0 %v2884
          %v3303 = vpop.f32.mrb[0].mxu0
          %v3304 = vadd.f32 0.0, %v3303
          %v3305 = vpop.f32.mrb[0].mxu0
          %3306 = vmatprep.mubr.f32.mxu0 0.0
          %3307 = vmatmul.mubr.f32.gmra.mrb[0].mxu0 %v2885
          %v3308 = vpop.f32.mrb[0].mxu0
          %v3309 = vadd.f32 0.0, %v3308
          %v3310 = vpop.f32.mrb[0].mxu0
          %3311 = vmatprep.mubr.f32.mxu0 0.0
          %3312 = vmatmul.mubr.f32.gmra.mrb[0].mxu0 %v2886
          %v3313 = vpop.f32.mrb[0].mxu0
          %v3314 = vadd.f32 0.0, %v3313
          %v3315 = vpop.f32.mrb[0].mxu0
          %3316 = vmatprep.mubr.f32.mxu0 0.0
          %3317 = vmatmul.mubr.f32.gmra.mrb[0].mxu0 %v2887
          %v3318 = vpop.f32.mrb[0].mxu0
          %v3319 = vadd.f32 0.0, %v3318
          %v3320 = vpop.f32.mrb[0].mxu0
          %3321 = vmatprep.mubr.f32.mxu0 0.0
          %3322 = vmatmul.mubr.f32.gmra.mrb[0].mxu0 %v2888
          %v3323 = vpop.f32.mrb[0].mxu0
          %v3324 = vadd.f32 0.0, %v3323
          %v3325 = vpop.f32.mrb[0].mxu0
          %3326 = vmatprep.mubr.f32.mxu0 0.0
          %3327 = vmatmul.mubr.f32.gmra.mrb[0].mxu0 %v2889
          %v3328 = vpop.f32.mrb[0].mxu0
          %v3329 = vadd.f32 0.0, %v3328
          %v3330 = vpop.f32.mrb[0].mxu0
          %3331 = vmatprep.mubr.f32.mxu0 0.0
          %3332 = vmatmul.mubr.f32.gmra.mrb[0].mxu0 %v2890
          %v3333 = vpop.f32.mrb[0].mxu0
          %v3334 = vadd.f32 0.0, %v3333
          %v3335 = vpop.f32.mrb[0].mxu0
          %3336 = vmatprep.mubr.f32.mxu0 0.0
          %3337 = vmatmul.mubr.f32.gmra.mrb[0].mxu0 %v2891
          %v3338 = vpop.f32.mrb[0].mxu0
          %v3339 = vadd.f32 0.0, %v3338
          %v3340 = vpop.f32.mrb[0].mxu0
          %3341 = vdwg.mxu0
          %3342 = vmatprep.subr.mxu0 0.0
          %3343 = vmatpush1.msra.mxu0 %v3020
          %3344 = vmatprep.subr.mxu0 0.0
          %3345 = vmatpush1.msra.mxu0 %v3021
          %3346 = vmatprep.subr.mxu0 0.0
          %3347 = vmatpush1.msra.mxu0 %v3022
          %3348 = vmatprep.subr.mxu0 0.0
          %3349 = vmatpush1.msra.mxu0 %v3023
          %3350 = vmatprep.subr.mxu0 0.0
          %3351 = vmatpush1.msra.mxu0 %v3024
          %3352 = vmatprep.subr.mxu0 0.0
          %3353 = vmatpush1.msra.mxu0 %v3025
          %3354 = vmatprep.subr.mxu0 0.0
          %3355 = vmatpush1.msra.mxu0 %v3026
          %3356 = vmatprep.subr.mxu0 0.0
          %3357 = vmatpush1.msra.mxu0 %v3027
          %3358 = vmatprep.subr.mxu0 0.0
          %3359 = vmatpush1.msra.mxu0 %v3028
          %3360 = vmatprep.subr.mxu0 0.0
          %3361 = vmatpush1.msra.mxu0 %v3029
          %3362 = vmatprep.subr.mxu0 0.0
          %3363 = vmatpush1.msra.mxu0 %v3030
          %3364 = vmatprep.subr.mxu0 0.0
          %3365 = vmatpush1.msra.mxu0 %v3031
          %3366 = vmatprep.subr.mxu0 0.0
          %3367 = vmatpush1.msra.mxu0 %v3032
          %3368 = vmatprep.subr.mxu0 0.0
          %3369 = vmatpush1.msra.mxu0 %v3033
          %3370 = vmatprep.subr.mxu0 0.0
          %3371 = vmatpush1.msra.mxu0 %v3034
          %3372 = vmatprep.subr.mxu0 0.0
          %3373 = vmatpush1.msra.mxu0 %v3035
          %3374 = vmatprep.subr.mxu0 0.0
          %3375 = vmatpush1.msra.mxu0 0.0
          %3376 = vmatprep.subr.mxu0 0.0
          %3377 = vmatpush1.msra.mxu0 0.0
          %3378 = vmatprep.subr.mxu0 0.0
          %3379 = vmatpush1.msra.mxu0 0.0
          %3380 = vmatprep.subr.mxu0 0.0
          %3381 = vmatpush1.msra.mxu0 0.0
          %3382 = vmatprep.subr.mxu0 0.0
          %3383 = vmatpush1.msra.mxu0 0.0
          %3384 = vmatprep.subr.mxu0 0.0
          %3385 = vmatpush1.msra.mxu0 0.0
          %3386 = vmatprep.subr.mxu0 0.0
          %3387 = vmatpush1.msra.mxu0 0.0
          %3388 = vmatprep.subr.mxu0 0.0
          %3389 = vmatpush1.msra.mxu0 0.0
          %3390 = vmatprep.subr.mxu0 0.0
          %3391 = vmatpush1.msra.mxu0 0.0
          %3392 = vmatprep.subr.mxu0 0.0
          %3393 = vmatpush1.msra.mxu0 0.0
          %3394 = vmatprep.subr.mxu0 0.0
          %3395 = vmatpush1.msra.mxu0 0.0
          %3396 = vmatprep.subr.mxu0 0.0
          %3397 = vmatpush1.msra.mxu0 0.0
          %3398 = vmatprep.subr.mxu0 0.0
          %3399 = vmatpush1.msra.mxu0 0.0
          %3400 = vmatprep.subr.mxu0 0.0
          %3401 = vmatpush1.msra.mxu0 0.0
          %3402 = vmatprep.subr.mxu0 0.0
          %3403 = vmatpush1.msra.mxu0 0.0
          %3404 = vmatprep.subr.mxu0 0.0
          %3405 = vmatpush1.msra.mxu0 0.0
          %3406 = vmatprep.mubr.f32.mxu0 0.0
          %3407 = vmatmul.mubr.f32.gmra.mrb[0].mxu0 %v2892
          %v3408 = vpop.f32.mrb[0].mxu0
          %v3409 = vadd.f32 0.0, %v3408
          %v3410 = vpop.f32.mrb[0].mxu0
          %3411 = vmatprep.mubr.f32.mxu0 0.0
          %3412 = vmatmul.mubr.f32.gmra.mrb[0].mxu0 %v2893
          %v3413 = vpop.f32.mrb[0].mxu0
          %v3414 = vadd.f32 0.0, %v3413
          %v3415 = vpop.f32.mrb[0].mxu0
          %3416 = vmatprep.mubr.f32.mxu0 0.0
          %3417 = vmatmul.mubr.f32.gmra.mrb[0].mxu0 %v2894
          %v3418 = vpop.f32.mrb[0].mxu0
          %v3419 = vadd.f32 0.0, %v3418
          %v3420 = vpop.f32.mrb[0].mxu0
          %3421 = vmatprep.mubr.f32.mxu0 0.0
          %3422 = vmatmul.mubr.f32.gmra.mrb[0].mxu0 %v2895
          %v3423 = vpop.f32.mrb[0].mxu0
          %v3424 = vadd.f32 0.0, %v3423
          %v3425 = vpop.f32.mrb[0].mxu0
          %3426 = vmatprep.mubr.f32.mxu0 0.0
          %3427 = vmatmul.mubr.f32.gmra.mrb[0].mxu0 %v2896
          %v3428 = vpop.f32.mrb[0].mxu0
          %v3429 = vadd.f32 0.0, %v3428
          %v3430 = vpop.f32.mrb[0].mxu0
          %3431 = vmatprep.mubr.f32.mxu0 0.0
          %3432 = vmatmul.mubr.f32.gmra.mrb[0].mxu0 %v2897
          %v3433 = vpop.f32.mrb[0].mxu0
          %v3434 = vadd.f32 0.0, %v3433
          %v3435 = vpop.f32.mrb[0].mxu0
          %3436 = vmatprep.mubr.f32.mxu0 0.0
          %3437 = vmatmul.mubr.f32.gmra.mrb[0].mxu0 %v2898
          %v3438 = vpop.f32.mrb[0].mxu0
          %v3439 = vadd.f32 0.0, %v3438
          %v3440 = vpop.f32.mrb[0].mxu0
          %3441 = vmatprep.mubr.f32.mxu0 0.0
          %3442 = vmatmul.mubr.f32.gmra.mrb[0].mxu0 %v2899
          %v3443 = vpop.f32.mrb[0].mxu0
          %v3444 = vadd.f32 0.0, %v3443
          %v3445 = vpop.f32.mrb[0].mxu0
          %3446 = vmatprep.mubr.f32.mxu0 0.0
          %3447 = vmatmul.mubr.f32.gmra.mrb[0].mxu0 %v2900
          %v3448 = vpop.f32.mrb[0].mxu0
          %v3449 = vadd.f32 0.0, %v3448
          %v3450 = vpop.f32.mrb[0].mxu0
          %3451 = vmatprep.mubr.f32.mxu0 0.0
          %3452 = vmatmul.mubr.f32.gmra.mrb[0].mxu0 %v2901
          %v3453 = vpop.f32.mrb[0].mxu0
          %v3454 = vadd.f32 0.0, %v3453
          %v3455 = vpop.f32.mrb[0].mxu0
          %3456 = vmatprep.mubr.f32.mxu0 0.0
          %3457 = vmatmul.mubr.f32.gmra.mrb[0].mxu0 %v2902
          %v3458 = vpop.f32.mrb[0].mxu0
          %v3459 = vadd.f32 0.0, %v3458
          %v3460 = vpop.f32.mrb[0].mxu0
          %3461 = vmatprep.mubr.f32.mxu0 0.0
          %3462 = vmatmul.mubr.f32.gmra.mrb[0].mxu0 %v2903
          %v3463 = vpop.f32.mrb[0].mxu0
          %v3464 = vadd.f32 0.0, %v3463
          %v3465 = vpop.f32.mrb[0].mxu0
          %3466 = vmatprep.mubr.f32.mxu0 0.0
          %3467 = vmatmul.mubr.f32.gmra.mrb[0].mxu0 %v2904
          %v3468 = vpop.f32.mrb[0].mxu0
          %v3469 = vadd.f32 0.0, %v3468
          %v3470 = vpop.f32.mrb[0].mxu0
          %3471 = vmatprep.mubr.f32.mxu0 0.0
          %3472 = vmatmul.mubr.f32.gmra.mrb[0].mxu0 %v2905
          %v3473 = vpop.f32.mrb[0].mxu0
          %v3474 = vadd.f32 0.0, %v3473
          %v3475 = vpop.f32.mrb[0].mxu0
          %3476 = vmatprep.mubr.f32.mxu0 0.0
          %3477 = vmatmul.mubr.f32.gmra.mrb[0].mxu0 %v2906
          %v3478 = vpop.f32.mrb[0].mxu0
          %v3479 = vadd.f32 0.0, %v3478
          %v3480 = vpop.f32.mrb[0].mxu0
          %3481 = vmatprep.mubr.f32.mxu0 0.0
          %3482 = vmatmul.mubr.f32.gmra.mrb[0].mxu0 %v2907
          %v3483 = vpop.f32.mrb[0].mxu0
          %v3484 = vadd.f32 0.0, %v3483
          %v3485 = vpop.f32.mrb[0].mxu0
          %3486 = vdwg.mxu0
          %3487 = vmatprep.subr.mxu0 0.0
          %3488 = vmatpush1.msra.mxu0 %v3036
          %3489 = vmatprep.subr.mxu0 0.0
          %3490 = vmatpush1.msra.mxu0 %v3037
          %3491 = vmatprep.subr.mxu0 0.0
          %3492 = vmatpush1.msra.mxu0 %v3038
          %3493 = vmatprep.subr.mxu0 0.0
          %3494 = vmatpush1.msra.mxu0 %v3039
          %3495 = vmatprep.subr.mxu0 0.0
          %3496 = vmatpush1.msra.mxu0 %v3040
          %3497 = vmatprep.subr.mxu0 0.0
          %3498 = vmatpush1.msra.mxu0 %v3041
          %3499 = vmatprep.subr.mxu0 0.0
          %3500 = vmatpush1.msra.mxu0 %v3042
          %3501 = vmatprep.subr.mxu0 0.0
          %3502 = vmatpush1.msra.mxu0 %v3043
          %3503 = vmatprep.subr.mxu0 0.0
          %3504 = vmatpush1.msra.mxu0 %v3044
          %3505 = vmatprep.subr.mxu0 0.0
          %3506 = vmatpush1.msra.mxu0 %v3045
          %3507 = vmatprep.subr.mxu0 0.0
          %3508 = vmatpush1.msra.mxu0 %v3046
          %3509 = vmatprep.subr.mxu0 0.0
          %3510 = vmatpush1.msra.mxu0 %v3047
          %3511 = vmatprep.subr.mxu0 0.0
          %3512 = vmatpush1.msra.mxu0 %v3048
          %3513 = vmatprep.subr.mxu0 0.0
          %3514 = vmatpush1.msra.mxu0 %v3049
          %3515 = vmatprep.subr.mxu0 0.0
          %3516 = vmatpush1.msra.mxu0 %v3050
          %3517 = vmatprep.subr.mxu0 0.0
          %3518 = vmatpush1.msra.mxu0 %v3051
          %3519 = vmatprep.subr.mxu0 0.0
          %3520 = vmatpush1.msra.mxu0 0.0
          %3521 = vmatprep.subr.mxu0 0.0
          %3522 = vmatpush1.msra.mxu0 0.0
          %3523 = vmatprep.subr.mxu0 0.0
          %3524 = vmatpush1.msra.mxu0 0.0
          %3525 = vmatprep.subr.mxu0 0.0
          %3526 = vmatpush1.msra.mxu0 0.0
          %3527 = vmatprep.subr.mxu0 0.0
          %3528 = vmatpush1.msra.mxu0 0.0
          %3529 = vmatprep.subr.mxu0 0.0
          %3530 = vmatpush1.msra.mxu0 0.0
          %3531 = vmatprep.subr.mxu0 0.0
          %3532 = vmatpush1.msra.mxu0 0.0
          %3533 = vmatprep.subr.mxu0 0.0
          %3534 = vmatpush1.msra.mxu0 0.0
          %3535 = vmatprep.subr.mxu0 0.0
          %3536 = vmatpush1.msra.mxu0 0.0
          %3537 = vmatprep.subr.mxu0 0.0
          %3538 = vmatpush1.msra.mxu0 0.0
          %3539 = vmatprep.subr.mxu0 0.0
          %3540 = vmatpush1.msra.mxu0 0.0
          %3541 = vmatprep.subr.mxu0 0.0
          %3542 = vmatpush1.msra.mxu0 0.0
          %3543 = vmatprep.subr.mxu0 0.0
          %3544 = vmatpush1.msra.mxu0 0.0
          %3545 = vmatprep.subr.mxu0 0.0
          %3546 = vmatpush1.msra.mxu0 0.0
          %3547 = vmatprep.subr.mxu0 0.0
          %3548 = vmatpush1.msra.mxu0 0.0
          %3549 = vmatprep.subr.mxu0 0.0
          %3550 = vmatpush1.msra.mxu0 0.0
          %3551 = vmatprep.mubr.f32.mxu0 0.0
          %3552 = vmatmul.mubr.f32.gmra.mrb[0].mxu0 %v2908
          %v3553 = vpop.f32.mrb[0].mxu0
          %v3554 = vadd.f32 0.0, %v3553
          %v3555 = vpop.f32.mrb[0].mxu0
          %3556 = vmatprep.mubr.f32.mxu0 0.0
          %3557 = vmatmul.mubr.f32.gmra.mrb[0].mxu0 %v2909
          %v3558 = vpop.f32.mrb[0].mxu0
          %v3559 = vadd.f32 0.0, %v3558
          %v3560 = vpop.f32.mrb[0].mxu0
          %3561 = vmatprep.mubr.f32.mxu0 0.0
          %3562 = vmatmul.mubr.f32.gmra.mrb[0].mxu0 %v2910
          %v3563 = vpop.f32.mrb[0].mxu0
          %v3564 = vadd.f32 0.0, %v3563
          %v3565 = vpop.f32.mrb[0].mxu0
          %3566 = vmatprep.mubr.f32.mxu0 0.0
          %3567 = vmatmul.mubr.f32.gmra.mrb[0].mxu0 %v2911
          %v3568 = vpop.f32.mrb[0].mxu0
          %v3569 = vadd.f32 0.0, %v3568
          %v3570 = vpop.f32.mrb[0].mxu0
          %3571 = vmatprep.mubr.f32.mxu0 0.0
          %3572 = vmatmul.mubr.f32.gmra.mrb[0].mxu0 %v2912
          %v3573 = vpop.f32.mrb[0].mxu0
          %v3574 = vadd.f32 0.0, %v3573
          %v3575 = vpop.f32.mrb[0].mxu0
          %3576 = vmatprep.mubr.f32.mxu0 0.0
          %3577 = vmatmul.mubr.f32.gmra.mrb[0].mxu0 %v2913
          %v3578 = vpop.f32.mrb[0].mxu0
          %v3579 = vadd.f32 0.0, %v3578
          %v3580 = vpop.f32.mrb[0].mxu0
          %3581 = vmatprep.mubr.f32.mxu0 0.0
          %3582 = vmatmul.mubr.f32.gmra.mrb[0].mxu0 %v2914
          %v3583 = vpop.f32.mrb[0].mxu0
          %v3584 = vadd.f32 0.0, %v3583
          %v3585 = vpop.f32.mrb[0].mxu0
          %3586 = vmatprep.mubr.f32.mxu0 0.0
          %3587 = vmatmul.mubr.f32.gmra.mrb[0].mxu0 %v2915
          %v3588 = vpop.f32.mrb[0].mxu0
          %v3589 = vadd.f32 0.0, %v3588
          %v3590 = vpop.f32.mrb[0].mxu0
          %3591 = vmatprep.mubr.f32.mxu0 0.0
          %3592 = vmatmul.mubr.f32.gmra.mrb[0].mxu0 %v2916
          %v3593 = vpop.f32.mrb[0].mxu0
          %v3594 = vadd.f32 0.0, %v3593
          %v3595 = vpop.f32.mrb[0].mxu0
          %3596 = vmatprep.mubr.f32.mxu0 0.0
          %3597 = vmatmul.mubr.f32.gmra.mrb[0].mxu0 %v2917
          %v3598 = vpop.f32.mrb[0].mxu0
          %v3599 = vadd.f32 0.0, %v3598
          %v3600 = vpop.f32.mrb[0].mxu0
          %3601 = vmatprep.mubr.f32.mxu0 0.0
          %3602 = vmatmul.mubr.f32.gmra.mrb[0].mxu0 %v2918
          %v3603 = vpop.f32.mrb[0].mxu0
          %v3604 = vadd.f32 0.0, %v3603
          %v3605 = vpop.f32.mrb[0].mxu0
          %3606 = vmatprep.mubr.f32.mxu0 0.0
          %3607 = vmatmul.mubr.f32.gmra.mrb[0].mxu0 %v2919
          %v3608 = vpop.f32.mrb[0].mxu0
          %v3609 = vadd.f32 0.0, %v3608
          %v3610 = vpop.f32.mrb[0].mxu0
          %3611 = vmatprep.mubr.f32.mxu0 0.0
          %3612 = vmatmul.mubr.f32.gmra.mrb[0].mxu0 %v2920
          %v3613 = vpop.f32.mrb[0].mxu0
          %v3614 = vadd.f32 0.0, %v3613
          %v3615 = vpop.f32.mrb[0].mxu0
          %3616 = vmatprep.mubr.f32.mxu0 0.0
          %3617 = vmatmul.mubr.f32.gmra.mrb[0].mxu0 %v2921
          %v3618 = vpop.f32.mrb[0].mxu0
          %v3619 = vadd.f32 0.0, %v3618
          %v3620 = vpop.f32.mrb[0].mxu0
          %3621 = vmatprep.mubr.f32.mxu0 0.0
          %3622 = vmatmul.mubr.f32.gmra.mrb[0].mxu0 %v2922
          %v3623 = vpop.f32.mrb[0].mxu0
          %v3624 = vadd.f32 0.0, %v3623
          %v3625 = vpop.f32.mrb[0].mxu0
          %3626 = vmatprep.mubr.f32.mxu0 0.0
          %3627 = vmatmul.mubr.f32.gmra.mrb[0].mxu0 %v2923
          %v3628 = vpop.f32.mrb[0].mxu0
          %v3629 = vadd.f32 0.0, %v3628
          %v3630 = vpop.f32.mrb[0].mxu0
          %3631 = vdwg.mxu0
          %v3632 = vadd.f32 %v2924, %v3119
          %v3633 = vadd.f32 %v2925, %v3124
          %v3634 = vadd.f32 %v2926, %v3129
          %v3635 = vadd.f32 %v2927, %v3134
          %v3636 = vadd.f32 %v2928, %v3139
          %v3637 = vadd.f32 %v2929, %v3144
          %v3638 = vadd.f32 %v2930, %v3149
          %v3639 = vadd.f32 %v2931, %v3154
          %v3640 = vadd.f32 %v2932, %v3159
          %v3641 = vadd.f32 %v2933, %v3164
          %v3642 = vadd.f32 %v2934, %v3169
          %v3643 = vadd.f32 %v2935, %v3174
          %v3644 = vadd.f32 %v2936, %v3179
          %v3645 = vadd.f32 %v2937, %v3184
          %v3646 = vadd.f32 %v2938, %v3189
          %v3647 = vadd.f32 %v2939, %v3194
          %v3648 = vadd.f32 %v2940, %v3264
          %v3649 = vadd.f32 %v2941, %v3269
          %v3650 = vadd.f32 %v2942, %v3274
          %v3651 = vadd.f32 %v2943, %v3279
          %v3652 = vadd.f32 %v2944, %v3284
          %v3653 = vadd.f32 %v2945, %v3289
          %v3654 = vadd.f32 %v2946, %v3294
          %v3655 = vadd.f32 %v2947, %v3299
          %v3656 = vadd.f32 %v2948, %v3304
          %v3657 = vadd.f32 %v2949, %v3309
          %v3658 = vadd.f32 %v2950, %v3314
          %v3659 = vadd.f32 %v2951, %v3319
          %v3660 = vadd.f32 %v2952, %v3324
          %v3661 = vadd.f32 %v2953, %v3329
          %v3662 = vadd.f32 %v2954, %v3334
          %v3663 = vadd.f32 %v2955, %v3339
          %v3664 = vadd.f32 %v2956, %v3409
          %v3665 = vadd.f32 %v2957, %v3414
          %v3666 = vadd.f32 %v2958, %v3419
          %v3667 = vadd.f32 %v2959, %v3424
          %v3668 = vadd.f32 %v2960, %v3429
          %v3669 = vadd.f32 %v2961, %v3434
          %v3670 = vadd.f32 %v2962, %v3439
          %v3671 = vadd.f32 %v2963, %v3444
          %v3672 = vadd.f32 %v2964, %v3449
          %v3673 = vadd.f32 %v2965, %v3454
          %v3674 = vadd.f32 %v2966, %v3459
          %v3675 = vadd.f32 %v2967, %v3464
          %v3676 = vadd.f32 %v2968, %v3469
          %v3677 = vadd.f32 %v2969, %v3474
          %v3678 = vadd.f32 %v2970, %v3479
          %v3679 = vadd.f32 %v2971, %v3484
          %v3680 = vadd.f32 %v2972, %v3554
          %v3681 = vadd.f32 %v2973, %v3559
          %v3682 = vadd.f32 %v2974, %v3564
          %v3683 = vadd.f32 %v2975, %v3569
          %v3684 = vadd.f32 %v2976, %v3574
          %v3685 = vadd.f32 %v2977, %v3579
          %v3686 = vadd.f32 %v2978, %v3584
          %v3687 = vadd.f32 %v2979, %v3589
          %v3688 = vadd.f32 %v2980, %v3594
          %v3689 = vadd.f32 %v2981, %v3599
          %v3690 = vadd.f32 %v2982, %v3604
          %v3691 = vadd.f32 %v2983, %v3609
          %v3692 = vadd.f32 %v2984, %v3614
          %v3693 = vadd.f32 %v2985, %v3619
          %v3694 = vadd.f32 %v2986, %v3624
          %v3695 = vadd.f32 %v2987, %v3629
          %vm3696 = vcmask 138240
          %3697 = vst.msk [vmem:[#allocation2] sm:$0xff] %vm3696, %v3632
          %3698 = vst.msk [vmem:[#allocation2 + $0x8] sm:$0xff] %vm3696, %v3633
          %3699 = vst.msk [vmem:[#allocation2 + $0x10] sm:$0xff] %vm3696, %v3634
          %3700 = vst.msk [vmem:[#allocation2 + $0x18] sm:$0xff] %vm3696, %v3635
          %3701 = vst.msk [vmem:[#allocation2 + $0x20] sm:$0xff] %vm3696, %v3636
          %3702 = vst.msk [vmem:[#allocation2 + $0x28] sm:$0xff] %vm3696, %v3637
          %3703 = vst.msk [vmem:[#allocation2 + $0x30] sm:$0xff] %vm3696, %v3638
          %3704 = vst.msk [vmem:[#allocation2 + $0x38] sm:$0xff] %vm3696, %v3639
          %3705 = vst.msk [vmem:[#allocation2 + $0x40] sm:$0xff] %vm3696, %v3640
          %3706 = vst.msk [vmem:[#allocation2 + $0x48] sm:$0xff] %vm3696, %v3641
          %3707 = vst.msk [vmem:[#allocation2 + $0x50] sm:$0xff] %vm3696, %v3642
          %3708 = vst.msk [vmem:[#allocation2 + $0x58] sm:$0xff] %vm3696, %v3643
          %3709 = vst.msk [vmem:[#allocation2 + $0x60] sm:$0xff] %vm3696, %v3644
          %3710 = vst.msk [vmem:[#allocation2 + $0x68] sm:$0xff] %vm3696, %v3645
          %3711 = vst.msk [vmem:[#allocation2 + $0x70] sm:$0xff] %vm3696, %v3646
          %3712 = vst.msk [vmem:[#allocation2 + $0x78] sm:$0xff] %vm3696, %v3647
          %3713 = vst.msk [vmem:[#allocation2 + $0x80] sm:$0xff] %vm3696, %v3648
          %3714 = vst.msk [vmem:[#allocation2 + $0x88] sm:$0xff] %vm3696, %v3649
          %3715 = vst.msk [vmem:[#allocation2 + $0x90] sm:$0xff] %vm3696, %v3650
          %3716 = vst.msk [vmem:[#allocation2 + $0x98] sm:$0xff] %vm3696, %v3651
          %3717 = vst.msk [vmem:[#allocation2 + $0xa0] sm:$0xff] %vm3696, %v3652
          %3718 = vst.msk [vmem:[#allocation2 + $0xa8] sm:$0xff] %vm3696, %v3653
          %3719 = vst.msk [vmem:[#allocation2 + $0xb0] sm:$0xff] %vm3696, %v3654
          %3720 = vst.msk [vmem:[#allocation2 + $0xb8] sm:$0xff] %vm3696, %v3655
          %3721 = vst.msk [vmem:[#allocation2 + $0xc0] sm:$0xff] %vm3696, %v3656
          %3722 = vst.msk [vmem:[#allocation2 + $0xc8] sm:$0xff] %vm3696, %v3657
          %3723 = vst.msk [vmem:[#allocation2 + $0xd0] sm:$0xff] %vm3696, %v3658
          %3724 = vst.msk [vmem:[#allocation2 + $0xd8] sm:$0xff] %vm3696, %v3659
          %3725 = vst.msk [vmem:[#allocation2 + $0xe0] sm:$0xff] %vm3696, %v3660
          %3726 = vst.msk [vmem:[#allocation2 + $0xe8] sm:$0xff] %vm3696, %v3661
          %3727 = vst.msk [vmem:[#allocation2 + $0xf0] sm:$0xff] %vm3696, %v3662
          %3728 = vst.msk [vmem:[#allocation2 + $0xf8] sm:$0xff] %vm3696, %v3663
          %3729 = vst.msk [vmem:[#allocation2 + $0x100] sm:$0xff] %vm3696, %v3664
          %3730 = vst.msk [vmem:[#allocation2 + $0x108] sm:$0xff] %vm3696, %v3665
          %3731 = vst.msk [vmem:[#allocation2 + $0x110] sm:$0xff] %vm3696, %v3666
          %3732 = vst.msk [vmem:[#allocation2 + $0x118] sm:$0xff] %vm3696, %v3667
          %3733 = vst.msk [vmem:[#allocation2 + $0x120] sm:$0xff] %vm3696, %v3668
          %3734 = vst.msk [vmem:[#allocation2 + $0x128] sm:$0xff] %vm3696, %v3669
          %3735 = vst.msk [vmem:[#allocation2 + $0x130] sm:$0xff] %vm3696, %v3670
          %3736 = vst.msk [vmem:[#allocation2 + $0x138] sm:$0xff] %vm3696, %v3671
          %3737 = vst.msk [vmem:[#allocation2 + $0x140] sm:$0xff] %vm3696, %v3672
          %3738 = vst.msk [vmem:[#allocation2 + $0x148] sm:$0xff] %vm3696, %v3673
          %3739 = vst.msk [vmem:[#allocation2 + $0x150] sm:$0xff] %vm3696, %v3674
          %3740 = vst.msk [vmem:[#allocation2 + $0x158] sm:$0xff] %vm3696, %v3675
          %3741 = vst.msk [vmem:[#allocation2 + $0x160] sm:$0xff] %vm3696, %v3676
          %3742 = vst.msk [vmem:[#allocation2 + $0x168] sm:$0xff] %vm3696, %v3677
          %3743 = vst.msk [vmem:[#allocation2 + $0x170] sm:$0xff] %vm3696, %v3678
          %3744 = vst.msk [vmem:[#allocation2 + $0x178] sm:$0xff] %vm3696, %v3679
          %3745 = vst.msk [vmem:[#allocation2 + $0x180] sm:$0xff] %vm3696, %v3680
          %3746 = vst.msk [vmem:[#allocation2 + $0x188] sm:$0xff] %vm3696, %v3681
          %3747 = vst.msk [vmem:[#allocation2 + $0x190] sm:$0xff] %vm3696, %v3682
          %3748 = vst.msk [vmem:[#allocation2 + $0x198] sm:$0xff] %vm3696, %v3683
          %3749 = vst.msk [vmem:[#allocation2 + $0x1a0] sm:$0xff] %vm3696, %v3684
          %3750 = vst.msk [vmem:[#allocation2 + $0x1a8] sm:$0xff] %vm3696, %v3685
          %3751 = vst.msk [vmem:[#allocation2 + $0x1b0] sm:$0xff] %vm3696, %v3686
          %3752 = vst.msk [vmem:[#allocation2 + $0x1b8] sm:$0xff] %vm3696, %v3687
          %3753 = vst.msk [vmem:[#allocation2 + $0x1c0] sm:$0xff] %vm3696, %v3688
          %3754 = vst.msk [vmem:[#allocation2 + $0x1c8] sm:$0xff] %vm3696, %v3689
          %3755 = vst.msk [vmem:[#allocation2 + $0x1d0] sm:$0xff] %vm3696, %v3690
          %3756 = vst.msk [vmem:[#allocation2 + $0x1d8] sm:$0xff] %vm3696, %v3691
          %3757 = vst.msk [vmem:[#allocation2 + $0x1e0] sm:$0xff] %vm3696, %v3692
          %3758 = vst.msk [vmem:[#allocation2 + $0x1e8] sm:$0xff] %vm3696, %v3693
          %3759 = vst.msk [vmem:[#allocation2 + $0x1f0] sm:$0xff] %vm3696, %v3694
          %3760 = vst.msk [vmem:[#allocation2 + $0x1f8] sm:$0xff] %vm3696, %v3695
        $region199: #{tpu_custom_call.1} parent=174 // pred_fallthru
          _
        %p3761 = scmp.eq.s32.totalorder %s32, 1
        // Predicated region
        $region200: #{tpu_custom_call.1} parent=174 // pred_check
          %p3762 = pneg %p3761
        $region201: #{tpu_custom_call.1} parent=174 // pred_check_branch
          %3764 = sbr.rel (%p3762) target = $region203
        $region202: #{tpu_custom_call.1} parent=174 // pred_region
          %v3765 = vld [vmem:[#allocation2] sm:$0xff]
          %v3766 = vld [vmem:[#allocation2 + $0x8] sm:$0xff]
          %v3767 = vld [vmem:[#allocation2 + $0x10] sm:$0xff]
          %v3768 = vld [vmem:[#allocation2 + $0x18] sm:$0xff]
          %v3769 = vld [vmem:[#allocation2 + $0x20] sm:$0xff]
          %v3770 = vld [vmem:[#allocation2 + $0x28] sm:$0xff]
          %v3771 = vld [vmem:[#allocation2 + $0x30] sm:$0xff]
          %v3772 = vld [vmem:[#allocation2 + $0x38] sm:$0xff]
          %v3773 = vld [vmem:[#allocation2 + $0x40] sm:$0xff]
          %v3774 = vld [vmem:[#allocation2 + $0x48] sm:$0xff]
          %v3775 = vld [vmem:[#allocation2 + $0x50] sm:$0xff]
          %v3776 = vld [vmem:[#allocation2 + $0x58] sm:$0xff]
          %v3777 = vld [vmem:[#allocation2 + $0x60] sm:$0xff]
          %v3778 = vld [vmem:[#allocation2 + $0x68] sm:$0xff]
          %v3779 = vld [vmem:[#allocation2 + $0x70] sm:$0xff]
          %v3780 = vld [vmem:[#allocation2 + $0x78] sm:$0xff]
          %v3781 = vld [vmem:[#allocation2 + $0x80] sm:$0xff]
          %v3782 = vld [vmem:[#allocation2 + $0x88] sm:$0xff]
          %v3783 = vld [vmem:[#allocation2 + $0x90] sm:$0xff]
          %v3784 = vld [vmem:[#allocation2 + $0x98] sm:$0xff]
          %v3785 = vld [vmem:[#allocation2 + $0xa0] sm:$0xff]
          %v3786 = vld [vmem:[#allocation2 + $0xa8] sm:$0xff]
          %v3787 = vld [vmem:[#allocation2 + $0xb0] sm:$0xff]
          %v3788 = vld [vmem:[#allocation2 + $0xb8] sm:$0xff]
          %v3789 = vld [vmem:[#allocation2 + $0xc0] sm:$0xff]
          %v3790 = vld [vmem:[#allocation2 + $0xc8] sm:$0xff]
          %v3791 = vld [vmem:[#allocation2 + $0xd0] sm:$0xff]
          %v3792 = vld [vmem:[#allocation2 + $0xd8] sm:$0xff]
          %v3793 = vld [vmem:[#allocation2 + $0xe0] sm:$0xff]
          %v3794 = vld [vmem:[#allocation2 + $0xe8] sm:$0xff]
          %v3795 = vld [vmem:[#allocation2 + $0xf0] sm:$0xff]
          %v3796 = vld [vmem:[#allocation2 + $0xf8] sm:$0xff]
          %v3797 = vld [vmem:[#allocation2 + $0x100] sm:$0xff]
          %v3798 = vld [vmem:[#allocation2 + $0x108] sm:$0xff]
          %v3799 = vld [vmem:[#allocation2 + $0x110] sm:$0xff]
          %v3800 = vld [vmem:[#allocation2 + $0x118] sm:$0xff]
          %v3801 = vld [vmem:[#allocation2 + $0x120] sm:$0xff]
          %v3802 = vld [vmem:[#allocation2 + $0x128] sm:$0xff]
          %v3803 = vld [vmem:[#allocation2 + $0x130] sm:$0xff]
          %v3804 = vld [vmem:[#allocation2 + $0x138] sm:$0xff]
          %v3805 = vld [vmem:[#allocation2 + $0x140] sm:$0xff]
          %v3806 = vld [vmem:[#allocation2 + $0x148] sm:$0xff]
          %v3807 = vld [vmem:[#allocation2 + $0x150] sm:$0xff]
          %v3808 = vld [vmem:[#allocation2 + $0x158] sm:$0xff]
          %v3809 = vld [vmem:[#allocation2 + $0x160] sm:$0xff]
          %v3810 = vld [vmem:[#allocation2 + $0x168] sm:$0xff]
          %v3811 = vld [vmem:[#allocation2 + $0x170] sm:$0xff]
          %v3812 = vld [vmem:[#allocation2 + $0x178] sm:$0xff]
          %v3813 = vld [vmem:[#allocation2 + $0x180] sm:$0xff]
          %v3814 = vld [vmem:[#allocation2 + $0x188] sm:$0xff]
          %v3815 = vld [vmem:[#allocation2 + $0x190] sm:$0xff]
          %v3816 = vld [vmem:[#allocation2 + $0x198] sm:$0xff]
          %v3817 = vld [vmem:[#allocation2 + $0x1a0] sm:$0xff]
          %v3818 = vld [vmem:[#allocation2 + $0x1a8] sm:$0xff]
          %v3819 = vld [vmem:[#allocation2 + $0x1b0] sm:$0xff]
          %v3820 = vld [vmem:[#allocation2 + $0x1b8] sm:$0xff]
          %v3821 = vld [vmem:[#allocation2 + $0x1c0] sm:$0xff]
          %v3822 = vld [vmem:[#allocation2 + $0x1c8] sm:$0xff]
          %v3823 = vld [vmem:[#allocation2 + $0x1d0] sm:$0xff]
          %v3824 = vld [vmem:[#allocation2 + $0x1d8] sm:$0xff]
          %v3825 = vld [vmem:[#allocation2 + $0x1e0] sm:$0xff]
          %v3826 = vld [vmem:[#allocation2 + $0x1e8] sm:$0xff]
          %v3827 = vld [vmem:[#allocation2 + $0x1f0] sm:$0xff]
          %v3828 = vld [vmem:[#allocation2 + $0x1f8] sm:$0xff]
          %v3829 = vrcp.pop %v3765
          %v3830 = vrcp.pop %v3766
          %v3831 = vrcp.pop %v3767
          %v3832 = vrcp.pop %v3768
          %v3833 = vrcp.pop %v3769
          %v3834 = vrcp.pop %v3770
          %v3835 = vrcp.pop %v3771
          %v3836 = vrcp.pop %v3772
          %v3837 = vrcp.pop %v3773
          %v3838 = vrcp.pop %v3774
          %v3839 = vrcp.pop %v3775
          %v3840 = vrcp.pop %v3776
          %v3841 = vrcp.pop %v3777
          %v3842 = vrcp.pop %v3778
          %v3843 = vrcp.pop %v3779
          %v3844 = vrcp.pop %v3780
          %v3845 = vrcp.pop %v3781
          %v3846 = vrcp.pop %v3782
          %v3847 = vrcp.pop %v3783
          %v3848 = vrcp.pop %v3784
          %v3849 = vrcp.pop %v3785
          %v3850 = vrcp.pop %v3786
          %v3851 = vrcp.pop %v3787
          %v3852 = vrcp.pop %v3788
          %v3853 = vrcp.pop %v3789
          %v3854 = vrcp.pop %v3790
          %v3855 = vrcp.pop %v3791
          %v3856 = vrcp.pop %v3792
          %v3857 = vrcp.pop %v3793
          %v3858 = vrcp.pop %v3794
          %v3859 = vrcp.pop %v3795
          %v3860 = vrcp.pop %v3796
          %v3861 = vrcp.pop %v3797
          %v3862 = vrcp.pop %v3798
          %v3863 = vrcp.pop %v3799
          %v3864 = vrcp.pop %v3800
          %v3865 = vrcp.pop %v3801
          %v3866 = vrcp.pop %v3802
          %v3867 = vrcp.pop %v3803
          %v3868 = vrcp.pop %v3804
          %v3869 = vrcp.pop %v3805
          %v3870 = vrcp.pop %v3806
          %v3871 = vrcp.pop %v3807
          %v3872 = vrcp.pop %v3808
          %v3873 = vrcp.pop %v3809
          %v3874 = vrcp.pop %v3810
          %v3875 = vrcp.pop %v3811
          %v3876 = vrcp.pop %v3812
          %v3877 = vrcp.pop %v3813
          %v3878 = vrcp.pop %v3814
          %v3879 = vrcp.pop %v3815
          %v3880 = vrcp.pop %v3816
          %v3881 = vrcp.pop %v3817
          %v3882 = vrcp.pop %v3818
          %v3883 = vrcp.pop %v3819
          %v3884 = vrcp.pop %v3820
          %v3885 = vrcp.pop %v3821
          %v3886 = vrcp.pop %v3822
          %v3887 = vrcp.pop %v3823
          %v3888 = vrcp.pop %v3824
          %v3889 = vrcp.pop %v3825
          %v3890 = vrcp.pop %v3826
          %v3891 = vrcp.pop %v3827
          %v3892 = vrcp.pop %v3828
          %3894 = vset.pattern.permute.xlu0 16
          %3895 = vperm.xlu0 %3894, %v3829
          %v3896 = vpop.permute.xlu0 %3895
          %3899 = vset.pattern.permute.xlu0 16
          %3900 = vperm.xlu0 %3899, %v3830
          %v3901 = vpop.permute.xlu0 %3900
          %3904 = vset.pattern.permute.xlu0 16
          %3905 = vperm.xlu0 %3904, %v3831
          %v3906 = vpop.permute.xlu0 %3905
          %3909 = vset.pattern.permute.xlu0 16
          %3910 = vperm.xlu0 %3909, %v3832
          %v3911 = vpop.permute.xlu0 %3910
          %3914 = vset.pattern.permute.xlu0 16
          %3915 = vperm.xlu0 %3914, %v3833
          %v3916 = vpop.permute.xlu0 %3915
          %3919 = vset.pattern.permute.xlu0 16
          %3920 = vperm.xlu0 %3919, %v3834
          %v3921 = vpop.permute.xlu0 %3920
          %3924 = vset.pattern.permute.xlu0 16
          %3925 = vperm.xlu0 %3924, %v3835
          %v3926 = vpop.permute.xlu0 %3925
          %3929 = vset.pattern.permute.xlu0 16
          %3930 = vperm.xlu0 %3929, %v3836
          %v3931 = vpop.permute.xlu0 %3930
          %3934 = vset.pattern.permute.xlu0 16
          %3935 = vperm.xlu0 %3934, %v3837
          %v3936 = vpop.permute.xlu0 %3935
          %3939 = vset.pattern.permute.xlu0 16
          %3940 = vperm.xlu0 %3939, %v3838
          %v3941 = vpop.permute.xlu0 %3940
          %3944 = vset.pattern.permute.xlu0 16
          %3945 = vperm.xlu0 %3944, %v3839
          %v3946 = vpop.permute.xlu0 %3945
          %3949 = vset.pattern.permute.xlu0 16
          %3950 = vperm.xlu0 %3949, %v3840
          %v3951 = vpop.permute.xlu0 %3950
          %3954 = vset.pattern.permute.xlu0 16
          %3955 = vperm.xlu0 %3954, %v3841
          %v3956 = vpop.permute.xlu0 %3955
          %3959 = vset.pattern.permute.xlu0 16
          %3960 = vperm.xlu0 %3959, %v3842
          %v3961 = vpop.permute.xlu0 %3960
          %3964 = vset.pattern.permute.xlu0 16
          %3965 = vperm.xlu0 %3964, %v3843
          %v3966 = vpop.permute.xlu0 %3965
          %3969 = vset.pattern.permute.xlu0 16
          %3970 = vperm.xlu0 %3969, %v3844
          %v3971 = vpop.permute.xlu0 %3970
          %3974 = vset.pattern.permute.xlu0 16
          %3975 = vperm.xlu0 %3974, %v3845
          %v3976 = vpop.permute.xlu0 %3975
          %3979 = vset.pattern.permute.xlu0 16
          %3980 = vperm.xlu0 %3979, %v3846
          %v3981 = vpop.permute.xlu0 %3980
          %3984 = vset.pattern.permute.xlu0 16
          %3985 = vperm.xlu0 %3984, %v3847
          %v3986 = vpop.permute.xlu0 %3985
          %3989 = vset.pattern.permute.xlu0 16
          %3990 = vperm.xlu0 %3989, %v3848
          %v3991 = vpop.permute.xlu0 %3990
          %3994 = vset.pattern.permute.xlu0 16
          %3995 = vperm.xlu0 %3994, %v3849
          %v3996 = vpop.permute.xlu0 %3995
          %3999 = vset.pattern.permute.xlu0 16
          %4000 = vperm.xlu0 %3999, %v3850
          %v4001 = vpop.permute.xlu0 %4000
          %4004 = vset.pattern.permute.xlu0 16
          %4005 = vperm.xlu0 %4004, %v3851
          %v4006 = vpop.permute.xlu0 %4005
          %4009 = vset.pattern.permute.xlu0 16
          %4010 = vperm.xlu0 %4009, %v3852
          %v4011 = vpop.permute.xlu0 %4010
          %4014 = vset.pattern.permute.xlu0 16
          %4015 = vperm.xlu0 %4014, %v3853
          %v4016 = vpop.permute.xlu0 %4015
          %4019 = vset.pattern.permute.xlu0 16
          %4020 = vperm.xlu0 %4019, %v3854
          %v4021 = vpop.permute.xlu0 %4020
          %4024 = vset.pattern.permute.xlu0 16
          %4025 = vperm.xlu0 %4024, %v3855
          %v4026 = vpop.permute.xlu0 %4025
          %4029 = vset.pattern.permute.xlu0 16
          %4030 = vperm.xlu0 %4029, %v3856
          %v4031 = vpop.permute.xlu0 %4030
          %4034 = vset.pattern.permute.xlu0 16
          %4035 = vperm.xlu0 %4034, %v3857
          %v4036 = vpop.permute.xlu0 %4035
          %4039 = vset.pattern.permute.xlu0 16
          %4040 = vperm.xlu0 %4039, %v3858
          %v4041 = vpop.permute.xlu0 %4040
          %4044 = vset.pattern.permute.xlu0 16
          %4045 = vperm.xlu0 %4044, %v3859
          %v4046 = vpop.permute.xlu0 %4045
          %4049 = vset.pattern.permute.xlu0 16
          %4050 = vperm.xlu0 %4049, %v3860
          %v4051 = vpop.permute.xlu0 %4050
          %4054 = vset.pattern.permute.xlu0 16
          %4055 = vperm.xlu0 %4054, %v3861
          %v4056 = vpop.permute.xlu0 %4055
          %4059 = vset.pattern.permute.xlu0 16
          %4060 = vperm.xlu0 %4059, %v3862
          %v4061 = vpop.permute.xlu0 %4060
          %4064 = vset.pattern.permute.xlu0 16
          %4065 = vperm.xlu0 %4064, %v3863
          %v4066 = vpop.permute.xlu0 %4065
          %4069 = vset.pattern.permute.xlu0 16
          %4070 = vperm.xlu0 %4069, %v3864
          %v4071 = vpop.permute.xlu0 %4070
          %4074 = vset.pattern.permute.xlu0 16
          %4075 = vperm.xlu0 %4074, %v3865
          %v4076 = vpop.permute.xlu0 %4075
          %4079 = vset.pattern.permute.xlu0 16
          %4080 = vperm.xlu0 %4079, %v3866
          %v4081 = vpop.permute.xlu0 %4080
          %4084 = vset.pattern.permute.xlu0 16
          %4085 = vperm.xlu0 %4084, %v3867
          %v4086 = vpop.permute.xlu0 %4085
          %4089 = vset.pattern.permute.xlu0 16
          %4090 = vperm.xlu0 %4089, %v3868
          %v4091 = vpop.permute.xlu0 %4090
          %4094 = vset.pattern.permute.xlu0 16
          %4095 = vperm.xlu0 %4094, %v3869
          %v4096 = vpop.permute.xlu0 %4095
          %4099 = vset.pattern.permute.xlu0 16
          %4100 = vperm.xlu0 %4099, %v3870
          %v4101 = vpop.permute.xlu0 %4100
          %4104 = vset.pattern.permute.xlu0 16
          %4105 = vperm.xlu0 %4104, %v3871
          %v4106 = vpop.permute.xlu0 %4105
          %4109 = vset.pattern.permute.xlu0 16
          %4110 = vperm.xlu0 %4109, %v3872
          %v4111 = vpop.permute.xlu0 %4110
          %4114 = vset.pattern.permute.xlu0 16
          %4115 = vperm.xlu0 %4114, %v3873
          %v4116 = vpop.permute.xlu0 %4115
          %4119 = vset.pattern.permute.xlu0 16
          %4120 = vperm.xlu0 %4119, %v3874
          %v4121 = vpop.permute.xlu0 %4120
          %4124 = vset.pattern.permute.xlu0 16
          %4125 = vperm.xlu0 %4124, %v3875
          %v4126 = vpop.permute.xlu0 %4125
          %4129 = vset.pattern.permute.xlu0 16
          %4130 = vperm.xlu0 %4129, %v3876
          %v4131 = vpop.permute.xlu0 %4130
          %4134 = vset.pattern.permute.xlu0 16
          %4135 = vperm.xlu0 %4134, %v3877
          %v4136 = vpop.permute.xlu0 %4135
          %4139 = vset.pattern.permute.xlu0 16
          %4140 = vperm.xlu0 %4139, %v3878
          %v4141 = vpop.permute.xlu0 %4140
          %4144 = vset.pattern.permute.xlu0 16
          %4145 = vperm.xlu0 %4144, %v3879
          %v4146 = vpop.permute.xlu0 %4145
          %4149 = vset.pattern.permute.xlu0 16
          %4150 = vperm.xlu0 %4149, %v3880
          %v4151 = vpop.permute.xlu0 %4150
          %4154 = vset.pattern.permute.xlu0 16
          %4155 = vperm.xlu0 %4154, %v3881
          %v4156 = vpop.permute.xlu0 %4155
          %4159 = vset.pattern.permute.xlu0 16
          %4160 = vperm.xlu0 %4159, %v3882
          %v4161 = vpop.permute.xlu0 %4160
          %4164 = vset.pattern.permute.xlu0 16
          %4165 = vperm.xlu0 %4164, %v3883
          %v4166 = vpop.permute.xlu0 %4165
          %4169 = vset.pattern.permute.xlu0 16
          %4170 = vperm.xlu0 %4169, %v3884
          %v4171 = vpop.permute.xlu0 %4170
          %4174 = vset.pattern.permute.xlu0 16
          %4175 = vperm.xlu0 %4174, %v3885
          %v4176 = vpop.permute.xlu0 %4175
          %4179 = vset.pattern.permute.xlu0 16
          %4180 = vperm.xlu0 %4179, %v3886
          %v4181 = vpop.permute.xlu0 %4180
          %4184 = vset.pattern.permute.xlu0 16
          %4185 = vperm.xlu0 %4184, %v3887
          %v4186 = vpop.permute.xlu0 %4185
          %4189 = vset.pattern.permute.xlu0 16
          %4190 = vperm.xlu0 %4189, %v3888
          %v4191 = vpop.permute.xlu0 %4190
          %4194 = vset.pattern.permute.xlu0 16
          %4195 = vperm.xlu0 %4194, %v3889
          %v4196 = vpop.permute.xlu0 %4195
          %4199 = vset.pattern.permute.xlu0 16
          %4200 = vperm.xlu0 %4199, %v3890
          %v4201 = vpop.permute.xlu0 %4200
          %4204 = vset.pattern.permute.xlu0 16
          %4205 = vperm.xlu0 %4204, %v3891
          %v4206 = vpop.permute.xlu0 %4205
          %4209 = vset.pattern.permute.xlu0 16
          %4210 = vperm.xlu0 %4209, %v3892
          %v4211 = vpop.permute.xlu0 %4210
          %v4213 = vmul.f32 %v3765, %v3896
          %v4214 = vmul.f32 %v3766, %v3901
          %v4215 = vmul.f32 %v3767, %v3906
          %v4216 = vmul.f32 %v3768, %v3911
          %v4217 = vmul.f32 %v3769, %v3916
          %v4218 = vmul.f32 %v3770, %v3921
          %v4219 = vmul.f32 %v3771, %v3926
          %v4220 = vmul.f32 %v3772, %v3931
          %v4221 = vmul.f32 %v3773, %v3936
          %v4222 = vmul.f32 %v3774, %v3941
          %v4223 = vmul.f32 %v3775, %v3946
          %v4224 = vmul.f32 %v3776, %v3951
          %v4225 = vmul.f32 %v3777, %v3956
          %v4226 = vmul.f32 %v3778, %v3961
          %v4227 = vmul.f32 %v3779, %v3966
          %v4228 = vmul.f32 %v3780, %v3971
          %v4229 = vmul.f32 %v3781, %v3976
          %v4230 = vmul.f32 %v3782, %v3981
          %v4231 = vmul.f32 %v3783, %v3986
          %v4232 = vmul.f32 %v3784, %v3991
          %v4233 = vmul.f32 %v3785, %v3996
          %v4234 = vmul.f32 %v3786, %v4001
          %v4235 = vmul.f32 %v3787, %v4006
          %v4236 = vmul.f32 %v3788, %v4011
          %v4237 = vmul.f32 %v3789, %v4016
          %v4238 = vmul.f32 %v3790, %v4021
          %v4239 = vmul.f32 %v3791, %v4026
          %v4240 = vmul.f32 %v3792, %v4031
          %v4241 = vmul.f32 %v3793, %v4036
          %v4242 = vmul.f32 %v3794, %v4041
          %v4243 = vmul.f32 %v3795, %v4046
          %v4244 = vmul.f32 %v3796, %v4051
          %v4245 = vmul.f32 %v3797, %v4056
          %v4246 = vmul.f32 %v3798, %v4061
          %v4247 = vmul.f32 %v3799, %v4066
          %v4248 = vmul.f32 %v3800, %v4071
          %v4249 = vmul.f32 %v3801, %v4076
          %v4250 = vmul.f32 %v3802, %v4081
          %v4251 = vmul.f32 %v3803, %v4086
          %v4252 = vmul.f32 %v3804, %v4091
          %v4253 = vmul.f32 %v3805, %v4096
          %v4254 = vmul.f32 %v3806, %v4101
          %v4255 = vmul.f32 %v3807, %v4106
          %v4256 = vmul.f32 %v3808, %v4111
          %v4257 = vmul.f32 %v3809, %v4116
          %v4258 = vmul.f32 %v3810, %v4121
          %v4259 = vmul.f32 %v3811, %v4126
          %v4260 = vmul.f32 %v3812, %v4131
          %v4261 = vmul.f32 %v3813, %v4136
          %v4262 = vmul.f32 %v3814, %v4141
          %v4263 = vmul.f32 %v3815, %v4146
          %v4264 = vmul.f32 %v3816, %v4151
          %v4265 = vmul.f32 %v3817, %v4156
          %v4266 = vmul.f32 %v3818, %v4161
          %v4267 = vmul.f32 %v3819, %v4166
          %v4268 = vmul.f32 %v3820, %v4171
          %v4269 = vmul.f32 %v3821, %v4176
          %v4270 = vmul.f32 %v3822, %v4181
          %v4271 = vmul.f32 %v3823, %v4186
          %v4272 = vmul.f32 %v3824, %v4191
          %v4273 = vmul.f32 %v3825, %v4196
          %v4274 = vmul.f32 %v3826, %v4201
          %v4275 = vmul.f32 %v3827, %v4206
          %v4276 = vmul.f32 %v3828, %v4211
          %vm4277 = vcmask 130048
          %4278 = vst.msk [vmem:[%s1272] sm:$0xff] %vm4277, %v4213
          %4279 = vst.msk [vmem:[%s1272 + $0x8] sm:$0xff] %vm4277, %v4214
          %4280 = vst.msk [vmem:[%s1272 + $0x10] sm:$0xff] %vm4277, %v4215
          %4281 = vst.msk [vmem:[%s1272 + $0x18] sm:$0xff] %vm4277, %v4216
          %4282 = vst.msk [vmem:[%s1272 + $0x20] sm:$0xff] %vm4277, %v4217
          %4283 = vst.msk [vmem:[%s1272 + $0x28] sm:$0xff] %vm4277, %v4218
          %4284 = vst.msk [vmem:[%s1272 + $0x30] sm:$0xff] %vm4277, %v4219
          %4285 = vst.msk [vmem:[%s1272 + $0x38] sm:$0xff] %vm4277, %v4220
          %4286 = vst.msk [vmem:[%s1272 + $0x40] sm:$0xff] %vm4277, %v4221
          %4287 = vst.msk [vmem:[%s1272 + $0x48] sm:$0xff] %vm4277, %v4222
          %4288 = vst.msk [vmem:[%s1272 + $0x50] sm:$0xff] %vm4277, %v4223
          %4289 = vst.msk [vmem:[%s1272 + $0x58] sm:$0xff] %vm4277, %v4224
          %4290 = vst.msk [vmem:[%s1272 + $0x60] sm:$0xff] %vm4277, %v4225
          %4291 = vst.msk [vmem:[%s1272 + $0x68] sm:$0xff] %vm4277, %v4226
          %4292 = vst.msk [vmem:[%s1272 + $0x70] sm:$0xff] %vm4277, %v4227
          %4293 = vst.msk [vmem:[%s1272 + $0x78] sm:$0xff] %vm4277, %v4228
          %4294 = vst.msk [vmem:[%s1272 + $0x80] sm:$0xff] %vm4277, %v4229
          %4295 = vst.msk [vmem:[%s1272 + $0x88] sm:$0xff] %vm4277, %v4230
          %4296 = vst.msk [vmem:[%s1272 + $0x90] sm:$0xff] %vm4277, %v4231
          %4297 = vst.msk [vmem:[%s1272 + $0x98] sm:$0xff] %vm4277, %v4232
          %4298 = vst.msk [vmem:[%s1272 + $0xa0] sm:$0xff] %vm4277, %v4233
          %4299 = vst.msk [vmem:[%s1272 + $0xa8] sm:$0xff] %vm4277, %v4234
          %4300 = vst.msk [vmem:[%s1272 + $0xb0] sm:$0xff] %vm4277, %v4235
          %4301 = vst.msk [vmem:[%s1272 + $0xb8] sm:$0xff] %vm4277, %v4236
          %4302 = vst.msk [vmem:[%s1272 + $0xc0] sm:$0xff] %vm4277, %v4237
          %4303 = vst.msk [vmem:[%s1272 + $0xc8] sm:$0xff] %vm4277, %v4238
          %4304 = vst.msk [vmem:[%s1272 + $0xd0] sm:$0xff] %vm4277, %v4239
          %4305 = vst.msk [vmem:[%s1272 + $0xd8] sm:$0xff] %vm4277, %v4240
          %4306 = vst.msk [vmem:[%s1272 + $0xe0] sm:$0xff] %vm4277, %v4241
          %4307 = vst.msk [vmem:[%s1272 + $0xe8] sm:$0xff] %vm4277, %v4242
          %4308 = vst.msk [vmem:[%s1272 + $0xf0] sm:$0xff] %vm4277, %v4243
          %4309 = vst.msk [vmem:[%s1272 + $0xf8] sm:$0xff] %vm4277, %v4244
          %4310 = vst.msk [vmem:[%s1272 + $0x100] sm:$0xff] %vm4277, %v4245
          %4311 = vst.msk [vmem:[%s1272 + $0x108] sm:$0xff] %vm4277, %v4246
          %4312 = vst.msk [vmem:[%s1272 + $0x110] sm:$0xff] %vm4277, %v4247
          %4313 = vst.msk [vmem:[%s1272 + $0x118] sm:$0xff] %vm4277, %v4248
          %4314 = vst.msk [vmem:[%s1272 + $0x120] sm:$0xff] %vm4277, %v4249
          %4315 = vst.msk [vmem:[%s1272 + $0x128] sm:$0xff] %vm4277, %v4250
          %4316 = vst.msk [vmem:[%s1272 + $0x130] sm:$0xff] %vm4277, %v4251
          %4317 = vst.msk [vmem:[%s1272 + $0x138] sm:$0xff] %vm4277, %v4252
          %4318 = vst.msk [vmem:[%s1272 + $0x140] sm:$0xff] %vm4277, %v4253
          %4319 = vst.msk [vmem:[%s1272 + $0x148] sm:$0xff] %vm4277, %v4254
          %4320 = vst.msk [vmem:[%s1272 + $0x150] sm:$0xff] %vm4277, %v4255
          %4321 = vst.msk [vmem:[%s1272 + $0x158] sm:$0xff] %vm4277, %v4256
          %4322 = vst.msk [vmem:[%s1272 + $0x160] sm:$0xff] %vm4277, %v4257
          %4323 = vst.msk [vmem:[%s1272 + $0x168] sm:$0xff] %vm4277, %v4258
          %4324 = vst.msk [vmem:[%s1272 + $0x170] sm:$0xff] %vm4277, %v4259
          %4325 = vst.msk [vmem:[%s1272 + $0x178] sm:$0xff] %vm4277, %v4260
          %4326 = vst.msk [vmem:[%s1272 + $0x180] sm:$0xff] %vm4277, %v4261
          %4327 = vst.msk [vmem:[%s1272 + $0x188] sm:$0xff] %vm4277, %v4262
          %4328 = vst.msk [vmem:[%s1272 + $0x190] sm:$0xff] %vm4277, %v4263
          %4329 = vst.msk [vmem:[%s1272 + $0x198] sm:$0xff] %vm4277, %v4264
          %4330 = vst.msk [vmem:[%s1272 + $0x1a0] sm:$0xff] %vm4277, %v4265
          %4331 = vst.msk [vmem:[%s1272 + $0x1a8] sm:$0xff] %vm4277, %v4266
          %4332 = vst.msk [vmem:[%s1272 + $0x1b0] sm:$0xff] %vm4277, %v4267
          %4333 = vst.msk [vmem:[%s1272 + $0x1b8] sm:$0xff] %vm4277, %v4268
          %4334 = vst.msk [vmem:[%s1272 + $0x1c0] sm:$0xff] %vm4277, %v4269
          %4335 = vst.msk [vmem:[%s1272 + $0x1c8] sm:$0xff] %vm4277, %v4270
          %4336 = vst.msk [vmem:[%s1272 + $0x1d0] sm:$0xff] %vm4277, %v4271
          %4337 = vst.msk [vmem:[%s1272 + $0x1d8] sm:$0xff] %vm4277, %v4272
          %4338 = vst.msk [vmem:[%s1272 + $0x1e0] sm:$0xff] %vm4277, %v4273
          %4339 = vst.msk [vmem:[%s1272 + $0x1e8] sm:$0xff] %vm4277, %v4274
          %4340 = vst.msk [vmem:[%s1272 + $0x1f0] sm:$0xff] %vm4277, %v4275
          %4341 = vst.msk [vmem:[%s1272 + $0x1f8] sm:$0xff] %vm4277, %v4276
        $region203: #{tpu_custom_call.1} parent=174 // pred_fallthru
          _
        %s4342 = sand.u32 %s173, 1
        %s4343 = sand.u32 %s173, 1
        %s4344 = smul.addr %s4343, 512
        %s4345 = scalar_lea.vmem [#allocation10], %s4344
        // Predicated region
        $region204: #{tpu_custom_call.1} parent=174 // pred_check
          %p4346 = pneg %p183
        $region205: #{tpu_custom_call.1} parent=174 // pred_check_branch
          %4348 = sbr.rel (%p4346) target = $region207
        $region206: #{tpu_custom_call.1} parent=174 // pred_region
          %s4349 = smul.u32 16, %s31
          %s4350 = smul.addr %s4349, 8
          %s4351 = scalar_lea.vmem %s6, %s4350
          // Predicated region
          $region208: #{tpu_custom_call.1} parent=206 // pred_check
            _
          $region209: #{tpu_custom_call.1} parent=206 // pred_check_branch
            %4353 = sbr.rel (0) target = $region211
          $region210: #{tpu_custom_call.1} parent=206 // pred_region
            // Predicated region
            $region212: #{tpu_custom_call.1} parent=210 // pred_check
              _
            $region213: #{tpu_custom_call.1} parent=210 // pred_check_branch
              %4355 = sbr.rel (0) target = $region215
            $region214: #{tpu_custom_call.1} parent=210 // pred_region
              // Predicated region
              $region227: #{tpu_custom_call.1} parent=214 // pred_check
                _
              $region228: #{tpu_custom_call.1} parent=214 // pred_check_branch
                %4496 = sbr.rel (0) target = $region230
              $region229: #{tpu_custom_call.1} parent=214 // pred_region
                loop: start=0, step=1, limit=1
                $region231: #{tpu_custom_call.1} parent=229 // loop_pre_header
                  _
                $region232: #{tpu_custom_call.1} parent=229 // loop_header
                  %s4498 = sphi 0, %s4502
                  %p4499 = scmp.ge.s32.totalorder %s4498, 1
                  %s4503 = sphi %s4345, %s4345
                  %s4504 = sphi %s4351, %s4351
                $region233: #{tpu_custom_call.1} parent=229 // loop_header_branch
                  %4501 = sbr.rel (%p4499) target = $region237
                $region234: #{tpu_custom_call.1} parent=229 // loop_body
                  %v4505 = vld [vmem:[%s4503] sm:$0xff]
                  %4506 = vst [vmem:[%s4504] sm:$0xff] %v4505
                  %v4507 = vld [vmem:[%s4503 + $0x8] sm:$0xff]
                  %4508 = vst [vmem:[%s4504 + $0x8] sm:$0xff] %v4507
                  %v4509 = vld [vmem:[%s4503 + $0x10] sm:$0xff]
                  %4510 = vst [vmem:[%s4504 + $0x10] sm:$0xff] %v4509
                  %v4511 = vld [vmem:[%s4503 + $0x18] sm:$0xff]
                  %4512 = vst [vmem:[%s4504 + $0x18] sm:$0xff] %v4511
                  %v4513 = vld [vmem:[%s4503 + $0x20] sm:$0xff]
                  %4514 = vst [vmem:[%s4504 + $0x20] sm:$0xff] %v4513
                  %v4515 = vld [vmem:[%s4503 + $0x28] sm:$0xff]
                  %4516 = vst [vmem:[%s4504 + $0x28] sm:$0xff] %v4515
                  %v4517 = vld [vmem:[%s4503 + $0x30] sm:$0xff]
                  %4518 = vst [vmem:[%s4504 + $0x30] sm:$0xff] %v4517
                  %v4519 = vld [vmem:[%s4503 + $0x38] sm:$0xff]
                  %4520 = vst [vmem:[%s4504 + $0x38] sm:$0xff] %v4519
                  %v4521 = vld [vmem:[%s4503 + $0x40] sm:$0xff]
                  %4522 = vst [vmem:[%s4504 + $0x40] sm:$0xff] %v4521
                  %v4523 = vld [vmem:[%s4503 + $0x48] sm:$0xff]
                  %4524 = vst [vmem:[%s4504 + $0x48] sm:$0xff] %v4523
                  %v4525 = vld [vmem:[%s4503 + $0x50] sm:$0xff]
                  %4526 = vst [vmem:[%s4504 + $0x50] sm:$0xff] %v4525
                  %v4527 = vld [vmem:[%s4503 + $0x58] sm:$0xff]
                  %4528 = vst [vmem:[%s4504 + $0x58] sm:$0xff] %v4527
                  %v4529 = vld [vmem:[%s4503 + $0x60] sm:$0xff]
                  %4530 = vst [vmem:[%s4504 + $0x60] sm:$0xff] %v4529
                  %v4531 = vld [vmem:[%s4503 + $0x68] sm:$0xff]
                  %4532 = vst [vmem:[%s4504 + $0x68] sm:$0xff] %v4531
                  %v4533 = vld [vmem:[%s4503 + $0x70] sm:$0xff]
                  %4534 = vst [vmem:[%s4504 + $0x70] sm:$0xff] %v4533
                  %v4535 = vld [vmem:[%s4503 + $0x78] sm:$0xff]
                  %4536 = vst [vmem:[%s4504 + $0x78] sm:$0xff] %v4535
                  %v4537 = vld [vmem:[%s4503 + $0x80] sm:$0xff]
                  %4538 = vst [vmem:[%s4504 + $0x100] sm:$0xff] %v4537
                  %v4539 = vld [vmem:[%s4503 + $0x88] sm:$0xff]
                  %4540 = vst [vmem:[%s4504 + $0x108] sm:$0xff] %v4539
                  %v4541 = vld [vmem:[%s4503 + $0x90] sm:$0xff]
                  %4542 = vst [vmem:[%s4504 + $0x110] sm:$0xff] %v4541
                  %v4543 = vld [vmem:[%s4503 + $0x98] sm:$0xff]
                  %4544 = vst [vmem:[%s4504 + $0x118] sm:$0xff] %v4543
                  %v4545 = vld [vmem:[%s4503 + $0xa0] sm:$0xff]
                  %4546 = vst [vmem:[%s4504 + $0x120] sm:$0xff] %v4545
                  %v4547 = vld [vmem:[%s4503 + $0xa8] sm:$0xff]
                  %4548 = vst [vmem:[%s4504 + $0x128] sm:$0xff] %v4547
                  %v4549 = vld [vmem:[%s4503 + $0xb0] sm:$0xff]
                  %4550 = vst [vmem:[%s4504 + $0x130] sm:$0xff] %v4549
                  %v4551 = vld [vmem:[%s4503 + $0xb8] sm:$0xff]
                  %4552 = vst [vmem:[%s4504 + $0x138] sm:$0xff] %v4551
                  %v4553 = vld [vmem:[%s4503 + $0xc0] sm:$0xff]
                  %4554 = vst [vmem:[%s4504 + $0x140] sm:$0xff] %v4553
                  %v4555 = vld [vmem:[%s4503 + $0xc8] sm:$0xff]
                  %4556 = vst [vmem:[%s4504 + $0x148] sm:$0xff] %v4555
                  %v4557 = vld [vmem:[%s4503 + $0xd0] sm:$0xff]
                  %4558 = vst [vmem:[%s4504 + $0x150] sm:$0xff] %v4557
                  %v4559 = vld [vmem:[%s4503 + $0xd8] sm:$0xff]
                  %4560 = vst [vmem:[%s4504 + $0x158] sm:$0xff] %v4559
                  %v4561 = vld [vmem:[%s4503 + $0xe0] sm:$0xff]
                  %4562 = vst [vmem:[%s4504 + $0x160] sm:$0xff] %v4561
                  %v4563 = vld [vmem:[%s4503 + $0xe8] sm:$0xff]
                  %4564 = vst [vmem:[%s4504 + $0x168] sm:$0xff] %v4563
                  %v4565 = vld [vmem:[%s4503 + $0xf0] sm:$0xff]
                  %4566 = vst [vmem:[%s4504 + $0x170] sm:$0xff] %v4565
                  %v4567 = vld [vmem:[%s4503 + $0xf8] sm:$0xff]
                  %4568 = vst [vmem:[%s4504 + $0x178] sm:$0xff] %v4567
                  %v4569 = vld [vmem:[%s4503 + $0x100] sm:$0xff]
                  %4570 = vst [vmem:[%s4504 + $0x200] sm:$0xff] %v4569
                  %v4571 = vld [vmem:[%s4503 + $0x108] sm:$0xff]
                  %4572 = vst [vmem:[%s4504 + $0x208] sm:$0xff] %v4571
                  %v4573 = vld [vmem:[%s4503 + $0x110] sm:$0xff]
                  %4574 = vst [vmem:[%s4504 + $0x210] sm:$0xff] %v4573
                  %v4575 = vld [vmem:[%s4503 + $0x118] sm:$0xff]
                  %4576 = vst [vmem:[%s4504 + $0x218] sm:$0xff] %v4575
                  %v4577 = vld [vmem:[%s4503 + $0x120] sm:$0xff]
                  %4578 = vst [vmem:[%s4504 + $0x220] sm:$0xff] %v4577
                  %v4579 = vld [vmem:[%s4503 + $0x128] sm:$0xff]
                  %4580 = vst [vmem:[%s4504 + $0x228] sm:$0xff] %v4579
                  %v4581 = vld [vmem:[%s4503 + $0x130] sm:$0xff]
                  %4582 = vst [vmem:[%s4504 + $0x230] sm:$0xff] %v4581
                  %v4583 = vld [vmem:[%s4503 + $0x138] sm:$0xff]
                  %4584 = vst [vmem:[%s4504 + $0x238] sm:$0xff] %v4583
                  %v4585 = vld [vmem:[%s4503 + $0x140] sm:$0xff]
                  %4586 = vst [vmem:[%s4504 + $0x240] sm:$0xff] %v4585
                  %v4587 = vld [vmem:[%s4503 + $0x148] sm:$0xff]
                  %4588 = vst [vmem:[%s4504 + $0x248] sm:$0xff] %v4587
                  %v4589 = vld [vmem:[%s4503 + $0x150] sm:$0xff]
                  %4590 = vst [vmem:[%s4504 + $0x250] sm:$0xff] %v4589
                  %v4591 = vld [vmem:[%s4503 + $0x158] sm:$0xff]
                  %4592 = vst [vmem:[%s4504 + $0x258] sm:$0xff] %v4591
                  %v4593 = vld [vmem:[%s4503 + $0x160] sm:$0xff]
                  %4594 = vst [vmem:[%s4504 + $0x260] sm:$0xff] %v4593
                  %v4595 = vld [vmem:[%s4503 + $0x168] sm:$0xff]
                  %4596 = vst [vmem:[%s4504 + $0x268] sm:$0xff] %v4595
                  %v4597 = vld [vmem:[%s4503 + $0x170] sm:$0xff]
                  %4598 = vst [vmem:[%s4504 + $0x270] sm:$0xff] %v4597
                  %v4599 = vld [vmem:[%s4503 + $0x178] sm:$0xff]
                  %4600 = vst [vmem:[%s4504 + $0x278] sm:$0xff] %v4599
                  %v4601 = vld [vmem:[%s4503 + $0x180] sm:$0xff]
                  %4602 = vst [vmem:[%s4504 + $0x300] sm:$0xff] %v4601
                  %v4603 = vld [vmem:[%s4503 + $0x188] sm:$0xff]
                  %4604 = vst [vmem:[%s4504 + $0x308] sm:$0xff] %v4603
                  %v4605 = vld [vmem:[%s4503 + $0x190] sm:$0xff]
                  %4606 = vst [vmem:[%s4504 + $0x310] sm:$0xff] %v4605
                  %v4607 = vld [vmem:[%s4503 + $0x198] sm:$0xff]
                  %4608 = vst [vmem:[%s4504 + $0x318] sm:$0xff] %v4607
                  %v4609 = vld [vmem:[%s4503 + $0x1a0] sm:$0xff]
                  %4610 = vst [vmem:[%s4504 + $0x320] sm:$0xff] %v4609
                  %v4611 = vld [vmem:[%s4503 + $0x1a8] sm:$0xff]
                  %4612 = vst [vmem:[%s4504 + $0x328] sm:$0xff] %v4611
                  %v4613 = vld [vmem:[%s4503 + $0x1b0] sm:$0xff]
                  %4614 = vst [vmem:[%s4504 + $0x330] sm:$0xff] %v4613
                  %v4615 = vld [vmem:[%s4503 + $0x1b8] sm:$0xff]
                  %4616 = vst [vmem:[%s4504 + $0x338] sm:$0xff] %v4615
                  %v4617 = vld [vmem:[%s4503 + $0x1c0] sm:$0xff]
                  %4618 = vst [vmem:[%s4504 + $0x340] sm:$0xff] %v4617
                  %v4619 = vld [vmem:[%s4503 + $0x1c8] sm:$0xff]
                  %4620 = vst [vmem:[%s4504 + $0x348] sm:$0xff] %v4619
                  %v4621 = vld [vmem:[%s4503 + $0x1d0] sm:$0xff]
                  %4622 = vst [vmem:[%s4504 + $0x350] sm:$0xff] %v4621
                  %v4623 = vld [vmem:[%s4503 + $0x1d8] sm:$0xff]
                  %4624 = vst [vmem:[%s4504 + $0x358] sm:$0xff] %v4623
                  %v4625 = vld [vmem:[%s4503 + $0x1e0] sm:$0xff]
                  %4626 = vst [vmem:[%s4504 + $0x360] sm:$0xff] %v4625
                  %v4627 = vld [vmem:[%s4503 + $0x1e8] sm:$0xff]
                  %4628 = vst [vmem:[%s4504 + $0x368] sm:$0xff] %v4627
                  %v4629 = vld [vmem:[%s4503 + $0x1f0] sm:$0xff]
                  %4630 = vst [vmem:[%s4504 + $0x370] sm:$0xff] %v4629
                  %v4631 = vld [vmem:[%s4503 + $0x1f8] sm:$0xff]
                  %4632 = vst [vmem:[%s4504 + $0x378] sm:$0xff] %v4631
                $region235: #{tpu_custom_call.1} parent=229 // loop_footer
                  %s4502 = sadd.s32 1, %s4498
                $region236: #{tpu_custom_call.1} parent=229 // loop_footer_branch
                  %4497 = sbr.rel target = $region232
                $region237: #{tpu_custom_call.1} parent=229 // loop_exit
                  _
              $region230: #{tpu_custom_call.1} parent=214 // pred_fallthru
                _
              // Predicated region
              $region238: #{tpu_custom_call.1} parent=214 // pred_check
                _
              $region239: #{tpu_custom_call.1} parent=214 // pred_check_branch
                %4634 = sbr.rel target = $region241
              $region240: #{tpu_custom_call.1} parent=214 // pred_region
                _
              $region241: #{tpu_custom_call.1} parent=214 // pred_fallthru
                _
            $region215: #{tpu_custom_call.1} parent=210 // pred_fallthru
              _
            // Predicated region
            $region216: #{tpu_custom_call.1} parent=210 // pred_check
              _
            $region217: #{tpu_custom_call.1} parent=210 // pred_check_branch
              %4357 = sbr.rel target = $region219
            $region218: #{tpu_custom_call.1} parent=210 // pred_region
              loop: start=0, step=1, limit=1
              $region220: #{tpu_custom_call.1} parent=218 // loop_pre_header
                _
              $region221: #{tpu_custom_call.1} parent=218 // loop_header
                %s4360 = sphi 0, %s4364
                %p4361 = scmp.ge.s32.totalorder %s4360, 1
                %s4365 = sphi %s4345, %s4345
                %s4366 = sphi %s4351, %s4351
              $region222: #{tpu_custom_call.1} parent=218 // loop_header_branch
                %4363 = sbr.rel (%p4361) target = $region226
              $region223: #{tpu_custom_call.1} parent=218 // loop_body
                %v4367 = vld [vmem:[%s4365] sm:$0xff]
                %4368 = vst [vmem:[%s4366] sm:$0xff] %v4367
                %v4369 = vld [vmem:[%s4365 + $0x8] sm:$0xff]
                %4370 = vst [vmem:[%s4366 + $0x8] sm:$0xff] %v4369
                %v4371 = vld [vmem:[%s4365 + $0x10] sm:$0xff]
                %4372 = vst [vmem:[%s4366 + $0x10] sm:$0xff] %v4371
                %v4373 = vld [vmem:[%s4365 + $0x18] sm:$0xff]
                %4374 = vst [vmem:[%s4366 + $0x18] sm:$0xff] %v4373
                %v4375 = vld [vmem:[%s4365 + $0x20] sm:$0xff]
                %4376 = vst [vmem:[%s4366 + $0x20] sm:$0xff] %v4375
                %v4377 = vld [vmem:[%s4365 + $0x28] sm:$0xff]
                %4378 = vst [vmem:[%s4366 + $0x28] sm:$0xff] %v4377
                %v4379 = vld [vmem:[%s4365 + $0x30] sm:$0xff]
                %4380 = vst [vmem:[%s4366 + $0x30] sm:$0xff] %v4379
                %v4381 = vld [vmem:[%s4365 + $0x38] sm:$0xff]
                %4382 = vst [vmem:[%s4366 + $0x38] sm:$0xff] %v4381
                %v4383 = vld [vmem:[%s4365 + $0x40] sm:$0xff]
                %4384 = vst [vmem:[%s4366 + $0x40] sm:$0xff] %v4383
                %v4385 = vld [vmem:[%s4365 + $0x48] sm:$0xff]
                %4386 = vst [vmem:[%s4366 + $0x48] sm:$0xff] %v4385
                %v4387 = vld [vmem:[%s4365 + $0x50] sm:$0xff]
                %4388 = vst [vmem:[%s4366 + $0x50] sm:$0xff] %v4387
                %v4389 = vld [vmem:[%s4365 + $0x58] sm:$0xff]
                %4390 = vst [vmem:[%s4366 + $0x58] sm:$0xff] %v4389
                %v4391 = vld [vmem:[%s4365 + $0x60] sm:$0xff]
                %4392 = vst [vmem:[%s4366 + $0x60] sm:$0xff] %v4391
                %v4393 = vld [vmem:[%s4365 + $0x68] sm:$0xff]
                %4394 = vst [vmem:[%s4366 + $0x68] sm:$0xff] %v4393
                %v4395 = vld [vmem:[%s4365 + $0x70] sm:$0xff]
                %4396 = vst [vmem:[%s4366 + $0x70] sm:$0xff] %v4395
                %v4397 = vld [vmem:[%s4365 + $0x78] sm:$0xff]
                %4398 = vst [vmem:[%s4366 + $0x78] sm:$0xff] %v4397
                %v4399 = vld [vmem:[%s4365 + $0x80] sm:$0xff]
                %4400 = vst [vmem:[%s4366 + $0x100] sm:$0xff] %v4399
                %v4401 = vld [vmem:[%s4365 + $0x88] sm:$0xff]
                %4402 = vst [vmem:[%s4366 + $0x108] sm:$0xff] %v4401
                %v4403 = vld [vmem:[%s4365 + $0x90] sm:$0xff]
                %4404 = vst [vmem:[%s4366 + $0x110] sm:$0xff] %v4403
                %v4405 = vld [vmem:[%s4365 + $0x98] sm:$0xff]
                %4406 = vst [vmem:[%s4366 + $0x118] sm:$0xff] %v4405
                %v4407 = vld [vmem:[%s4365 + $0xa0] sm:$0xff]
                %4408 = vst [vmem:[%s4366 + $0x120] sm:$0xff] %v4407
                %v4409 = vld [vmem:[%s4365 + $0xa8] sm:$0xff]
                %4410 = vst [vmem:[%s4366 + $0x128] sm:$0xff] %v4409
                %v4411 = vld [vmem:[%s4365 + $0xb0] sm:$0xff]
                %4412 = vst [vmem:[%s4366 + $0x130] sm:$0xff] %v4411
                %v4413 = vld [vmem:[%s4365 + $0xb8] sm:$0xff]
                %4414 = vst [vmem:[%s4366 + $0x138] sm:$0xff] %v4413
                %v4415 = vld [vmem:[%s4365 + $0xc0] sm:$0xff]
                %4416 = vst [vmem:[%s4366 + $0x140] sm:$0xff] %v4415
                %v4417 = vld [vmem:[%s4365 + $0xc8] sm:$0xff]
                %4418 = vst [vmem:[%s4366 + $0x148] sm:$0xff] %v4417
                %v4419 = vld [vmem:[%s4365 + $0xd0] sm:$0xff]
                %4420 = vst [vmem:[%s4366 + $0x150] sm:$0xff] %v4419
                %v4421 = vld [vmem:[%s4365 + $0xd8] sm:$0xff]
                %4422 = vst [vmem:[%s4366 + $0x158] sm:$0xff] %v4421
                %v4423 = vld [vmem:[%s4365 + $0xe0] sm:$0xff]
                %4424 = vst [vmem:[%s4366 + $0x160] sm:$0xff] %v4423
                %v4425 = vld [vmem:[%s4365 + $0xe8] sm:$0xff]
                %4426 = vst [vmem:[%s4366 + $0x168] sm:$0xff] %v4425
                %v4427 = vld [vmem:[%s4365 + $0xf0] sm:$0xff]
                %4428 = vst [vmem:[%s4366 + $0x170] sm:$0xff] %v4427
                %v4429 = vld [vmem:[%s4365 + $0xf8] sm:$0xff]
                %4430 = vst [vmem:[%s4366 + $0x178] sm:$0xff] %v4429
                %v4431 = vld [vmem:[%s4365 + $0x100] sm:$0xff]
                %4432 = vst [vmem:[%s4366 + $0x200] sm:$0xff] %v4431
                %v4433 = vld [vmem:[%s4365 + $0x108] sm:$0xff]
                %4434 = vst [vmem:[%s4366 + $0x208] sm:$0xff] %v4433
                %v4435 = vld [vmem:[%s4365 + $0x110] sm:$0xff]
                %4436 = vst [vmem:[%s4366 + $0x210] sm:$0xff] %v4435
                %v4437 = vld [vmem:[%s4365 + $0x118] sm:$0xff]
                %4438 = vst [vmem:[%s4366 + $0x218] sm:$0xff] %v4437
                %v4439 = vld [vmem:[%s4365 + $0x120] sm:$0xff]
                %4440 = vst [vmem:[%s4366 + $0x220] sm:$0xff] %v4439
                %v4441 = vld [vmem:[%s4365 + $0x128] sm:$0xff]
                %4442 = vst [vmem:[%s4366 + $0x228] sm:$0xff] %v4441
                %v4443 = vld [vmem:[%s4365 + $0x130] sm:$0xff]
                %4444 = vst [vmem:[%s4366 + $0x230] sm:$0xff] %v4443
                %v4445 = vld [vmem:[%s4365 + $0x138] sm:$0xff]
                %4446 = vst [vmem:[%s4366 + $0x238] sm:$0xff] %v4445
                %v4447 = vld [vmem:[%s4365 + $0x140] sm:$0xff]
                %4448 = vst [vmem:[%s4366 + $0x240] sm:$0xff] %v4447
                %v4449 = vld [vmem:[%s4365 + $0x148] sm:$0xff]
                %4450 = vst [vmem:[%s4366 + $0x248] sm:$0xff] %v4449
                %v4451 = vld [vmem:[%s4365 + $0x150] sm:$0xff]
                %4452 = vst [vmem:[%s4366 + $0x250] sm:$0xff] %v4451
                %v4453 = vld [vmem:[%s4365 + $0x158] sm:$0xff]
                %4454 = vst [vmem:[%s4366 + $0x258] sm:$0xff] %v4453
                %v4455 = vld [vmem:[%s4365 + $0x160] sm:$0xff]
                %4456 = vst [vmem:[%s4366 + $0x260] sm:$0xff] %v4455
                %v4457 = vld [vmem:[%s4365 + $0x168] sm:$0xff]
                %4458 = vst [vmem:[%s4366 + $0x268] sm:$0xff] %v4457
                %v4459 = vld [vmem:[%s4365 + $0x170] sm:$0xff]
                %4460 = vst [vmem:[%s4366 + $0x270] sm:$0xff] %v4459
                %v4461 = vld [vmem:[%s4365 + $0x178] sm:$0xff]
                %4462 = vst [vmem:[%s4366 + $0x278] sm:$0xff] %v4461
                %v4463 = vld [vmem:[%s4365 + $0x180] sm:$0xff]
                %4464 = vst [vmem:[%s4366 + $0x300] sm:$0xff] %v4463
                %v4465 = vld [vmem:[%s4365 + $0x188] sm:$0xff]
                %4466 = vst [vmem:[%s4366 + $0x308] sm:$0xff] %v4465
                %v4467 = vld [vmem:[%s4365 + $0x190] sm:$0xff]
                %4468 = vst [vmem:[%s4366 + $0x310] sm:$0xff] %v4467
                %v4469 = vld [vmem:[%s4365 + $0x198] sm:$0xff]
                %4470 = vst [vmem:[%s4366 + $0x318] sm:$0xff] %v4469
                %v4471 = vld [vmem:[%s4365 + $0x1a0] sm:$0xff]
                %4472 = vst [vmem:[%s4366 + $0x320] sm:$0xff] %v4471
                %v4473 = vld [vmem:[%s4365 + $0x1a8] sm:$0xff]
                %4474 = vst [vmem:[%s4366 + $0x328] sm:$0xff] %v4473
                %v4475 = vld [vmem:[%s4365 + $0x1b0] sm:$0xff]
                %4476 = vst [vmem:[%s4366 + $0x330] sm:$0xff] %v4475
                %v4477 = vld [vmem:[%s4365 + $0x1b8] sm:$0xff]
                %4478 = vst [vmem:[%s4366 + $0x338] sm:$0xff] %v4477
                %v4479 = vld [vmem:[%s4365 + $0x1c0] sm:$0xff]
                %4480 = vst [vmem:[%s4366 + $0x340] sm:$0xff] %v4479
                %v4481 = vld [vmem:[%s4365 + $0x1c8] sm:$0xff]
                %4482 = vst [vmem:[%s4366 + $0x348] sm:$0xff] %v4481
                %v4483 = vld [vmem:[%s4365 + $0x1d0] sm:$0xff]
                %4484 = vst [vmem:[%s4366 + $0x350] sm:$0xff] %v4483
                %v4485 = vld [vmem:[%s4365 + $0x1d8] sm:$0xff]
                %4486 = vst [vmem:[%s4366 + $0x358] sm:$0xff] %v4485
                %v4487 = vld [vmem:[%s4365 + $0x1e0] sm:$0xff]
                %4488 = vst [vmem:[%s4366 + $0x360] sm:$0xff] %v4487
                %v4489 = vld [vmem:[%s4365 + $0x1e8] sm:$0xff]
                %4490 = vst [vmem:[%s4366 + $0x368] sm:$0xff] %v4489
                %v4491 = vld [vmem:[%s4365 + $0x1f0] sm:$0xff]
                %4492 = vst [vmem:[%s4366 + $0x370] sm:$0xff] %v4491
                %v4493 = vld [vmem:[%s4365 + $0x1f8] sm:$0xff]
                %4494 = vst [vmem:[%s4366 + $0x378] sm:$0xff] %v4493
              $region224: #{tpu_custom_call.1} parent=218 // loop_footer
                %s4364 = sadd.s32 1, %s4360
              $region225: #{tpu_custom_call.1} parent=218 // loop_footer_branch
                %4359 = sbr.rel target = $region221
              $region226: #{tpu_custom_call.1} parent=218 // loop_exit
                _
            $region219: #{tpu_custom_call.1} parent=210 // pred_fallthru
              _
          $region211: #{tpu_custom_call.1} parent=206 // pred_fallthru
            _
          %4635 = vnop
        $region207: #{tpu_custom_call.1} parent=174 // pred_fallthru
          _
      $region175: #{tpu_custom_call.1} parent=5 // pred_fallthru
        _
      %p4636 = scmp.le.s32.totalorder 2, %s22
      // Predicated region
      $region242: #{tpu_custom_call.1} parent=5 // pred_check
        %p4637 = pneg %p4636
      $region243: #{tpu_custom_call.1} parent=5 // pred_check_branch
        %4639 = sbr.rel (%p4637) target = $region245
      $region244: #{tpu_custom_call.1} parent=5 // pred_region
        %s4640 = ssub.s32 %s22, 2
        // Predicated region
        $region246: #{tpu_custom_call.1} parent=244 // pred_check
          %p4641 = pneg %p189
        $region247: #{tpu_custom_call.1} parent=244 // pred_check_branch
          %4643 = sbr.rel (%p4641) target = $region249
        $region248: #{tpu_custom_call.1} parent=244 // pred_region
          %s4644 = sand.u32 %s174, 1
          %s4645 = sand.u32 %s174, 1
          %s4646 = smul.addr %s4645, 512
          %s4647 = scalar_lea.vmem [#allocation10], %s4646
        $region249: #{tpu_custom_call.1} parent=244 // pred_fallthru
          _
      $region245: #{tpu_custom_call.1} parent=5 // pred_fallthru
        _
    $region6: #{tpu_custom_call.1} parent=1 // loop_footer
      %s26 = sadd.s32 1, %s22
    $region7: #{tpu_custom_call.1} parent=1 // loop_footer_branch
      %21 = sbr.rel target = $region3
    $region8: #{tpu_custom_call.1} parent=1 // loop_exit
      _

</llo_original>
